<compile_context>
chip_gen: v5e
topology: v5e:2x2
jax: 0.10.0
libtpu: 0.0.40
codegen_flags: <defaults>
</compile_context>

<pallas_src>
import math
import jax
import jax.numpy as jnp
from jax.experimental import pallas as pl
from jax.experimental.pallas import tpu as pltpu


def _pair(v):
    return v if isinstance(v, tuple) else (v, v)


def compute_output_dim(size, padding, kernel, dilation, stride):
    return (size + 2 * padding - dilation * (kernel - 1) - 1) // stride + 1


def _round_up(x, m):
    return ((x + m - 1) // m) * m


def _pad_axis(a, axis, target):
    pad = target - a.shape[axis]
    if pad == 0:
        return a
    widths = [(0, 0)] * a.ndim
    widths[axis] = (0, pad)
    return jnp.pad(a, widths)


def unfold(x, kernel_size, dilation, padding, stride):
    """jnp equivalent of F.unfold (zero padding). x: (N, C, H, W) -> (N, C*kh*kw, L)."""
    kh, kw = kernel_size
    dh, dw = dilation
    ph, pw = padding
    sh, sw = stride
    N, C, H, W = x.shape
    out_h = compute_output_dim(H, ph, kh, dh, sh)
    out_w = compute_output_dim(W, pw, kw, dw, sw)
    xp = jnp.pad(x, ((0, 0), (0, 0), (ph, ph), (pw, pw)))
    cols = []
    for i in range(kh):
        for j in range(kw):
            cols.append(
                xp[:, :,
                   i * dh: i * dh + (out_h - 1) * sh + 1: sh,
                   j * dw: j * dw + (out_w - 1) * sw + 1: sw]
            )
    # order (c, i, j) matches F.unfold's channel-major flattening
    patches = jnp.stack(cols, axis=2)                        # (N, C, kh*kw, oh, ow)
    patches = patches.reshape(N, C * kh * kw, out_h * out_w)  # (N, K, L)
    return patches, out_h, out_w


def _make_kernel(k_real, has_bias):
    """Kernel over one L-tile: out[n,c,l] = sum_k p[n,k,l]*w[c,k,l] (+ b[c,l])."""

    def kernel(*refs):
        if has_bias:
            p_ref, w_ref, b_ref, o_ref = refs
        else:
            p_ref, w_ref, o_ref = refs
        n, _, tl = p_ref.shape           # (N, K_pad, TL)
        c_out = w_ref.shape[0]           # (C_out, K_pad, TL)

        if has_bias:
            acc = jnp.broadcast_to(
                b_ref[...].astype(jnp.float32)[None, :, :], (n, c_out, tl))
        else:
            acc = jnp.zeros((n, c_out, tl), jnp.float32)

        # Accumulate over the real K only (padded K rows never touched).
        # Per-k fused multiply-add keeps live state at one (N, C_out, TL) slab.
        for k in range(k_real):
            p_k = p_ref[:, k, :].astype(jnp.float32)   # (N, TL)
            w_k = w_ref[:, k, :].astype(jnp.float32)   # (C_out, TL)
            acc = acc + p_k[:, None, :] * w_k[None, :, :]

        o_ref[...] = acc.astype(o_ref.dtype)

    return kernel


def locally_connected_2d(x, weight, bias, kernel_size, stride=(1, 1),
                         padding=(0, 0), dilation=(1, 1), *, stream_dtype=None):
    """x: (N, C_in, H, W); weight: (C_out, C_in, kh, kw, out_h, out_w);
    bias: (C_out, out_h, out_w) or None. Returns (N, C_out, out_h, out_w).

    stream_dtype: optional lower-precision dtype (e.g. jnp.bfloat16) used only
    for the HBM weight/patch stream; accumulation is always f32 in-kernel.
    """
    N, C_in, H, W = x.shape
    C_out = weight.shape[0]
    kh, kw = kernel_size

    patches, out_h, out_w = unfold(x, kernel_size, dilation, padding, stride)
    K = C_in * kh * kw
    L = out_h * out_w

    w_flat = weight.reshape(C_out, K, L)
    has_bias = bias is not None
    b_flat = bias.reshape(C_out, L) if has_bias else None

    if stream_dtype is not None:
        patches = patches.astype(stream_dtype)
        w_flat = w_flat.astype(stream_dtype)

    # Layout alignment: sublane axis (K) to a multiple of 8, lane tile (TL) to a
    # multiple of 128 (<= 512 so double-buffered tiles fit v7x's 64 MiB VMEM).
    K_pad = _round_up(K, 8)
    TL = min(512, _round_up(L, 128))
    L_pad = _round_up(L, TL)
    num_l_tiles = L_pad // TL

    patches_p = _pad_axis(_pad_axis(patches, 1, K_pad), 2, L_pad)
    w_p = _pad_axis(_pad_axis(w_flat, 1, K_pad), 2, L_pad)

    in_specs = [
        pl.BlockSpec((N, K_pad, TL), lambda l: (0, 0, l)),        # patches
        pl.BlockSpec((C_out, K_pad, TL), lambda l: (0, 0, l)),    # weights (stream over L)
    ]
    args = [patches_p, w_p]
    if has_bias:
        b_p = _pad_axis(b_flat, 1, L_pad)
        in_specs.append(pl.BlockSpec((C_out, TL), lambda l: (0, l)))
        args.append(b_p)
    # (when bias is None we simply don't pass it -- no zero-DMA stream)

    # VMEM budget: double-buffered input/output tiles + headroom; stays within
    # every generation's physical VMEM (>= 64 MiB).
    per_step_bytes = (N * K_pad + C_out * K_pad + N * C_out + C_out) * TL * 4
    vmem_limit = int(min(max(3 * per_step_bytes + (4 << 20), 32 << 20), 48 << 20))

    out = pl.pallas_call(
        _make_kernel(K, has_bias),
        out_shape=jax.ShapeDtypeStruct((N, C_out, L_pad), x.dtype),
        grid_spec=pltpu.PrefetchScalarGridSpec(
            num_scalar_prefetch=0,
            grid=(num_l_tiles,),
            in_specs=in_specs,
            out_specs=pl.BlockSpec((N, C_out, TL), lambda l: (0, 0, l)),
        ),
        compiler_params=pltpu.CompilerParams(
            dimension_semantics=("parallel",),
            vmem_limit_bytes=vmem_limit),
    )(*args)

    return out[:, :, :L].reshape(N, C_out, out_h, out_w)


def _reference(x, weight, bias, kernel_size, stride, padding, dilation):
    """Pure-JAX reference mirroring the PyTorch forward exactly."""
    N = x.shape[0]
    C_out = weight.shape[0]
    patches, out_h, out_w = unfold(x, kernel_size, dilation, padding, stride)
    K = patches.shape[1]
    L = patches.shape[2]
    w_flat = weight.reshape(1, C_out, K, L)
    out = jnp.sum(patches[:, None, :, :] * w_flat, axis=2)      # (N, C_out, L)
    out = out.reshape(N, C_out, out_h, out_w)
    if bias is not None:
        out = out + bias[None, :]
    return out


if __name__ == "__main__":
    # Module config (small, consistent with the PyTorch module's __init__)
    in_channels, out_channels = 4, 8
    in_h = in_w = 16
    kernel_size = _pair(3)
    stride = _pair(1)
    padding = _pair(1)
    dilation = _pair(1)
    batch = 2

    out_h = compute_output_dim(in_h, padding[0], kernel_size[0], dilation[0], stride[0])
    out_w = compute_output_dim(in_w, padding[1], kernel_size[1], dilation[1], stride[1])

    key = jax.random.PRNGKey(0)
    kx, kw_, kb = jax.random.split(key, 3)

    # Deterministic parameter init, same shapes/bounds as reset_parameters()
    fan_in = in_channels * kernel_size[0] * kernel_size[1]
    w_bound = math.sqrt(6.0 / ((1 + 5.0) * fan_in))   # kaiming_uniform_ with a=sqrt(5)
    weight = jax.random.uniform(
        kw_,
        (out_channels, in_channels, kernel_size[0], kernel_size[1], out_h, out_w),
        minval=-w_bound, maxval=w_bound, dtype=jnp.float32)
    b_bound = 1.0 / math.sqrt(fan_in)
    bias = jax.random.uniform(
        kb, (out_channels, out_h, out_w),
        minval=-b_bound, maxval=b_bound, dtype=jnp.float32)

    x = jax.random.normal(kx, (batch, in_channels, in_h, in_w), dtype=jnp.float32)

    y = locally_connected_2d(x, weight, bias, kernel_size, stride, padding, dilation)
    y = jax.block_until_ready(y)

    y_ref = _reference(x, weight, bias, kernel_size, stride, padding, dilation)
    assert y.shape == (batch, out_channels, out_h, out_w)
    assert jnp.allclose(y, y_ref, atol=1e-5, rtol=1e-5)

    # Also exercise the no-bias path (skips the bias DMA entirely).
    y_nb = jax.block_until_ready(
        locally_connected_2d(x, weight, None, kernel_size, stride, padding, dilation))
    y_nb_ref = _reference(x, weight, None, kernel_size, stride, padding, dilation)
    assert jnp.allclose(y_nb, y_nb_ref, atol=1e-5, rtol=1e-5)

    print("KERNEL_OK")
</pallas_src>

<mosaic_0001>
module attributes {stable_mosaic.version = 11 : i64} {
  func.func @kernel(%arg0: i32, %arg1: memref<2x40x256xf32, #tpu.memory_space<vmem>>, %arg2: memref<8x40x256xf32, #tpu.memory_space<vmem>>, %arg3: memref<8x256xf32, #tpu.memory_space<vmem>>, %arg4: memref<2x8x256xf32, #tpu.memory_space<vmem>>) attributes {dimension_semantics = [#tpu.dimension_semantics<parallel>], iteration_bounds = array<i64: 1>, scalar_prefetch = 0 : i64, scratch_operands = 0 : i64, tpu.core_type = #tpu.core_type<tc>, window_params = [{transform_indices = @transform_0, window_bounds = array<i64: 2, 40, 256>}, {transform_indices = @transform_1, window_bounds = array<i64: 8, 40, 256>}, {transform_indices = @transform_2, window_bounds = array<i64: 8, 256>}, {transform_indices = @transform_3, window_bounds = array<i64: 2, 8, 256>}]} {
    %c0 = arith.constant 0 : index
    %c0_0 = arith.constant 0 : index
    %0 = vector.load %arg3[%c0, %c0_0] : memref<8x256xf32, #tpu.memory_space<vmem>>, vector<8x256xf32>
    %1 = vector.shape_cast %0 : vector<8x256xf32> to vector<1x8x256xf32>
    %2 = vector.shape_cast %1 : vector<1x8x256xf32> to vector<1x8x256xf32>
    %3 = vector.broadcast %2 : vector<1x8x256xf32> to vector<2x8x256xf32>
    %c0_1 = arith.constant 0 : index
    %c0_2 = arith.constant 0 : index
    %c0_3 = arith.constant 0 : index
    %4 = vector.load %arg1[%c0_1, %c0_2, %c0_3] : memref<2x40x256xf32, #tpu.memory_space<vmem>>, vector<2x1x256xf32>
    %5 = vector.shape_cast %4 : vector<2x1x256xf32> to vector<2x256xf32>
    %c0_4 = arith.constant 0 : index
    %c0_5 = arith.constant 0 : index
    %c0_6 = arith.constant 0 : index
    %6 = vector.load %arg2[%c0_4, %c0_5, %c0_6] : memref<8x40x256xf32, #tpu.memory_space<vmem>>, vector<8x1x256xf32>
    %7 = vector.shape_cast %6 : vector<8x1x256xf32> to vector<8x256xf32>
    %8 = vector.shape_cast %5 : vector<2x256xf32> to vector<2x1x256xf32>
    %9 = vector.shape_cast %7 : vector<8x256xf32> to vector<1x8x256xf32>
    %10 = vector.broadcast %8 : vector<2x1x256xf32> to vector<2x8x256xf32>
    %11 = vector.broadcast %9 : vector<1x8x256xf32> to vector<2x8x256xf32>
    %12 = arith.mulf %10, %11 : vector<2x8x256xf32>
    %13 = arith.addf %3, %12 : vector<2x8x256xf32>
    %c0_7 = arith.constant 0 : index
    %c1 = arith.constant 1 : index
    %c0_8 = arith.constant 0 : index
    %14 = vector.load %arg1[%c0_7, %c1, %c0_8] : memref<2x40x256xf32, #tpu.memory_space<vmem>>, vector<2x1x256xf32>
    %15 = vector.shape_cast %14 : vector<2x1x256xf32> to vector<2x256xf32>
    %c0_9 = arith.constant 0 : index
    %c1_10 = arith.constant 1 : index
    %c0_11 = arith.constant 0 : index
    %16 = vector.load %arg2[%c0_9, %c1_10, %c0_11] : memref<8x40x256xf32, #tpu.memory_space<vmem>>, vector<8x1x256xf32>
    %17 = vector.shape_cast %16 : vector<8x1x256xf32> to vector<8x256xf32>
    %18 = vector.shape_cast %15 : vector<2x256xf32> to vector<2x1x256xf32>
    %19 = vector.shape_cast %17 : vector<8x256xf32> to vector<1x8x256xf32>
    %20 = vector.broadcast %18 : vector<2x1x256xf32> to vector<2x8x256xf32>
    %21 = vector.broadcast %19 : vector<1x8x256xf32> to vector<2x8x256xf32>
    %22 = arith.mulf %20, %21 : vector<2x8x256xf32>
    %23 = arith.addf %13, %22 : vector<2x8x256xf32>
    %c0_12 = arith.constant 0 : index
    %c2 = arith.constant 2 : index
    %c0_13 = arith.constant 0 : index
    %24 = vector.load %arg1[%c0_12, %c2, %c0_13] : memref<2x40x256xf32, #tpu.memory_space<vmem>>, vector<2x1x256xf32>
    %25 = vector.shape_cast %24 : vector<2x1x256xf32> to vector<2x256xf32>
    %c0_14 = arith.constant 0 : index
    %c2_15 = arith.constant 2 : index
    %c0_16 = arith.constant 0 : index
    %26 = vector.load %arg2[%c0_14, %c2_15, %c0_16] : memref<8x40x256xf32, #tpu.memory_space<vmem>>, vector<8x1x256xf32>
    %27 = vector.shape_cast %26 : vector<8x1x256xf32> to vector<8x256xf32>
    %28 = vector.shape_cast %25 : vector<2x256xf32> to vector<2x1x256xf32>
    %29 = vector.shape_cast %27 : vector<8x256xf32> to vector<1x8x256xf32>
    %30 = vector.broadcast %28 : vector<2x1x256xf32> to vector<2x8x256xf32>
    %31 = vector.broadcast %29 : vector<1x8x256xf32> to vector<2x8x256xf32>
    %32 = arith.mulf %30, %31 : vector<2x8x256xf32>
    %33 = arith.addf %23, %32 : vector<2x8x256xf32>
    %c0_17 = arith.constant 0 : index
    %c3 = arith.constant 3 : index
    %c0_18 = arith.constant 0 : index
    %34 = vector.load %arg1[%c0_17, %c3, %c0_18] : memref<2x40x256xf32, #tpu.memory_space<vmem>>, vector<2x1x256xf32>
    %35 = vector.shape_cast %34 : vector<2x1x256xf32> to vector<2x256xf32>
    %c0_19 = arith.constant 0 : index
    %c3_20 = arith.constant 3 : index
    %c0_21 = arith.constant 0 : index
    %36 = vector.load %arg2[%c0_19, %c3_20, %c0_21] : memref<8x40x256xf32, #tpu.memory_space<vmem>>, vector<8x1x256xf32>
    %37 = vector.shape_cast %36 : vector<8x1x256xf32> to vector<8x256xf32>
    %38 = vector.shape_cast %35 : vector<2x256xf32> to vector<2x1x256xf32>
    %39 = vector.shape_cast %37 : vector<8x256xf32> to vector<1x8x256xf32>
    %40 = vector.broadcast %38 : vector<2x1x256xf32> to vector<2x8x256xf32>
    %41 = vector.broadcast %39 : vector<1x8x256xf32> to vector<2x8x256xf32>
    %42 = arith.mulf %40, %41 : vector<2x8x256xf32>
    %43 = arith.addf %33, %42 : vector<2x8x256xf32>
    %c0_22 = arith.constant 0 : index
    %c4 = arith.constant 4 : index
    %c0_23 = arith.constant 0 : index
    %44 = vector.load %arg1[%c0_22, %c4, %c0_23] : memref<2x40x256xf32, #tpu.memory_space<vmem>>, vector<2x1x256xf32>
    %45 = vector.shape_cast %44 : vector<2x1x256xf32> to vector<2x256xf32>
    %c0_24 = arith.constant 0 : index
    %c4_25 = arith.constant 4 : index
    %c0_26 = arith.constant 0 : index
    %46 = vector.load %arg2[%c0_24, %c4_25, %c0_26] : memref<8x40x256xf32, #tpu.memory_space<vmem>>, vector<8x1x256xf32>
    %47 = vector.shape_cast %46 : vector<8x1x256xf32> to vector<8x256xf32>
    %48 = vector.shape_cast %45 : vector<2x256xf32> to vector<2x1x256xf32>
    %49 = vector.shape_cast %47 : vector<8x256xf32> to vector<1x8x256xf32>
    %50 = vector.broadcast %48 : vector<2x1x256xf32> to vector<2x8x256xf32>
    %51 = vector.broadcast %49 : vector<1x8x256xf32> to vector<2x8x256xf32>
    %52 = arith.mulf %50, %51 : vector<2x8x256xf32>
    %53 = arith.addf %43, %52 : vector<2x8x256xf32>
    %c0_27 = arith.constant 0 : index
    %c5 = arith.constant 5 : index
    %c0_28 = arith.constant 0 : index
    %54 = vector.load %arg1[%c0_27, %c5, %c0_28] : memref<2x40x256xf32, #tpu.memory_space<vmem>>, vector<2x1x256xf32>
    %55 = vector.shape_cast %54 : vector<2x1x256xf32> to vector<2x256xf32>
    %c0_29 = arith.constant 0 : index
    %c5_30 = arith.constant 5 : index
    %c0_31 = arith.constant 0 : index
    %56 = vector.load %arg2[%c0_29, %c5_30, %c0_31] : memref<8x40x256xf32, #tpu.memory_space<vmem>>, vector<8x1x256xf32>
    %57 = vector.shape_cast %56 : vector<8x1x256xf32> to vector<8x256xf32>
    %58 = vector.shape_cast %55 : vector<2x256xf32> to vector<2x1x256xf32>
    %59 = vector.shape_cast %57 : vector<8x256xf32> to vector<1x8x256xf32>
    %60 = vector.broadcast %58 : vector<2x1x256xf32> to vector<2x8x256xf32>
    %61 = vector.broadcast %59 : vector<1x8x256xf32> to vector<2x8x256xf32>
    %62 = arith.mulf %60, %61 : vector<2x8x256xf32>
    %63 = arith.addf %53, %62 : vector<2x8x256xf32>
    %c0_32 = arith.constant 0 : index
    %c6 = arith.constant 6 : index
    %c0_33 = arith.constant 0 : index
    %64 = vector.load %arg1[%c0_32, %c6, %c0_33] : memref<2x40x256xf32, #tpu.memory_space<vmem>>, vector<2x1x256xf32>
    %65 = vector.shape_cast %64 : vector<2x1x256xf32> to vector<2x256xf32>
    %c0_34 = arith.constant 0 : index
    %c6_35 = arith.constant 6 : index
    %c0_36 = arith.constant 0 : index
    %66 = vector.load %arg2[%c0_34, %c6_35, %c0_36] : memref<8x40x256xf32, #tpu.memory_space<vmem>>, vector<8x1x256xf32>
    %67 = vector.shape_cast %66 : vector<8x1x256xf32> to vector<8x256xf32>
    %68 = vector.shape_cast %65 : vector<2x256xf32> to vector<2x1x256xf32>
    %69 = vector.shape_cast %67 : vector<8x256xf32> to vector<1x8x256xf32>
    %70 = vector.broadcast %68 : vector<2x1x256xf32> to vector<2x8x256xf32>
    %71 = vector.broadcast %69 : vector<1x8x256xf32> to vector<2x8x256xf32>
    %72 = arith.mulf %70, %71 : vector<2x8x256xf32>
    %73 = arith.addf %63, %72 : vector<2x8x256xf32>
    %c0_37 = arith.constant 0 : index
    %c7 = arith.constant 7 : index
    %c0_38 = arith.constant 0 : index
    %74 = vector.load %arg1[%c0_37, %c7, %c0_38] : memref<2x40x256xf32, #tpu.memory_space<vmem>>, vector<2x1x256xf32>
    %75 = vector.shape_cast %74 : vector<2x1x256xf32> to vector<2x256xf32>
    %c0_39 = arith.constant 0 : index
    %c7_40 = arith.constant 7 : index
    %c0_41 = arith.constant 0 : index
    %76 = vector.load %arg2[%c0_39, %c7_40, %c0_41] : memref<8x40x256xf32, #tpu.memory_space<vmem>>, vector<8x1x256xf32>
    %77 = vector.shape_cast %76 : vector<8x1x256xf32> to vector<8x256xf32>
    %78 = vector.shape_cast %75 : vector<2x256xf32> to vector<2x1x256xf32>
    %79 = vector.shape_cast %77 : vector<8x256xf32> to vector<1x8x256xf32>
    %80 = vector.broadcast %78 : vector<2x1x256xf32> to vector<2x8x256xf32>
    %81 = vector.broadcast %79 : vector<1x8x256xf32> to vector<2x8x256xf32>
    %82 = arith.mulf %80, %81 : vector<2x8x256xf32>
    %83 = arith.addf %73, %82 : vector<2x8x256xf32>
    %c0_42 = arith.constant 0 : index
    %c8 = arith.constant 8 : index
    %c0_43 = arith.constant 0 : index
    %84 = vector.load %arg1[%c0_42, %c8, %c0_43] : memref<2x40x256xf32, #tpu.memory_space<vmem>>, vector<2x1x256xf32>
    %85 = vector.shape_cast %84 : vector<2x1x256xf32> to vector<2x256xf32>
    %c0_44 = arith.constant 0 : index
    %c8_45 = arith.constant 8 : index
    %c0_46 = arith.constant 0 : index
    %86 = vector.load %arg2[%c0_44, %c8_45, %c0_46] : memref<8x40x256xf32, #tpu.memory_space<vmem>>, vector<8x1x256xf32>
    %87 = vector.shape_cast %86 : vector<8x1x256xf32> to vector<8x256xf32>
    %88 = vector.shape_cast %85 : vector<2x256xf32> to vector<2x1x256xf32>
    %89 = vector.shape_cast %87 : vector<8x256xf32> to vector<1x8x256xf32>
    %90 = vector.broadcast %88 : vector<2x1x256xf32> to vector<2x8x256xf32>
    %91 = vector.broadcast %89 : vector<1x8x256xf32> to vector<2x8x256xf32>
    %92 = arith.mulf %90, %91 : vector<2x8x256xf32>
    %93 = arith.addf %83, %92 : vector<2x8x256xf32>
    %c0_47 = arith.constant 0 : index
    %c9 = arith.constant 9 : index
    %c0_48 = arith.constant 0 : index
    %94 = vector.load %arg1[%c0_47, %c9, %c0_48] : memref<2x40x256xf32, #tpu.memory_space<vmem>>, vector<2x1x256xf32>
    %95 = vector.shape_cast %94 : vector<2x1x256xf32> to vector<2x256xf32>
    %c0_49 = arith.constant 0 : index
    %c9_50 = arith.constant 9 : index
    %c0_51 = arith.constant 0 : index
    %96 = vector.load %arg2[%c0_49, %c9_50, %c0_51] : memref<8x40x256xf32, #tpu.memory_space<vmem>>, vector<8x1x256xf32>
    %97 = vector.shape_cast %96 : vector<8x1x256xf32> to vector<8x256xf32>
    %98 = vector.shape_cast %95 : vector<2x256xf32> to vector<2x1x256xf32>
    %99 = vector.shape_cast %97 : vector<8x256xf32> to vector<1x8x256xf32>
    %100 = vector.broadcast %98 : vector<2x1x256xf32> to vector<2x8x256xf32>
    %101 = vector.broadcast %99 : vector<1x8x256xf32> to vector<2x8x256xf32>
    %102 = arith.mulf %100, %101 : vector<2x8x256xf32>
    %103 = arith.addf %93, %102 : vector<2x8x256xf32>
    %c0_52 = arith.constant 0 : index
    %c10 = arith.constant 10 : index
    %c0_53 = arith.constant 0 : index
    %104 = vector.load %arg1[%c0_52, %c10, %c0_53] : memref<2x40x256xf32, #tpu.memory_space<vmem>>, vector<2x1x256xf32>
    %105 = vector.shape_cast %104 : vector<2x1x256xf32> to vector<2x256xf32>
    %c0_54 = arith.constant 0 : index
    %c10_55 = arith.constant 10 : index
    %c0_56 = arith.constant 0 : index
    %106 = vector.load %arg2[%c0_54, %c10_55, %c0_56] : memref<8x40x256xf32, #tpu.memory_space<vmem>>, vector<8x1x256xf32>
    %107 = vector.shape_cast %106 : vector<8x1x256xf32> to vector<8x256xf32>
    %108 = vector.shape_cast %105 : vector<2x256xf32> to vector<2x1x256xf32>
    %109 = vector.shape_cast %107 : vector<8x256xf32> to vector<1x8x256xf32>
    %110 = vector.broadcast %108 : vector<2x1x256xf32> to vector<2x8x256xf32>
    %111 = vector.broadcast %109 : vector<1x8x256xf32> to vector<2x8x256xf32>
    %112 = arith.mulf %110, %111 : vector<2x8x256xf32>
    %113 = arith.addf %103, %112 : vector<2x8x256xf32>
    %c0_57 = arith.constant 0 : index
    %c11 = arith.constant 11 : index
    %c0_58 = arith.constant 0 : index
    %114 = vector.load %arg1[%c0_57, %c11, %c0_58] : memref<2x40x256xf32, #tpu.memory_space<vmem>>, vector<2x1x256xf32>
    %115 = vector.shape_cast %114 : vector<2x1x256xf32> to vector<2x256xf32>
    %c0_59 = arith.constant 0 : index
    %c11_60 = arith.constant 11 : index
    %c0_61 = arith.constant 0 : index
    %116 = vector.load %arg2[%c0_59, %c11_60, %c0_61] : memref<8x40x256xf32, #tpu.memory_space<vmem>>, vector<8x1x256xf32>
    %117 = vector.shape_cast %116 : vector<8x1x256xf32> to vector<8x256xf32>
    %118 = vector.shape_cast %115 : vector<2x256xf32> to vector<2x1x256xf32>
    %119 = vector.shape_cast %117 : vector<8x256xf32> to vector<1x8x256xf32>
    %120 = vector.broadcast %118 : vector<2x1x256xf32> to vector<2x8x256xf32>
    %121 = vector.broadcast %119 : vector<1x8x256xf32> to vector<2x8x256xf32>
    %122 = arith.mulf %120, %121 : vector<2x8x256xf32>
    %123 = arith.addf %113, %122 : vector<2x8x256xf32>
    %c0_62 = arith.constant 0 : index
    %c12 = arith.constant 12 : index
    %c0_63 = arith.constant 0 : index
    %124 = vector.load %arg1[%c0_62, %c12, %c0_63] : memref<2x40x256xf32, #tpu.memory_space<vmem>>, vector<2x1x256xf32>
    %125 = vector.shape_cast %124 : vector<2x1x256xf32> to vector<2x256xf32>
    %c0_64 = arith.constant 0 : index
    %c12_65 = arith.constant 12 : index
    %c0_66 = arith.constant 0 : index
    %126 = vector.load %arg2[%c0_64, %c12_65, %c0_66] : memref<8x40x256xf32, #tpu.memory_space<vmem>>, vector<8x1x256xf32>
    %127 = vector.shape_cast %126 : vector<8x1x256xf32> to vector<8x256xf32>
    %128 = vector.shape_cast %125 : vector<2x256xf32> to vector<2x1x256xf32>
    %129 = vector.shape_cast %127 : vector<8x256xf32> to vector<1x8x256xf32>
    %130 = vector.broadcast %128 : vector<2x1x256xf32> to vector<2x8x256xf32>
    %131 = vector.broadcast %129 : vector<1x8x256xf32> to vector<2x8x256xf32>
    %132 = arith.mulf %130, %131 : vector<2x8x256xf32>
    %133 = arith.addf %123, %132 : vector<2x8x256xf32>
    %c0_67 = arith.constant 0 : index
    %c13 = arith.constant 13 : index
    %c0_68 = arith.constant 0 : index
    %134 = vector.load %arg1[%c0_67, %c13, %c0_68] : memref<2x40x256xf32, #tpu.memory_space<vmem>>, vector<2x1x256xf32>
    %135 = vector.shape_cast %134 : vector<2x1x256xf32> to vector<2x256xf32>
    %c0_69 = arith.constant 0 : index
    %c13_70 = arith.constant 13 : index
    %c0_71 = arith.constant 0 : index
    %136 = vector.load %arg2[%c0_69, %c13_70, %c0_71] : memref<8x40x256xf32, #tpu.memory_space<vmem>>, vector<8x1x256xf32>
    %137 = vector.shape_cast %136 : vector<8x1x256xf32> to vector<8x256xf32>
    %138 = vector.shape_cast %135 : vector<2x256xf32> to vector<2x1x256xf32>
    %139 = vector.shape_cast %137 : vector<8x256xf32> to vector<1x8x256xf32>
    %140 = vector.broadcast %138 : vector<2x1x256xf32> to vector<2x8x256xf32>
    %141 = vector.broadcast %139 : vector<1x8x256xf32> to vector<2x8x256xf32>
    %142 = arith.mulf %140, %141 : vector<2x8x256xf32>
    %143 = arith.addf %133, %142 : vector<2x8x256xf32>
    %c0_72 = arith.constant 0 : index
    %c14 = arith.constant 14 : index
    %c0_73 = arith.constant 0 : index
    %144 = vector.load %arg1[%c0_72, %c14, %c0_73] : memref<2x40x256xf32, #tpu.memory_space<vmem>>, vector<2x1x256xf32>
    %145 = vector.shape_cast %144 : vector<2x1x256xf32> to vector<2x256xf32>
    %c0_74 = arith.constant 0 : index
    %c14_75 = arith.constant 14 : index
    %c0_76 = arith.constant 0 : index
    %146 = vector.load %arg2[%c0_74, %c14_75, %c0_76] : memref<8x40x256xf32, #tpu.memory_space<vmem>>, vector<8x1x256xf32>
    %147 = vector.shape_cast %146 : vector<8x1x256xf32> to vector<8x256xf32>
    %148 = vector.shape_cast %145 : vector<2x256xf32> to vector<2x1x256xf32>
    %149 = vector.shape_cast %147 : vector<8x256xf32> to vector<1x8x256xf32>
    %150 = vector.broadcast %148 : vector<2x1x256xf32> to vector<2x8x256xf32>
    %151 = vector.broadcast %149 : vector<1x8x256xf32> to vector<2x8x256xf32>
    %152 = arith.mulf %150, %151 : vector<2x8x256xf32>
    %153 = arith.addf %143, %152 : vector<2x8x256xf32>
    %c0_77 = arith.constant 0 : index
    %c15 = arith.constant 15 : index
    %c0_78 = arith.constant 0 : index
    %154 = vector.load %arg1[%c0_77, %c15, %c0_78] : memref<2x40x256xf32, #tpu.memory_space<vmem>>, vector<2x1x256xf32>
    %155 = vector.shape_cast %154 : vector<2x1x256xf32> to vector<2x256xf32>
    %c0_79 = arith.constant 0 : index
    %c15_80 = arith.constant 15 : index
    %c0_81 = arith.constant 0 : index
    %156 = vector.load %arg2[%c0_79, %c15_80, %c0_81] : memref<8x40x256xf32, #tpu.memory_space<vmem>>, vector<8x1x256xf32>
    %157 = vector.shape_cast %156 : vector<8x1x256xf32> to vector<8x256xf32>
    %158 = vector.shape_cast %155 : vector<2x256xf32> to vector<2x1x256xf32>
    %159 = vector.shape_cast %157 : vector<8x256xf32> to vector<1x8x256xf32>
    %160 = vector.broadcast %158 : vector<2x1x256xf32> to vector<2x8x256xf32>
    %161 = vector.broadcast %159 : vector<1x8x256xf32> to vector<2x8x256xf32>
    %162 = arith.mulf %160, %161 : vector<2x8x256xf32>
    %163 = arith.addf %153, %162 : vector<2x8x256xf32>
    %c0_82 = arith.constant 0 : index
    %c16 = arith.constant 16 : index
    %c0_83 = arith.constant 0 : index
    %164 = vector.load %arg1[%c0_82, %c16, %c0_83] : memref<2x40x256xf32, #tpu.memory_space<vmem>>, vector<2x1x256xf32>
    %165 = vector.shape_cast %164 : vector<2x1x256xf32> to vector<2x256xf32>
    %c0_84 = arith.constant 0 : index
    %c16_85 = arith.constant 16 : index
    %c0_86 = arith.constant 0 : index
    %166 = vector.load %arg2[%c0_84, %c16_85, %c0_86] : memref<8x40x256xf32, #tpu.memory_space<vmem>>, vector<8x1x256xf32>
    %167 = vector.shape_cast %166 : vector<8x1x256xf32> to vector<8x256xf32>
    %168 = vector.shape_cast %165 : vector<2x256xf32> to vector<2x1x256xf32>
    %169 = vector.shape_cast %167 : vector<8x256xf32> to vector<1x8x256xf32>
    %170 = vector.broadcast %168 : vector<2x1x256xf32> to vector<2x8x256xf32>
    %171 = vector.broadcast %169 : vector<1x8x256xf32> to vector<2x8x256xf32>
    %172 = arith.mulf %170, %171 : vector<2x8x256xf32>
    %173 = arith.addf %163, %172 : vector<2x8x256xf32>
    %c0_87 = arith.constant 0 : index
    %c17 = arith.constant 17 : index
    %c0_88 = arith.constant 0 : index
    %174 = vector.load %arg1[%c0_87, %c17, %c0_88] : memref<2x40x256xf32, #tpu.memory_space<vmem>>, vector<2x1x256xf32>
    %175 = vector.shape_cast %174 : vector<2x1x256xf32> to vector<2x256xf32>
    %c0_89 = arith.constant 0 : index
    %c17_90 = arith.constant 17 : index
    %c0_91 = arith.constant 0 : index
    %176 = vector.load %arg2[%c0_89, %c17_90, %c0_91] : memref<8x40x256xf32, #tpu.memory_space<vmem>>, vector<8x1x256xf32>
    %177 = vector.shape_cast %176 : vector<8x1x256xf32> to vector<8x256xf32>
    %178 = vector.shape_cast %175 : vector<2x256xf32> to vector<2x1x256xf32>
    %179 = vector.shape_cast %177 : vector<8x256xf32> to vector<1x8x256xf32>
    %180 = vector.broadcast %178 : vector<2x1x256xf32> to vector<2x8x256xf32>
    %181 = vector.broadcast %179 : vector<1x8x256xf32> to vector<2x8x256xf32>
    %182 = arith.mulf %180, %181 : vector<2x8x256xf32>
    %183 = arith.addf %173, %182 : vector<2x8x256xf32>
    %c0_92 = arith.constant 0 : index
    %c18 = arith.constant 18 : index
    %c0_93 = arith.constant 0 : index
    %184 = vector.load %arg1[%c0_92, %c18, %c0_93] : memref<2x40x256xf32, #tpu.memory_space<vmem>>, vector<2x1x256xf32>
    %185 = vector.shape_cast %184 : vector<2x1x256xf32> to vector<2x256xf32>
    %c0_94 = arith.constant 0 : index
    %c18_95 = arith.constant 18 : index
    %c0_96 = arith.constant 0 : index
    %186 = vector.load %arg2[%c0_94, %c18_95, %c0_96] : memref<8x40x256xf32, #tpu.memory_space<vmem>>, vector<8x1x256xf32>
    %187 = vector.shape_cast %186 : vector<8x1x256xf32> to vector<8x256xf32>
    %188 = vector.shape_cast %185 : vector<2x256xf32> to vector<2x1x256xf32>
    %189 = vector.shape_cast %187 : vector<8x256xf32> to vector<1x8x256xf32>
    %190 = vector.broadcast %188 : vector<2x1x256xf32> to vector<2x8x256xf32>
    %191 = vector.broadcast %189 : vector<1x8x256xf32> to vector<2x8x256xf32>
    %192 = arith.mulf %190, %191 : vector<2x8x256xf32>
    %193 = arith.addf %183, %192 : vector<2x8x256xf32>
    %c0_97 = arith.constant 0 : index
    %c19 = arith.constant 19 : index
    %c0_98 = arith.constant 0 : index
    %194 = vector.load %arg1[%c0_97, %c19, %c0_98] : memref<2x40x256xf32, #tpu.memory_space<vmem>>, vector<2x1x256xf32>
    %195 = vector.shape_cast %194 : vector<2x1x256xf32> to vector<2x256xf32>
    %c0_99 = arith.constant 0 : index
    %c19_100 = arith.constant 19 : index
    %c0_101 = arith.constant 0 : index
    %196 = vector.load %arg2[%c0_99, %c19_100, %c0_101] : memref<8x40x256xf32, #tpu.memory_space<vmem>>, vector<8x1x256xf32>
    %197 = vector.shape_cast %196 : vector<8x1x256xf32> to vector<8x256xf32>
    %198 = vector.shape_cast %195 : vector<2x256xf32> to vector<2x1x256xf32>
    %199 = vector.shape_cast %197 : vector<8x256xf32> to vector<1x8x256xf32>
    %200 = vector.broadcast %198 : vector<2x1x256xf32> to vector<2x8x256xf32>
    %201 = vector.broadcast %199 : vector<1x8x256xf32> to vector<2x8x256xf32>
    %202 = arith.mulf %200, %201 : vector<2x8x256xf32>
    %203 = arith.addf %193, %202 : vector<2x8x256xf32>
    %c0_102 = arith.constant 0 : index
    %c20 = arith.constant 20 : index
    %c0_103 = arith.constant 0 : index
    %204 = vector.load %arg1[%c0_102, %c20, %c0_103] : memref<2x40x256xf32, #tpu.memory_space<vmem>>, vector<2x1x256xf32>
    %205 = vector.shape_cast %204 : vector<2x1x256xf32> to vector<2x256xf32>
    %c0_104 = arith.constant 0 : index
    %c20_105 = arith.constant 20 : index
    %c0_106 = arith.constant 0 : index
    %206 = vector.load %arg2[%c0_104, %c20_105, %c0_106] : memref<8x40x256xf32, #tpu.memory_space<vmem>>, vector<8x1x256xf32>
    %207 = vector.shape_cast %206 : vector<8x1x256xf32> to vector<8x256xf32>
    %208 = vector.shape_cast %205 : vector<2x256xf32> to vector<2x1x256xf32>
    %209 = vector.shape_cast %207 : vector<8x256xf32> to vector<1x8x256xf32>
    %210 = vector.broadcast %208 : vector<2x1x256xf32> to vector<2x8x256xf32>
    %211 = vector.broadcast %209 : vector<1x8x256xf32> to vector<2x8x256xf32>
    %212 = arith.mulf %210, %211 : vector<2x8x256xf32>
    %213 = arith.addf %203, %212 : vector<2x8x256xf32>
    %c0_107 = arith.constant 0 : index
    %c21 = arith.constant 21 : index
    %c0_108 = arith.constant 0 : index
    %214 = vector.load %arg1[%c0_107, %c21, %c0_108] : memref<2x40x256xf32, #tpu.memory_space<vmem>>, vector<2x1x256xf32>
    %215 = vector.shape_cast %214 : vector<2x1x256xf32> to vector<2x256xf32>
    %c0_109 = arith.constant 0 : index
    %c21_110 = arith.constant 21 : index
    %c0_111 = arith.constant 0 : index
    %216 = vector.load %arg2[%c0_109, %c21_110, %c0_111] : memref<8x40x256xf32, #tpu.memory_space<vmem>>, vector<8x1x256xf32>
    %217 = vector.shape_cast %216 : vector<8x1x256xf32> to vector<8x256xf32>
    %218 = vector.shape_cast %215 : vector<2x256xf32> to vector<2x1x256xf32>
    %219 = vector.shape_cast %217 : vector<8x256xf32> to vector<1x8x256xf32>
    %220 = vector.broadcast %218 : vector<2x1x256xf32> to vector<2x8x256xf32>
    %221 = vector.broadcast %219 : vector<1x8x256xf32> to vector<2x8x256xf32>
    %222 = arith.mulf %220, %221 : vector<2x8x256xf32>
    %223 = arith.addf %213, %222 : vector<2x8x256xf32>
    %c0_112 = arith.constant 0 : index
    %c22 = arith.constant 22 : index
    %c0_113 = arith.constant 0 : index
    %224 = vector.load %arg1[%c0_112, %c22, %c0_113] : memref<2x40x256xf32, #tpu.memory_space<vmem>>, vector<2x1x256xf32>
    %225 = vector.shape_cast %224 : vector<2x1x256xf32> to vector<2x256xf32>
    %c0_114 = arith.constant 0 : index
    %c22_115 = arith.constant 22 : index
    %c0_116 = arith.constant 0 : index
    %226 = vector.load %arg2[%c0_114, %c22_115, %c0_116] : memref<8x40x256xf32, #tpu.memory_space<vmem>>, vector<8x1x256xf32>
    %227 = vector.shape_cast %226 : vector<8x1x256xf32> to vector<8x256xf32>
    %228 = vector.shape_cast %225 : vector<2x256xf32> to vector<2x1x256xf32>
    %229 = vector.shape_cast %227 : vector<8x256xf32> to vector<1x8x256xf32>
    %230 = vector.broadcast %228 : vector<2x1x256xf32> to vector<2x8x256xf32>
    %231 = vector.broadcast %229 : vector<1x8x256xf32> to vector<2x8x256xf32>
    %232 = arith.mulf %230, %231 : vector<2x8x256xf32>
    %233 = arith.addf %223, %232 : vector<2x8x256xf32>
    %c0_117 = arith.constant 0 : index
    %c23 = arith.constant 23 : index
    %c0_118 = arith.constant 0 : index
    %234 = vector.load %arg1[%c0_117, %c23, %c0_118] : memref<2x40x256xf32, #tpu.memory_space<vmem>>, vector<2x1x256xf32>
    %235 = vector.shape_cast %234 : vector<2x1x256xf32> to vector<2x256xf32>
    %c0_119 = arith.constant 0 : index
    %c23_120 = arith.constant 23 : index
    %c0_121 = arith.constant 0 : index
    %236 = vector.load %arg2[%c0_119, %c23_120, %c0_121] : memref<8x40x256xf32, #tpu.memory_space<vmem>>, vector<8x1x256xf32>
    %237 = vector.shape_cast %236 : vector<8x1x256xf32> to vector<8x256xf32>
    %238 = vector.shape_cast %235 : vector<2x256xf32> to vector<2x1x256xf32>
    %239 = vector.shape_cast %237 : vector<8x256xf32> to vector<1x8x256xf32>
    %240 = vector.broadcast %238 : vector<2x1x256xf32> to vector<2x8x256xf32>
    %241 = vector.broadcast %239 : vector<1x8x256xf32> to vector<2x8x256xf32>
    %242 = arith.mulf %240, %241 : vector<2x8x256xf32>
    %243 = arith.addf %233, %242 : vector<2x8x256xf32>
    %c0_122 = arith.constant 0 : index
    %c24 = arith.constant 24 : index
    %c0_123 = arith.constant 0 : index
    %244 = vector.load %arg1[%c0_122, %c24, %c0_123] : memref<2x40x256xf32, #tpu.memory_space<vmem>>, vector<2x1x256xf32>
    %245 = vector.shape_cast %244 : vector<2x1x256xf32> to vector<2x256xf32>
    %c0_124 = arith.constant 0 : index
    %c24_125 = arith.constant 24 : index
    %c0_126 = arith.constant 0 : index
    %246 = vector.load %arg2[%c0_124, %c24_125, %c0_126] : memref<8x40x256xf32, #tpu.memory_space<vmem>>, vector<8x1x256xf32>
    %247 = vector.shape_cast %246 : vector<8x1x256xf32> to vector<8x256xf32>
    %248 = vector.shape_cast %245 : vector<2x256xf32> to vector<2x1x256xf32>
    %249 = vector.shape_cast %247 : vector<8x256xf32> to vector<1x8x256xf32>
    %250 = vector.broadcast %248 : vector<2x1x256xf32> to vector<2x8x256xf32>
    %251 = vector.broadcast %249 : vector<1x8x256xf32> to vector<2x8x256xf32>
    %252 = arith.mulf %250, %251 : vector<2x8x256xf32>
    %253 = arith.addf %243, %252 : vector<2x8x256xf32>
    %c0_127 = arith.constant 0 : index
    %c25 = arith.constant 25 : index
    %c0_128 = arith.constant 0 : index
    %254 = vector.load %arg1[%c0_127, %c25, %c0_128] : memref<2x40x256xf32, #tpu.memory_space<vmem>>, vector<2x1x256xf32>
    %255 = vector.shape_cast %254 : vector<2x1x256xf32> to vector<2x256xf32>
    %c0_129 = arith.constant 0 : index
    %c25_130 = arith.constant 25 : index
    %c0_131 = arith.constant 0 : index
    %256 = vector.load %arg2[%c0_129, %c25_130, %c0_131] : memref<8x40x256xf32, #tpu.memory_space<vmem>>, vector<8x1x256xf32>
    %257 = vector.shape_cast %256 : vector<8x1x256xf32> to vector<8x256xf32>
    %258 = vector.shape_cast %255 : vector<2x256xf32> to vector<2x1x256xf32>
    %259 = vector.shape_cast %257 : vector<8x256xf32> to vector<1x8x256xf32>
    %260 = vector.broadcast %258 : vector<2x1x256xf32> to vector<2x8x256xf32>
    %261 = vector.broadcast %259 : vector<1x8x256xf32> to vector<2x8x256xf32>
    %262 = arith.mulf %260, %261 : vector<2x8x256xf32>
    %263 = arith.addf %253, %262 : vector<2x8x256xf32>
    %c0_132 = arith.constant 0 : index
    %c26 = arith.constant 26 : index
    %c0_133 = arith.constant 0 : index
    %264 = vector.load %arg1[%c0_132, %c26, %c0_133] : memref<2x40x256xf32, #tpu.memory_space<vmem>>, vector<2x1x256xf32>
    %265 = vector.shape_cast %264 : vector<2x1x256xf32> to vector<2x256xf32>
    %c0_134 = arith.constant 0 : index
    %c26_135 = arith.constant 26 : index
    %c0_136 = arith.constant 0 : index
    %266 = vector.load %arg2[%c0_134, %c26_135, %c0_136] : memref<8x40x256xf32, #tpu.memory_space<vmem>>, vector<8x1x256xf32>
    %267 = vector.shape_cast %266 : vector<8x1x256xf32> to vector<8x256xf32>
    %268 = vector.shape_cast %265 : vector<2x256xf32> to vector<2x1x256xf32>
    %269 = vector.shape_cast %267 : vector<8x256xf32> to vector<1x8x256xf32>
    %270 = vector.broadcast %268 : vector<2x1x256xf32> to vector<2x8x256xf32>
    %271 = vector.broadcast %269 : vector<1x8x256xf32> to vector<2x8x256xf32>
    %272 = arith.mulf %270, %271 : vector<2x8x256xf32>
    %273 = arith.addf %263, %272 : vector<2x8x256xf32>
    %c0_137 = arith.constant 0 : index
    %c27 = arith.constant 27 : index
    %c0_138 = arith.constant 0 : index
    %274 = vector.load %arg1[%c0_137, %c27, %c0_138] : memref<2x40x256xf32, #tpu.memory_space<vmem>>, vector<2x1x256xf32>
    %275 = vector.shape_cast %274 : vector<2x1x256xf32> to vector<2x256xf32>
    %c0_139 = arith.constant 0 : index
    %c27_140 = arith.constant 27 : index
    %c0_141 = arith.constant 0 : index
    %276 = vector.load %arg2[%c0_139, %c27_140, %c0_141] : memref<8x40x256xf32, #tpu.memory_space<vmem>>, vector<8x1x256xf32>
    %277 = vector.shape_cast %276 : vector<8x1x256xf32> to vector<8x256xf32>
    %278 = vector.shape_cast %275 : vector<2x256xf32> to vector<2x1x256xf32>
    %279 = vector.shape_cast %277 : vector<8x256xf32> to vector<1x8x256xf32>
    %280 = vector.broadcast %278 : vector<2x1x256xf32> to vector<2x8x256xf32>
    %281 = vector.broadcast %279 : vector<1x8x256xf32> to vector<2x8x256xf32>
    %282 = arith.mulf %280, %281 : vector<2x8x256xf32>
    %283 = arith.addf %273, %282 : vector<2x8x256xf32>
    %c0_142 = arith.constant 0 : index
    %c28 = arith.constant 28 : index
    %c0_143 = arith.constant 0 : index
    %284 = vector.load %arg1[%c0_142, %c28, %c0_143] : memref<2x40x256xf32, #tpu.memory_space<vmem>>, vector<2x1x256xf32>
    %285 = vector.shape_cast %284 : vector<2x1x256xf32> to vector<2x256xf32>
    %c0_144 = arith.constant 0 : index
    %c28_145 = arith.constant 28 : index
    %c0_146 = arith.constant 0 : index
    %286 = vector.load %arg2[%c0_144, %c28_145, %c0_146] : memref<8x40x256xf32, #tpu.memory_space<vmem>>, vector<8x1x256xf32>
    %287 = vector.shape_cast %286 : vector<8x1x256xf32> to vector<8x256xf32>
    %288 = vector.shape_cast %285 : vector<2x256xf32> to vector<2x1x256xf32>
    %289 = vector.shape_cast %287 : vector<8x256xf32> to vector<1x8x256xf32>
    %290 = vector.broadcast %288 : vector<2x1x256xf32> to vector<2x8x256xf32>
    %291 = vector.broadcast %289 : vector<1x8x256xf32> to vector<2x8x256xf32>
    %292 = arith.mulf %290, %291 : vector<2x8x256xf32>
    %293 = arith.addf %283, %292 : vector<2x8x256xf32>
    %c0_147 = arith.constant 0 : index
    %c29 = arith.constant 29 : index
    %c0_148 = arith.constant 0 : index
    %294 = vector.load %arg1[%c0_147, %c29, %c0_148] : memref<2x40x256xf32, #tpu.memory_space<vmem>>, vector<2x1x256xf32>
    %295 = vector.shape_cast %294 : vector<2x1x256xf32> to vector<2x256xf32>
    %c0_149 = arith.constant 0 : index
    %c29_150 = arith.constant 29 : index
    %c0_151 = arith.constant 0 : index
    %296 = vector.load %arg2[%c0_149, %c29_150, %c0_151] : memref<8x40x256xf32, #tpu.memory_space<vmem>>, vector<8x1x256xf32>
    %297 = vector.shape_cast %296 : vector<8x1x256xf32> to vector<8x256xf32>
    %298 = vector.shape_cast %295 : vector<2x256xf32> to vector<2x1x256xf32>
    %299 = vector.shape_cast %297 : vector<8x256xf32> to vector<1x8x256xf32>
    %300 = vector.broadcast %298 : vector<2x1x256xf32> to vector<2x8x256xf32>
    %301 = vector.broadcast %299 : vector<1x8x256xf32> to vector<2x8x256xf32>
    %302 = arith.mulf %300, %301 : vector<2x8x256xf32>
    %303 = arith.addf %293, %302 : vector<2x8x256xf32>
    %c0_152 = arith.constant 0 : index
    %c30 = arith.constant 30 : index
    %c0_153 = arith.constant 0 : index
    %304 = vector.load %arg1[%c0_152, %c30, %c0_153] : memref<2x40x256xf32, #tpu.memory_space<vmem>>, vector<2x1x256xf32>
    %305 = vector.shape_cast %304 : vector<2x1x256xf32> to vector<2x256xf32>
    %c0_154 = arith.constant 0 : index
    %c30_155 = arith.constant 30 : index
    %c0_156 = arith.constant 0 : index
    %306 = vector.load %arg2[%c0_154, %c30_155, %c0_156] : memref<8x40x256xf32, #tpu.memory_space<vmem>>, vector<8x1x256xf32>
    %307 = vector.shape_cast %306 : vector<8x1x256xf32> to vector<8x256xf32>
    %308 = vector.shape_cast %305 : vector<2x256xf32> to vector<2x1x256xf32>
    %309 = vector.shape_cast %307 : vector<8x256xf32> to vector<1x8x256xf32>
    %310 = vector.broadcast %308 : vector<2x1x256xf32> to vector<2x8x256xf32>
    %311 = vector.broadcast %309 : vector<1x8x256xf32> to vector<2x8x256xf32>
    %312 = arith.mulf %310, %311 : vector<2x8x256xf32>
    %313 = arith.addf %303, %312 : vector<2x8x256xf32>
    %c0_157 = arith.constant 0 : index
    %c31 = arith.constant 31 : index
    %c0_158 = arith.constant 0 : index
    %314 = vector.load %arg1[%c0_157, %c31, %c0_158] : memref<2x40x256xf32, #tpu.memory_space<vmem>>, vector<2x1x256xf32>
    %315 = vector.shape_cast %314 : vector<2x1x256xf32> to vector<2x256xf32>
    %c0_159 = arith.constant 0 : index
    %c31_160 = arith.constant 31 : index
    %c0_161 = arith.constant 0 : index
    %316 = vector.load %arg2[%c0_159, %c31_160, %c0_161] : memref<8x40x256xf32, #tpu.memory_space<vmem>>, vector<8x1x256xf32>
    %317 = vector.shape_cast %316 : vector<8x1x256xf32> to vector<8x256xf32>
    %318 = vector.shape_cast %315 : vector<2x256xf32> to vector<2x1x256xf32>
    %319 = vector.shape_cast %317 : vector<8x256xf32> to vector<1x8x256xf32>
    %320 = vector.broadcast %318 : vector<2x1x256xf32> to vector<2x8x256xf32>
    %321 = vector.broadcast %319 : vector<1x8x256xf32> to vector<2x8x256xf32>
    %322 = arith.mulf %320, %321 : vector<2x8x256xf32>
    %323 = arith.addf %313, %322 : vector<2x8x256xf32>
    %c0_162 = arith.constant 0 : index
    %c32 = arith.constant 32 : index
    %c0_163 = arith.constant 0 : index
    %324 = vector.load %arg1[%c0_162, %c32, %c0_163] : memref<2x40x256xf32, #tpu.memory_space<vmem>>, vector<2x1x256xf32>
    %325 = vector.shape_cast %324 : vector<2x1x256xf32> to vector<2x256xf32>
    %c0_164 = arith.constant 0 : index
    %c32_165 = arith.constant 32 : index
    %c0_166 = arith.constant 0 : index
    %326 = vector.load %arg2[%c0_164, %c32_165, %c0_166] : memref<8x40x256xf32, #tpu.memory_space<vmem>>, vector<8x1x256xf32>
    %327 = vector.shape_cast %326 : vector<8x1x256xf32> to vector<8x256xf32>
    %328 = vector.shape_cast %325 : vector<2x256xf32> to vector<2x1x256xf32>
    %329 = vector.shape_cast %327 : vector<8x256xf32> to vector<1x8x256xf32>
    %330 = vector.broadcast %328 : vector<2x1x256xf32> to vector<2x8x256xf32>
    %331 = vector.broadcast %329 : vector<1x8x256xf32> to vector<2x8x256xf32>
    %332 = arith.mulf %330, %331 : vector<2x8x256xf32>
    %333 = arith.addf %323, %332 : vector<2x8x256xf32>
    %c0_167 = arith.constant 0 : index
    %c33 = arith.constant 33 : index
    %c0_168 = arith.constant 0 : index
    %334 = vector.load %arg1[%c0_167, %c33, %c0_168] : memref<2x40x256xf32, #tpu.memory_space<vmem>>, vector<2x1x256xf32>
    %335 = vector.shape_cast %334 : vector<2x1x256xf32> to vector<2x256xf32>
    %c0_169 = arith.constant 0 : index
    %c33_170 = arith.constant 33 : index
    %c0_171 = arith.constant 0 : index
    %336 = vector.load %arg2[%c0_169, %c33_170, %c0_171] : memref<8x40x256xf32, #tpu.memory_space<vmem>>, vector<8x1x256xf32>
    %337 = vector.shape_cast %336 : vector<8x1x256xf32> to vector<8x256xf32>
    %338 = vector.shape_cast %335 : vector<2x256xf32> to vector<2x1x256xf32>
    %339 = vector.shape_cast %337 : vector<8x256xf32> to vector<1x8x256xf32>
    %340 = vector.broadcast %338 : vector<2x1x256xf32> to vector<2x8x256xf32>
    %341 = vector.broadcast %339 : vector<1x8x256xf32> to vector<2x8x256xf32>
    %342 = arith.mulf %340, %341 : vector<2x8x256xf32>
    %343 = arith.addf %333, %342 : vector<2x8x256xf32>
    %c0_172 = arith.constant 0 : index
    %c34 = arith.constant 34 : index
    %c0_173 = arith.constant 0 : index
    %344 = vector.load %arg1[%c0_172, %c34, %c0_173] : memref<2x40x256xf32, #tpu.memory_space<vmem>>, vector<2x1x256xf32>
    %345 = vector.shape_cast %344 : vector<2x1x256xf32> to vector<2x256xf32>
    %c0_174 = arith.constant 0 : index
    %c34_175 = arith.constant 34 : index
    %c0_176 = arith.constant 0 : index
    %346 = vector.load %arg2[%c0_174, %c34_175, %c0_176] : memref<8x40x256xf32, #tpu.memory_space<vmem>>, vector<8x1x256xf32>
    %347 = vector.shape_cast %346 : vector<8x1x256xf32> to vector<8x256xf32>
    %348 = vector.shape_cast %345 : vector<2x256xf32> to vector<2x1x256xf32>
    %349 = vector.shape_cast %347 : vector<8x256xf32> to vector<1x8x256xf32>
    %350 = vector.broadcast %348 : vector<2x1x256xf32> to vector<2x8x256xf32>
    %351 = vector.broadcast %349 : vector<1x8x256xf32> to vector<2x8x256xf32>
    %352 = arith.mulf %350, %351 : vector<2x8x256xf32>
    %353 = arith.addf %343, %352 : vector<2x8x256xf32>
    %c0_177 = arith.constant 0 : index
    %c35 = arith.constant 35 : index
    %c0_178 = arith.constant 0 : index
    %354 = vector.load %arg1[%c0_177, %c35, %c0_178] : memref<2x40x256xf32, #tpu.memory_space<vmem>>, vector<2x1x256xf32>
    %355 = vector.shape_cast %354 : vector<2x1x256xf32> to vector<2x256xf32>
    %c0_179 = arith.constant 0 : index
    %c35_180 = arith.constant 35 : index
    %c0_181 = arith.constant 0 : index
    %356 = vector.load %arg2[%c0_179, %c35_180, %c0_181] : memref<8x40x256xf32, #tpu.memory_space<vmem>>, vector<8x1x256xf32>
    %357 = vector.shape_cast %356 : vector<8x1x256xf32> to vector<8x256xf32>
    %358 = vector.shape_cast %355 : vector<2x256xf32> to vector<2x1x256xf32>
    %359 = vector.shape_cast %357 : vector<8x256xf32> to vector<1x8x256xf32>
    %360 = vector.broadcast %358 : vector<2x1x256xf32> to vector<2x8x256xf32>
    %361 = vector.broadcast %359 : vector<1x8x256xf32> to vector<2x8x256xf32>
    %362 = arith.mulf %360, %361 : vector<2x8x256xf32>
    %363 = arith.addf %353, %362 : vector<2x8x256xf32>
    %c0_182 = arith.constant 0 : index
    %c0_183 = arith.constant 0 : index
    %c0_184 = arith.constant 0 : index
    %364 = vector.load %arg4[%c0_182, %c0_183, %c0_184] : memref<2x8x256xf32, #tpu.memory_space<vmem>>, vector<2x8x256xf32>
    tpu.vector_store %arg4[%c0_182, %c0_183, %c0_184], %363 {strides = array<i32>} : memref<2x8x256xf32, #tpu.memory_space<vmem>>, vector<2x8x256xf32>,
    return
  }
  func.func @transform_0(%arg0: i32) -> (i32, i32, i32) {
    %c0_i32 = arith.constant 0 : i32
    %c0_i32_0 = arith.constant 0 : i32
    %c0_i32_1 = arith.constant 0 : i32
    return %c0_i32, %c0_i32_0, %arg0 : i32, i32, i32
  }
  func.func @transform_1(%arg0: i32) -> (i32, i32, i32) {
    %c0_i32 = arith.constant 0 : i32
    %c0_i32_0 = arith.constant 0 : i32
    %c0_i32_1 = arith.constant 0 : i32
    return %c0_i32, %c0_i32_0, %arg0 : i32, i32, i32
  }
  func.func @transform_2(%arg0: i32) -> (i32, i32) {
    %c0_i32 = arith.constant 0 : i32
    %c0_i32_0 = arith.constant 0 : i32
    return %c0_i32, %arg0 : i32, i32
  }
  func.func @transform_3(%arg0: i32) -> (i32, i32, i32) {
    %c0_i32 = arith.constant 0 : i32
    %c0_i32_0 = arith.constant 0 : i32
    %c0_i32_1 = arith.constant 0 : i32
    return %c0_i32, %c0_i32_0, %arg0 : i32, i32, i32
  }
}

</mosaic_0001>

<llo_original>
// kernel: tpu_custom_call.1
$region0: #{tpu_custom_call.1}
  #allocation0 [shape = 'u32[]', space=smem, size = 0x4, offset = 0x4, fixed_abs, tag = 'smem constant byte address 0x4 - core index']
  #allocation1 [shape = 'u32[72,128]{1,0:T(1,128)}', space=vmem, size = 0x9000, scoped, tag = 'internal scratch']
  %s0 = inlined_call_operand.hbm [shape: f32[2,40,256], index: 0, kind: input, shape index: {}]
  %s1 = inlined_call_operand.hbm [shape: f32[8,40,256], index: 1, kind: input, shape index: {}]
  %s2 = inlined_call_operand.hbm [shape: f32[8,256], index: 2, kind: input, shape index: {}]
  %s3 = inlined_call_operand.hbm [shape: f32[2,8,256], index: 3, kind: output, shape index: {}]
  %s4 = sld [smem:[#allocation0]]
  $region34: #{tpu_custom_call.1} parent=0
    _
  %s6 = ssub.s32 1, %s4
  %s7 = scalar_select 0, %s6, %s4
  $region1: #{tpu_custom_call.1} parent=0
    #allocation2 [shape = 'u8[81920]{0}', space=vmem, size = 0x14000, scoped, tag = 'input window, operand 0, single buffered']
    #allocation3 [shape = 's32[1]{0}', space=sflag, size = 0x4, scoped, tag = 'scoped memory for tpu_custom_call.1']
    #allocation4 [shape = 's32[1]{0}', space=sflag, size = 0x4, scoped, tag = 'scoped memory for tpu_custom_call.1']
    #allocation5 [shape = 'u8[327680]{0}', space=vmem, size = 0x50000, scoped, tag = 'input window, operand 1, single buffered']
    #allocation6 [shape = 's32[1]{0}', space=sflag, size = 0x4, scoped, tag = 'scoped memory for tpu_custom_call.1']
    #allocation7 [shape = 'u8[8192]{0}', space=vmem, size = 0x2000, scoped, tag = 'input window, operand 2, single buffered']
    #allocation8 [shape = 'u8[16384]{0}', space=vmem, size = 0x4000, scoped, tag = 'output window, operand 0, single buffered']
    %8 = vsyncpa [#allocation3], 0
    %9 = vsyncpa [#allocation6], 0
    %10 = vsyncpa [#allocation4], 0
    // Predicated region
    $region2: #{tpu_custom_call.1} parent=1 // pred_check
      _
    $region3: #{tpu_custom_call.1} parent=1 // pred_check_branch
      %12 = sbr.rel (0) target = $region5
    $region4: #{tpu_custom_call.1} parent=1 // pred_region
      %14 = vsyncadd [#allocation3], 0
      %s15 = sshll.u32 %s0, 4
      %s16 = int_to_ptr.hbm [resolvable:$true] %s15
      %s17 = sshll.u32 [#allocation2], 4
      %s18 = int_to_ptr.vmem [resolvable:$true] %s17
      %23 = dma.hbm_to_vmem [thread:$0]  %s16, 2560, %s18, [#allocation3], 256, 256, 16
    $region5: #{tpu_custom_call.1} parent=1 // pred_fallthru
      _
    // Predicated region
    $region6: #{tpu_custom_call.1} parent=1 // pred_check
      _
    $region7: #{tpu_custom_call.1} parent=1 // pred_check_branch
      %25 = sbr.rel (0) target = $region9
    $region8: #{tpu_custom_call.1} parent=1 // pred_region
      %27 = vsyncadd [#allocation6], 0
      %s28 = sshll.u32 %s1, 4
      %s29 = int_to_ptr.hbm [resolvable:$true] %s28
      %s30 = sshll.u32 [#allocation5], 4
      %s31 = int_to_ptr.vmem [resolvable:$true] %s30
      %36 = dma.hbm_to_vmem [thread:$0]  %s29, 10240, %s31, [#allocation6], 256, 256, 16
    $region9: #{tpu_custom_call.1} parent=1 // pred_fallthru
      _
    // Predicated region
    $region10: #{tpu_custom_call.1} parent=1 // pred_check
      _
    $region11: #{tpu_custom_call.1} parent=1 // pred_check_branch
      %38 = sbr.rel (0) target = $region13
    $region12: #{tpu_custom_call.1} parent=1 // pred_region
      %40 = vsyncadd [#allocation6], 0
      %s42 = sshll.u32 %s2, 4
      %s43 = int_to_ptr.hbm [resolvable:$true] %s42
      %s44 = sshll.u32 [#allocation7], 4
      %s45 = int_to_ptr.vmem [resolvable:$true] %s44
      %47 = dma.hbm_to_vmem [thread:$0]  %s43, 256, %s45, [#allocation6]
    $region13: #{tpu_custom_call.1} parent=1 // pred_fallthru
      _
    // Predicated region
    $region14: #{tpu_custom_call.1} parent=1 // pred_check
      _
    $region15: #{tpu_custom_call.1} parent=1 // pred_check_branch
      %49 = sbr.rel (0) target = $region17
    $region16: #{tpu_custom_call.1} parent=1 // pred_region
      %51 = dma.done [#allocation3], 2560
    $region17: #{tpu_custom_call.1} parent=1 // pred_fallthru
      _
    // Predicated region
    $region18: #{tpu_custom_call.1} parent=1 // pred_check
      _
    $region19: #{tpu_custom_call.1} parent=1 // pred_check_branch
      %53 = sbr.rel (0) target = $region21
    $region20: #{tpu_custom_call.1} parent=1 // pred_region
      %55 = dma.done [#allocation6], 10240
    $region21: #{tpu_custom_call.1} parent=1 // pred_fallthru
      _
    // Predicated region
    $region22: #{tpu_custom_call.1} parent=1 // pred_check
      _
    $region23: #{tpu_custom_call.1} parent=1 // pred_check_branch
      %57 = sbr.rel (0) target = $region25
    $region24: #{tpu_custom_call.1} parent=1 // pred_region
      %59 = dma.done [#allocation6], 256
    $region25: #{tpu_custom_call.1} parent=1 // pred_fallthru
      _
    %v60 = vld [vmem:[#allocation7] sm:$0xff]
    %v61 = vld [vmem:[#allocation7 + $0x8] sm:$0xff]
    %v62 = vld [vmem:[#allocation2] ss:$8 sm:$0x3]
    %s63 = scalar_lea.vmem [#allocation2], 80
    %v64 = vld [vmem:[%s63] ss:$8 sm:$0x3]
    %v65 = vld [vmem:[#allocation5] ss:$8 sm:$0x3]
    %s66 = scalar_lea.vmem [#allocation5], 80
    %v67 = vld [vmem:[%s66] ss:$8 sm:$0x3]
    %s68 = scalar_lea.vmem [#allocation5], 160
    %v69 = vld [vmem:[%s68] ss:$8 sm:$0x3]
    %s70 = scalar_lea.vmem [#allocation5], 240
    %v71 = vld [vmem:[%s70] ss:$8 sm:$0x3]
    %s72 = scalar_lea.vmem [#allocation5], 320
    %v73 = vld [vmem:[%s72] ss:$8 sm:$0x3]
    %s74 = scalar_lea.vmem [#allocation5], 400
    %v75 = vld [vmem:[%s74] ss:$8 sm:$0x3]
    %s76 = scalar_lea.vmem [#allocation5], 480
    %v77 = vld [vmem:[%s76] ss:$8 sm:$0x3]
    %s78 = scalar_lea.vmem [#allocation5], 560
    %v79 = vld [vmem:[%s78] ss:$8 sm:$0x3]
    %v82 = vperm.slane %v62, 0
    %v83 = vperm.slane %v62, 1
    %v84 = vperm.slane %v64, 0
    %v85 = vperm.slane %v64, 1
    %98 = vst [vmem:[#allocation1] ss:$9 sm:$0xff] %v65
    %s99 = scalar_lea.vmem [#allocation1], 1
    %100 = vst [vmem:[%s99] ss:$9 sm:$0xff] %v67
    %s101 = scalar_lea.vmem [#allocation1], 2
    %102 = vst [vmem:[%s101] ss:$9 sm:$0xff] %v69
    %s103 = scalar_lea.vmem [#allocation1], 3
    %104 = vst [vmem:[%s103] ss:$9 sm:$0xff] %v71
    %s105 = scalar_lea.vmem [#allocation1], 4
    %106 = vst [vmem:[%s105] ss:$9 sm:$0xff] %v73
    %s107 = scalar_lea.vmem [#allocation1], 5
    %108 = vst [vmem:[%s107] ss:$9 sm:$0xff] %v75
    %s109 = scalar_lea.vmem [#allocation1], 6
    %110 = vst [vmem:[%s109] ss:$9 sm:$0xff] %v77
    %s111 = scalar_lea.vmem [#allocation1], 7
    %112 = vst [vmem:[%s111] ss:$9 sm:$0xff] %v79
    %v113 = vld [vmem:[#allocation1] sm:$0xff]
    %v114 = vld [vmem:[#allocation1 + $0x9] sm:$0xff]
    %115 = vst [vmem:[#allocation1] ss:$9 sm:$0xff] %v65
    %116 = vst [vmem:[%s99] ss:$9 sm:$0xff] %v67
    %117 = vst [vmem:[%s101] ss:$9 sm:$0xff] %v69
    %118 = vst [vmem:[%s103] ss:$9 sm:$0xff] %v71
    %119 = vst [vmem:[%s105] ss:$9 sm:$0xff] %v73
    %120 = vst [vmem:[%s107] ss:$9 sm:$0xff] %v75
    %121 = vst [vmem:[%s109] ss:$9 sm:$0xff] %v77
    %122 = vst [vmem:[%s111] ss:$9 sm:$0xff] %v79
    %v123 = vld [vmem:[#allocation1] sm:$0xff]
    %v124 = vld [vmem:[#allocation1 + $0x9] sm:$0xff]
    %v129 = vmul.f32 %v82, %v113
    %v130 = vmul.f32 %v83, %v114
    %v131 = vmul.f32 %v84, %v123
    %v132 = vmul.f32 %v85, %v124
    %v133 = vadd.f32 %v60, %v129
    %v134 = vadd.f32 %v61, %v130
    %v135 = vadd.f32 %v60, %v131
    %v136 = vadd.f32 %v61, %v132
    %s137 = scalar_lea.vmem [#allocation2], 1
    %v138 = vld [vmem:[%s137] ss:$8 sm:$0x3]
    %s139 = scalar_lea.vmem [#allocation2], 81
    %v140 = vld [vmem:[%s139] ss:$8 sm:$0x3]
    %s141 = scalar_lea.vmem [#allocation5], 1
    %v142 = vld [vmem:[%s141] ss:$8 sm:$0x3]
    %s143 = scalar_lea.vmem [#allocation5], 81
    %v144 = vld [vmem:[%s143] ss:$8 sm:$0x3]
    %s145 = scalar_lea.vmem [#allocation5], 161
    %v146 = vld [vmem:[%s145] ss:$8 sm:$0x3]
    %s147 = scalar_lea.vmem [#allocation5], 241
    %v148 = vld [vmem:[%s147] ss:$8 sm:$0x3]
    %s149 = scalar_lea.vmem [#allocation5], 321
    %v150 = vld [vmem:[%s149] ss:$8 sm:$0x3]
    %s151 = scalar_lea.vmem [#allocation5], 401
    %v152 = vld [vmem:[%s151] ss:$8 sm:$0x3]
    %s153 = scalar_lea.vmem [#allocation5], 481
    %v154 = vld [vmem:[%s153] ss:$8 sm:$0x3]
    %s155 = scalar_lea.vmem [#allocation5], 561
    %v156 = vld [vmem:[%s155] ss:$8 sm:$0x3]
    %v159 = vperm.slane %v138, 0
    %v160 = vperm.slane %v138, 1
    %v161 = vperm.slane %v140, 0
    %v162 = vperm.slane %v140, 1
    %175 = vst [vmem:[#allocation1] ss:$9 sm:$0xff] %v142
    %s176 = scalar_lea.vmem [#allocation1], 1
    %177 = vst [vmem:[%s176] ss:$9 sm:$0xff] %v144
    %s178 = scalar_lea.vmem [#allocation1], 2
    %179 = vst [vmem:[%s178] ss:$9 sm:$0xff] %v146
    %s180 = scalar_lea.vmem [#allocation1], 3
    %181 = vst [vmem:[%s180] ss:$9 sm:$0xff] %v148
    %s182 = scalar_lea.vmem [#allocation1], 4
    %183 = vst [vmem:[%s182] ss:$9 sm:$0xff] %v150
    %s184 = scalar_lea.vmem [#allocation1], 5
    %185 = vst [vmem:[%s184] ss:$9 sm:$0xff] %v152
    %s186 = scalar_lea.vmem [#allocation1], 6
    %187 = vst [vmem:[%s186] ss:$9 sm:$0xff] %v154
    %s188 = scalar_lea.vmem [#allocation1], 7
    %189 = vst [vmem:[%s188] ss:$9 sm:$0xff] %v156
    %v190 = vld [vmem:[#allocation1] sm:$0xff]
    %v191 = vld [vmem:[#allocation1 + $0x9] sm:$0xff]
    %192 = vst [vmem:[#allocation1] ss:$9 sm:$0xff] %v142
    %193 = vst [vmem:[%s176] ss:$9 sm:$0xff] %v144
    %194 = vst [vmem:[%s178] ss:$9 sm:$0xff] %v146
    %195 = vst [vmem:[%s180] ss:$9 sm:$0xff] %v148
    %196 = vst [vmem:[%s182] ss:$9 sm:$0xff] %v150
    %197 = vst [vmem:[%s184] ss:$9 sm:$0xff] %v152
    %198 = vst [vmem:[%s186] ss:$9 sm:$0xff] %v154
    %199 = vst [vmem:[%s188] ss:$9 sm:$0xff] %v156
    %v200 = vld [vmem:[#allocation1] sm:$0xff]
    %v201 = vld [vmem:[#allocation1 + $0x9] sm:$0xff]
    %v206 = vmul.f32 %v159, %v190
    %v207 = vmul.f32 %v160, %v191
    %v208 = vmul.f32 %v161, %v200
    %v209 = vmul.f32 %v162, %v201
    %v210 = vadd.f32 %v133, %v206
    %v211 = vadd.f32 %v134, %v207
    %v212 = vadd.f32 %v135, %v208
    %v213 = vadd.f32 %v136, %v209
    %s214 = scalar_lea.vmem [#allocation2], 2
    %v215 = vld [vmem:[%s214] ss:$8 sm:$0x3]
    %s216 = scalar_lea.vmem [#allocation2], 82
    %v217 = vld [vmem:[%s216] ss:$8 sm:$0x3]
    %s218 = scalar_lea.vmem [#allocation5], 2
    %v219 = vld [vmem:[%s218] ss:$8 sm:$0x3]
    %s220 = scalar_lea.vmem [#allocation5], 82
    %v221 = vld [vmem:[%s220] ss:$8 sm:$0x3]
    %s222 = scalar_lea.vmem [#allocation5], 162
    %v223 = vld [vmem:[%s222] ss:$8 sm:$0x3]
    %s224 = scalar_lea.vmem [#allocation5], 242
    %v225 = vld [vmem:[%s224] ss:$8 sm:$0x3]
    %s226 = scalar_lea.vmem [#allocation5], 322
    %v227 = vld [vmem:[%s226] ss:$8 sm:$0x3]
    %s228 = scalar_lea.vmem [#allocation5], 402
    %v229 = vld [vmem:[%s228] ss:$8 sm:$0x3]
    %s230 = scalar_lea.vmem [#allocation5], 482
    %v231 = vld [vmem:[%s230] ss:$8 sm:$0x3]
    %s232 = scalar_lea.vmem [#allocation5], 562
    %v233 = vld [vmem:[%s232] ss:$8 sm:$0x3]
    %v236 = vperm.slane %v215, 0
    %v237 = vperm.slane %v215, 1
    %v238 = vperm.slane %v217, 0
    %v239 = vperm.slane %v217, 1
    %252 = vst [vmem:[#allocation1] ss:$9 sm:$0xff] %v219
    %s253 = scalar_lea.vmem [#allocation1], 1
    %254 = vst [vmem:[%s253] ss:$9 sm:$0xff] %v221
    %s255 = scalar_lea.vmem [#allocation1], 2
    %256 = vst [vmem:[%s255] ss:$9 sm:$0xff] %v223
    %s257 = scalar_lea.vmem [#allocation1], 3
    %258 = vst [vmem:[%s257] ss:$9 sm:$0xff] %v225
    %s259 = scalar_lea.vmem [#allocation1], 4
    %260 = vst [vmem:[%s259] ss:$9 sm:$0xff] %v227
    %s261 = scalar_lea.vmem [#allocation1], 5
    %262 = vst [vmem:[%s261] ss:$9 sm:$0xff] %v229
    %s263 = scalar_lea.vmem [#allocation1], 6
    %264 = vst [vmem:[%s263] ss:$9 sm:$0xff] %v231
    %s265 = scalar_lea.vmem [#allocation1], 7
    %266 = vst [vmem:[%s265] ss:$9 sm:$0xff] %v233
    %v267 = vld [vmem:[#allocation1] sm:$0xff]
    %v268 = vld [vmem:[#allocation1 + $0x9] sm:$0xff]
    %269 = vst [vmem:[#allocation1] ss:$9 sm:$0xff] %v219
    %270 = vst [vmem:[%s253] ss:$9 sm:$0xff] %v221
    %271 = vst [vmem:[%s255] ss:$9 sm:$0xff] %v223
    %272 = vst [vmem:[%s257] ss:$9 sm:$0xff] %v225
    %273 = vst [vmem:[%s259] ss:$9 sm:$0xff] %v227
    %274 = vst [vmem:[%s261] ss:$9 sm:$0xff] %v229
    %275 = vst [vmem:[%s263] ss:$9 sm:$0xff] %v231
    %276 = vst [vmem:[%s265] ss:$9 sm:$0xff] %v233
    %v277 = vld [vmem:[#allocation1] sm:$0xff]
    %v278 = vld [vmem:[#allocation1 + $0x9] sm:$0xff]
    %v283 = vmul.f32 %v236, %v267
    %v284 = vmul.f32 %v237, %v268
    %v285 = vmul.f32 %v238, %v277
    %v286 = vmul.f32 %v239, %v278
    %v287 = vadd.f32 %v210, %v283
    %v288 = vadd.f32 %v211, %v284
    %v289 = vadd.f32 %v212, %v285
    %v290 = vadd.f32 %v213, %v286
    %s291 = scalar_lea.vmem [#allocation2], 3
    %v292 = vld [vmem:[%s291] ss:$8 sm:$0x3]
    %s293 = scalar_lea.vmem [#allocation2], 83
    %v294 = vld [vmem:[%s293] ss:$8 sm:$0x3]
    %s295 = scalar_lea.vmem [#allocation5], 3
    %v296 = vld [vmem:[%s295] ss:$8 sm:$0x3]
    %s297 = scalar_lea.vmem [#allocation5], 83
    %v298 = vld [vmem:[%s297] ss:$8 sm:$0x3]
    %s299 = scalar_lea.vmem [#allocation5], 163
    %v300 = vld [vmem:[%s299] ss:$8 sm:$0x3]
    %s301 = scalar_lea.vmem [#allocation5], 243
    %v302 = vld [vmem:[%s301] ss:$8 sm:$0x3]
    %s303 = scalar_lea.vmem [#allocation5], 323
    %v304 = vld [vmem:[%s303] ss:$8 sm:$0x3]
    %s305 = scalar_lea.vmem [#allocation5], 403
    %v306 = vld [vmem:[%s305] ss:$8 sm:$0x3]
    %s307 = scalar_lea.vmem [#allocation5], 483
    %v308 = vld [vmem:[%s307] ss:$8 sm:$0x3]
    %s309 = scalar_lea.vmem [#allocation5], 563
    %v310 = vld [vmem:[%s309] ss:$8 sm:$0x3]
    %v313 = vperm.slane %v292, 0
    %v314 = vperm.slane %v292, 1
    %v315 = vperm.slane %v294, 0
    %v316 = vperm.slane %v294, 1
    %329 = vst [vmem:[#allocation1] ss:$9 sm:$0xff] %v296
    %s330 = scalar_lea.vmem [#allocation1], 1
    %331 = vst [vmem:[%s330] ss:$9 sm:$0xff] %v298
    %s332 = scalar_lea.vmem [#allocation1], 2
    %333 = vst [vmem:[%s332] ss:$9 sm:$0xff] %v300
    %s334 = scalar_lea.vmem [#allocation1], 3
    %335 = vst [vmem:[%s334] ss:$9 sm:$0xff] %v302
    %s336 = scalar_lea.vmem [#allocation1], 4
    %337 = vst [vmem:[%s336] ss:$9 sm:$0xff] %v304
    %s338 = scalar_lea.vmem [#allocation1], 5
    %339 = vst [vmem:[%s338] ss:$9 sm:$0xff] %v306
    %s340 = scalar_lea.vmem [#allocation1], 6
    %341 = vst [vmem:[%s340] ss:$9 sm:$0xff] %v308
    %s342 = scalar_lea.vmem [#allocation1], 7
    %343 = vst [vmem:[%s342] ss:$9 sm:$0xff] %v310
    %v344 = vld [vmem:[#allocation1] sm:$0xff]
    %v345 = vld [vmem:[#allocation1 + $0x9] sm:$0xff]
    %346 = vst [vmem:[#allocation1] ss:$9 sm:$0xff] %v296
    %347 = vst [vmem:[%s330] ss:$9 sm:$0xff] %v298
    %348 = vst [vmem:[%s332] ss:$9 sm:$0xff] %v300
    %349 = vst [vmem:[%s334] ss:$9 sm:$0xff] %v302
    %350 = vst [vmem:[%s336] ss:$9 sm:$0xff] %v304
    %351 = vst [vmem:[%s338] ss:$9 sm:$0xff] %v306
    %352 = vst [vmem:[%s340] ss:$9 sm:$0xff] %v308
    %353 = vst [vmem:[%s342] ss:$9 sm:$0xff] %v310
    %v354 = vld [vmem:[#allocation1] sm:$0xff]
    %v355 = vld [vmem:[#allocation1 + $0x9] sm:$0xff]
    %v360 = vmul.f32 %v313, %v344
    %v361 = vmul.f32 %v314, %v345
    %v362 = vmul.f32 %v315, %v354
    %v363 = vmul.f32 %v316, %v355
    %v364 = vadd.f32 %v287, %v360
    %v365 = vadd.f32 %v288, %v361
    %v366 = vadd.f32 %v289, %v362
    %v367 = vadd.f32 %v290, %v363
    %s368 = scalar_lea.vmem [#allocation2], 4
    %v369 = vld [vmem:[%s368] ss:$8 sm:$0x3]
    %s370 = scalar_lea.vmem [#allocation2], 84
    %v371 = vld [vmem:[%s370] ss:$8 sm:$0x3]
    %s372 = scalar_lea.vmem [#allocation5], 4
    %v373 = vld [vmem:[%s372] ss:$8 sm:$0x3]
    %s374 = scalar_lea.vmem [#allocation5], 84
    %v375 = vld [vmem:[%s374] ss:$8 sm:$0x3]
    %s376 = scalar_lea.vmem [#allocation5], 164
    %v377 = vld [vmem:[%s376] ss:$8 sm:$0x3]
    %s378 = scalar_lea.vmem [#allocation5], 244
    %v379 = vld [vmem:[%s378] ss:$8 sm:$0x3]
    %s380 = scalar_lea.vmem [#allocation5], 324
    %v381 = vld [vmem:[%s380] ss:$8 sm:$0x3]
    %s382 = scalar_lea.vmem [#allocation5], 404
    %v383 = vld [vmem:[%s382] ss:$8 sm:$0x3]
    %s384 = scalar_lea.vmem [#allocation5], 484
    %v385 = vld [vmem:[%s384] ss:$8 sm:$0x3]
    %s386 = scalar_lea.vmem [#allocation5], 564
    %v387 = vld [vmem:[%s386] ss:$8 sm:$0x3]
    %v390 = vperm.slane %v369, 0
    %v391 = vperm.slane %v369, 1
    %v392 = vperm.slane %v371, 0
    %v393 = vperm.slane %v371, 1
    %406 = vst [vmem:[#allocation1] ss:$9 sm:$0xff] %v373
    %s407 = scalar_lea.vmem [#allocation1], 1
    %408 = vst [vmem:[%s407] ss:$9 sm:$0xff] %v375
    %s409 = scalar_lea.vmem [#allocation1], 2
    %410 = vst [vmem:[%s409] ss:$9 sm:$0xff] %v377
    %s411 = scalar_lea.vmem [#allocation1], 3
    %412 = vst [vmem:[%s411] ss:$9 sm:$0xff] %v379
    %s413 = scalar_lea.vmem [#allocation1], 4
    %414 = vst [vmem:[%s413] ss:$9 sm:$0xff] %v381
    %s415 = scalar_lea.vmem [#allocation1], 5
    %416 = vst [vmem:[%s415] ss:$9 sm:$0xff] %v383
    %s417 = scalar_lea.vmem [#allocation1], 6
    %418 = vst [vmem:[%s417] ss:$9 sm:$0xff] %v385
    %s419 = scalar_lea.vmem [#allocation1], 7
    %420 = vst [vmem:[%s419] ss:$9 sm:$0xff] %v387
    %v421 = vld [vmem:[#allocation1] sm:$0xff]
    %v422 = vld [vmem:[#allocation1 + $0x9] sm:$0xff]
    %423 = vst [vmem:[#allocation1] ss:$9 sm:$0xff] %v373
    %424 = vst [vmem:[%s407] ss:$9 sm:$0xff] %v375
    %425 = vst [vmem:[%s409] ss:$9 sm:$0xff] %v377
    %426 = vst [vmem:[%s411] ss:$9 sm:$0xff] %v379
    %427 = vst [vmem:[%s413] ss:$9 sm:$0xff] %v381
    %428 = vst [vmem:[%s415] ss:$9 sm:$0xff] %v383
    %429 = vst [vmem:[%s417] ss:$9 sm:$0xff] %v385
    %430 = vst [vmem:[%s419] ss:$9 sm:$0xff] %v387
    %v431 = vld [vmem:[#allocation1] sm:$0xff]
    %v432 = vld [vmem:[#allocation1 + $0x9] sm:$0xff]
    %v437 = vmul.f32 %v390, %v421
    %v438 = vmul.f32 %v391, %v422
    %v439 = vmul.f32 %v392, %v431
    %v440 = vmul.f32 %v393, %v432
    %v441 = vadd.f32 %v364, %v437
    %v442 = vadd.f32 %v365, %v438
    %v443 = vadd.f32 %v366, %v439
    %v444 = vadd.f32 %v367, %v440
    %s445 = scalar_lea.vmem [#allocation2], 5
    %v446 = vld [vmem:[%s445] ss:$8 sm:$0x3]
    %s447 = scalar_lea.vmem [#allocation2], 85
    %v448 = vld [vmem:[%s447] ss:$8 sm:$0x3]
    %s449 = scalar_lea.vmem [#allocation5], 5
    %v450 = vld [vmem:[%s449] ss:$8 sm:$0x3]
    %s451 = scalar_lea.vmem [#allocation5], 85
    %v452 = vld [vmem:[%s451] ss:$8 sm:$0x3]
    %s453 = scalar_lea.vmem [#allocation5], 165
    %v454 = vld [vmem:[%s453] ss:$8 sm:$0x3]
    %s455 = scalar_lea.vmem [#allocation5], 245
    %v456 = vld [vmem:[%s455] ss:$8 sm:$0x3]
    %s457 = scalar_lea.vmem [#allocation5], 325
    %v458 = vld [vmem:[%s457] ss:$8 sm:$0x3]
    %s459 = scalar_lea.vmem [#allocation5], 405
    %v460 = vld [vmem:[%s459] ss:$8 sm:$0x3]
    %s461 = scalar_lea.vmem [#allocation5], 485
    %v462 = vld [vmem:[%s461] ss:$8 sm:$0x3]
    %s463 = scalar_lea.vmem [#allocation5], 565
    %v464 = vld [vmem:[%s463] ss:$8 sm:$0x3]
    %v467 = vperm.slane %v446, 0
    %v468 = vperm.slane %v446, 1
    %v469 = vperm.slane %v448, 0
    %v470 = vperm.slane %v448, 1
    %483 = vst [vmem:[#allocation1] ss:$9 sm:$0xff] %v450
    %s484 = scalar_lea.vmem [#allocation1], 1
    %485 = vst [vmem:[%s484] ss:$9 sm:$0xff] %v452
    %s486 = scalar_lea.vmem [#allocation1], 2
    %487 = vst [vmem:[%s486] ss:$9 sm:$0xff] %v454
    %s488 = scalar_lea.vmem [#allocation1], 3
    %489 = vst [vmem:[%s488] ss:$9 sm:$0xff] %v456
    %s490 = scalar_lea.vmem [#allocation1], 4
    %491 = vst [vmem:[%s490] ss:$9 sm:$0xff] %v458
    %s492 = scalar_lea.vmem [#allocation1], 5
    %493 = vst [vmem:[%s492] ss:$9 sm:$0xff] %v460
    %s494 = scalar_lea.vmem [#allocation1], 6
    %495 = vst [vmem:[%s494] ss:$9 sm:$0xff] %v462
    %s496 = scalar_lea.vmem [#allocation1], 7
    %497 = vst [vmem:[%s496] ss:$9 sm:$0xff] %v464
    %v498 = vld [vmem:[#allocation1] sm:$0xff]
    %v499 = vld [vmem:[#allocation1 + $0x9] sm:$0xff]
    %500 = vst [vmem:[#allocation1] ss:$9 sm:$0xff] %v450
    %501 = vst [vmem:[%s484] ss:$9 sm:$0xff] %v452
    %502 = vst [vmem:[%s486] ss:$9 sm:$0xff] %v454
    %503 = vst [vmem:[%s488] ss:$9 sm:$0xff] %v456
    %504 = vst [vmem:[%s490] ss:$9 sm:$0xff] %v458
    %505 = vst [vmem:[%s492] ss:$9 sm:$0xff] %v460
    %506 = vst [vmem:[%s494] ss:$9 sm:$0xff] %v462
    %507 = vst [vmem:[%s496] ss:$9 sm:$0xff] %v464
    %v508 = vld [vmem:[#allocation1] sm:$0xff]
    %v509 = vld [vmem:[#allocation1 + $0x9] sm:$0xff]
    %v514 = vmul.f32 %v467, %v498
    %v515 = vmul.f32 %v468, %v499
    %v516 = vmul.f32 %v469, %v508
    %v517 = vmul.f32 %v470, %v509
    %v518 = vadd.f32 %v441, %v514
    %v519 = vadd.f32 %v442, %v515
    %v520 = vadd.f32 %v443, %v516
    %v521 = vadd.f32 %v444, %v517
    %s522 = scalar_lea.vmem [#allocation2], 6
    %v523 = vld [vmem:[%s522] ss:$8 sm:$0x3]
    %s524 = scalar_lea.vmem [#allocation2], 86
    %v525 = vld [vmem:[%s524] ss:$8 sm:$0x3]
    %s526 = scalar_lea.vmem [#allocation5], 6
    %v527 = vld [vmem:[%s526] ss:$8 sm:$0x3]
    %s528 = scalar_lea.vmem [#allocation5], 86
    %v529 = vld [vmem:[%s528] ss:$8 sm:$0x3]
    %s530 = scalar_lea.vmem [#allocation5], 166
    %v531 = vld [vmem:[%s530] ss:$8 sm:$0x3]
    %s532 = scalar_lea.vmem [#allocation5], 246
    %v533 = vld [vmem:[%s532] ss:$8 sm:$0x3]
    %s534 = scalar_lea.vmem [#allocation5], 326
    %v535 = vld [vmem:[%s534] ss:$8 sm:$0x3]
    %s536 = scalar_lea.vmem [#allocation5], 406
    %v537 = vld [vmem:[%s536] ss:$8 sm:$0x3]
    %s538 = scalar_lea.vmem [#allocation5], 486
    %v539 = vld [vmem:[%s538] ss:$8 sm:$0x3]
    %s540 = scalar_lea.vmem [#allocation5], 566
    %v541 = vld [vmem:[%s540] ss:$8 sm:$0x3]
    %v544 = vperm.slane %v523, 0
    %v545 = vperm.slane %v523, 1
    %v546 = vperm.slane %v525, 0
    %v547 = vperm.slane %v525, 1
    %560 = vst [vmem:[#allocation1] ss:$9 sm:$0xff] %v527
    %s561 = scalar_lea.vmem [#allocation1], 1
    %562 = vst [vmem:[%s561] ss:$9 sm:$0xff] %v529
    %s563 = scalar_lea.vmem [#allocation1], 2
    %564 = vst [vmem:[%s563] ss:$9 sm:$0xff] %v531
    %s565 = scalar_lea.vmem [#allocation1], 3
    %566 = vst [vmem:[%s565] ss:$9 sm:$0xff] %v533
    %s567 = scalar_lea.vmem [#allocation1], 4
    %568 = vst [vmem:[%s567] ss:$9 sm:$0xff] %v535
    %s569 = scalar_lea.vmem [#allocation1], 5
    %570 = vst [vmem:[%s569] ss:$9 sm:$0xff] %v537
    %s571 = scalar_lea.vmem [#allocation1], 6
    %572 = vst [vmem:[%s571] ss:$9 sm:$0xff] %v539
    %s573 = scalar_lea.vmem [#allocation1], 7
    %574 = vst [vmem:[%s573] ss:$9 sm:$0xff] %v541
    %v575 = vld [vmem:[#allocation1] sm:$0xff]
    %v576 = vld [vmem:[#allocation1 + $0x9] sm:$0xff]
    %577 = vst [vmem:[#allocation1] ss:$9 sm:$0xff] %v527
    %578 = vst [vmem:[%s561] ss:$9 sm:$0xff] %v529
    %579 = vst [vmem:[%s563] ss:$9 sm:$0xff] %v531
    %580 = vst [vmem:[%s565] ss:$9 sm:$0xff] %v533
    %581 = vst [vmem:[%s567] ss:$9 sm:$0xff] %v535
    %582 = vst [vmem:[%s569] ss:$9 sm:$0xff] %v537
    %583 = vst [vmem:[%s571] ss:$9 sm:$0xff] %v539
    %584 = vst [vmem:[%s573] ss:$9 sm:$0xff] %v541
    %v585 = vld [vmem:[#allocation1] sm:$0xff]
    %v586 = vld [vmem:[#allocation1 + $0x9] sm:$0xff]
    %v591 = vmul.f32 %v544, %v575
    %v592 = vmul.f32 %v545, %v576
    %v593 = vmul.f32 %v546, %v585
    %v594 = vmul.f32 %v547, %v586
    %v595 = vadd.f32 %v518, %v591
    %v596 = vadd.f32 %v519, %v592
    %v597 = vadd.f32 %v520, %v593
    %v598 = vadd.f32 %v521, %v594
    %s599 = scalar_lea.vmem [#allocation2], 7
    %v600 = vld [vmem:[%s599] ss:$8 sm:$0x3]
    %s601 = scalar_lea.vmem [#allocation2], 87
    %v602 = vld [vmem:[%s601] ss:$8 sm:$0x3]
    %s603 = scalar_lea.vmem [#allocation5], 7
    %v604 = vld [vmem:[%s603] ss:$8 sm:$0x3]
    %s605 = scalar_lea.vmem [#allocation5], 87
    %v606 = vld [vmem:[%s605] ss:$8 sm:$0x3]
    %s607 = scalar_lea.vmem [#allocation5], 167
    %v608 = vld [vmem:[%s607] ss:$8 sm:$0x3]
    %s609 = scalar_lea.vmem [#allocation5], 247
    %v610 = vld [vmem:[%s609] ss:$8 sm:$0x3]
    %s611 = scalar_lea.vmem [#allocation5], 327
    %v612 = vld [vmem:[%s611] ss:$8 sm:$0x3]
    %s613 = scalar_lea.vmem [#allocation5], 407
    %v614 = vld [vmem:[%s613] ss:$8 sm:$0x3]
    %s615 = scalar_lea.vmem [#allocation5], 487
    %v616 = vld [vmem:[%s615] ss:$8 sm:$0x3]
    %s617 = scalar_lea.vmem [#allocation5], 567
    %v618 = vld [vmem:[%s617] ss:$8 sm:$0x3]
    %v621 = vperm.slane %v600, 0
    %v622 = vperm.slane %v600, 1
    %v623 = vperm.slane %v602, 0
    %v624 = vperm.slane %v602, 1
    %637 = vst [vmem:[#allocation1] ss:$9 sm:$0xff] %v604
    %s638 = scalar_lea.vmem [#allocation1], 1
    %639 = vst [vmem:[%s638] ss:$9 sm:$0xff] %v606
    %s640 = scalar_lea.vmem [#allocation1], 2
    %641 = vst [vmem:[%s640] ss:$9 sm:$0xff] %v608
    %s642 = scalar_lea.vmem [#allocation1], 3
    %643 = vst [vmem:[%s642] ss:$9 sm:$0xff] %v610
    %s644 = scalar_lea.vmem [#allocation1], 4
    %645 = vst [vmem:[%s644] ss:$9 sm:$0xff] %v612
    %s646 = scalar_lea.vmem [#allocation1], 5
    %647 = vst [vmem:[%s646] ss:$9 sm:$0xff] %v614
    %s648 = scalar_lea.vmem [#allocation1], 6
    %649 = vst [vmem:[%s648] ss:$9 sm:$0xff] %v616
    %s650 = scalar_lea.vmem [#allocation1], 7
    %651 = vst [vmem:[%s650] ss:$9 sm:$0xff] %v618
    %v652 = vld [vmem:[#allocation1] sm:$0xff]
    %v653 = vld [vmem:[#allocation1 + $0x9] sm:$0xff]
    %654 = vst [vmem:[#allocation1] ss:$9 sm:$0xff] %v604
    %655 = vst [vmem:[%s638] ss:$9 sm:$0xff] %v606
    %656 = vst [vmem:[%s640] ss:$9 sm:$0xff] %v608
    %657 = vst [vmem:[%s642] ss:$9 sm:$0xff] %v610
    %658 = vst [vmem:[%s644] ss:$9 sm:$0xff] %v612
    %659 = vst [vmem:[%s646] ss:$9 sm:$0xff] %v614
    %660 = vst [vmem:[%s648] ss:$9 sm:$0xff] %v616
    %661 = vst [vmem:[%s650] ss:$9 sm:$0xff] %v618
    %v662 = vld [vmem:[#allocation1] sm:$0xff]
    %v663 = vld [vmem:[#allocation1 + $0x9] sm:$0xff]
    %v668 = vmul.f32 %v621, %v652
    %v669 = vmul.f32 %v622, %v653
    %v670 = vmul.f32 %v623, %v662
    %v671 = vmul.f32 %v624, %v663
    %v672 = vadd.f32 %v595, %v668
    %v673 = vadd.f32 %v596, %v669
    %v674 = vadd.f32 %v597, %v670
    %v675 = vadd.f32 %v598, %v671
    %s676 = scalar_lea.vmem [#allocation2], 16
    %v677 = vld [vmem:[%s676] ss:$8 sm:$0x3]
    %s678 = scalar_lea.vmem [#allocation2], 96
    %v679 = vld [vmem:[%s678] ss:$8 sm:$0x3]
    %s680 = scalar_lea.vmem [#allocation5], 16
    %v681 = vld [vmem:[%s680] ss:$8 sm:$0x3]
    %s682 = scalar_lea.vmem [#allocation5], 96
    %v683 = vld [vmem:[%s682] ss:$8 sm:$0x3]
    %s684 = scalar_lea.vmem [#allocation5], 176
    %v685 = vld [vmem:[%s684] ss:$8 sm:$0x3]
    %s686 = scalar_lea.vmem [#allocation5], 256
    %v687 = vld [vmem:[%s686] ss:$8 sm:$0x3]
    %s688 = scalar_lea.vmem [#allocation5], 336
    %v689 = vld [vmem:[%s688] ss:$8 sm:$0x3]
    %s690 = scalar_lea.vmem [#allocation5], 416
    %v691 = vld [vmem:[%s690] ss:$8 sm:$0x3]
    %s692 = scalar_lea.vmem [#allocation5], 496
    %v693 = vld [vmem:[%s692] ss:$8 sm:$0x3]
    %s694 = scalar_lea.vmem [#allocation5], 576
    %v695 = vld [vmem:[%s694] ss:$8 sm:$0x3]
    %v698 = vperm.slane %v677, 0
    %v699 = vperm.slane %v677, 1
    %v700 = vperm.slane %v679, 0
    %v701 = vperm.slane %v679, 1
    %714 = vst [vmem:[#allocation1] ss:$9 sm:$0xff] %v681
    %s715 = scalar_lea.vmem [#allocation1], 1
    %716 = vst [vmem:[%s715] ss:$9 sm:$0xff] %v683
    %s717 = scalar_lea.vmem [#allocation1], 2
    %718 = vst [vmem:[%s717] ss:$9 sm:$0xff] %v685
    %s719 = scalar_lea.vmem [#allocation1], 3
    %720 = vst [vmem:[%s719] ss:$9 sm:$0xff] %v687
    %s721 = scalar_lea.vmem [#allocation1], 4
    %722 = vst [vmem:[%s721] ss:$9 sm:$0xff] %v689
    %s723 = scalar_lea.vmem [#allocation1], 5
    %724 = vst [vmem:[%s723] ss:$9 sm:$0xff] %v691
    %s725 = scalar_lea.vmem [#allocation1], 6
    %726 = vst [vmem:[%s725] ss:$9 sm:$0xff] %v693
    %s727 = scalar_lea.vmem [#allocation1], 7
    %728 = vst [vmem:[%s727] ss:$9 sm:$0xff] %v695
    %v729 = vld [vmem:[#allocation1] sm:$0xff]
    %v730 = vld [vmem:[#allocation1 + $0x9] sm:$0xff]
    %731 = vst [vmem:[#allocation1] ss:$9 sm:$0xff] %v681
    %732 = vst [vmem:[%s715] ss:$9 sm:$0xff] %v683
    %733 = vst [vmem:[%s717] ss:$9 sm:$0xff] %v685
    %734 = vst [vmem:[%s719] ss:$9 sm:$0xff] %v687
    %735 = vst [vmem:[%s721] ss:$9 sm:$0xff] %v689
    %736 = vst [vmem:[%s723] ss:$9 sm:$0xff] %v691
    %737 = vst [vmem:[%s725] ss:$9 sm:$0xff] %v693
    %738 = vst [vmem:[%s727] ss:$9 sm:$0xff] %v695
    %v739 = vld [vmem:[#allocation1] sm:$0xff]
    %v740 = vld [vmem:[#allocation1 + $0x9] sm:$0xff]
    %v745 = vmul.f32 %v698, %v729
    %v746 = vmul.f32 %v699, %v730
    %v747 = vmul.f32 %v700, %v739
    %v748 = vmul.f32 %v701, %v740
    %v749 = vadd.f32 %v672, %v745
    %v750 = vadd.f32 %v673, %v746
    %v751 = vadd.f32 %v674, %v747
    %v752 = vadd.f32 %v675, %v748
    %s753 = scalar_lea.vmem [#allocation2], 17
    %v754 = vld [vmem:[%s753] ss:$8 sm:$0x3]
    %s755 = scalar_lea.vmem [#allocation2], 97
    %v756 = vld [vmem:[%s755] ss:$8 sm:$0x3]
    %s757 = scalar_lea.vmem [#allocation5], 17
    %v758 = vld [vmem:[%s757] ss:$8 sm:$0x3]
    %s759 = scalar_lea.vmem [#allocation5], 97
    %v760 = vld [vmem:[%s759] ss:$8 sm:$0x3]
    %s761 = scalar_lea.vmem [#allocation5], 177
    %v762 = vld [vmem:[%s761] ss:$8 sm:$0x3]
    %s763 = scalar_lea.vmem [#allocation5], 257
    %v764 = vld [vmem:[%s763] ss:$8 sm:$0x3]
    %s765 = scalar_lea.vmem [#allocation5], 337
    %v766 = vld [vmem:[%s765] ss:$8 sm:$0x3]
    %s767 = scalar_lea.vmem [#allocation5], 417
    %v768 = vld [vmem:[%s767] ss:$8 sm:$0x3]
    %s769 = scalar_lea.vmem [#allocation5], 497
    %v770 = vld [vmem:[%s769] ss:$8 sm:$0x3]
    %s771 = scalar_lea.vmem [#allocation5], 577
    %v772 = vld [vmem:[%s771] ss:$8 sm:$0x3]
    %v775 = vperm.slane %v754, 0
    %v776 = vperm.slane %v754, 1
    %v777 = vperm.slane %v756, 0
    %v778 = vperm.slane %v756, 1
    %791 = vst [vmem:[#allocation1] ss:$9 sm:$0xff] %v758
    %s792 = scalar_lea.vmem [#allocation1], 1
    %793 = vst [vmem:[%s792] ss:$9 sm:$0xff] %v760
    %s794 = scalar_lea.vmem [#allocation1], 2
    %795 = vst [vmem:[%s794] ss:$9 sm:$0xff] %v762
    %s796 = scalar_lea.vmem [#allocation1], 3
    %797 = vst [vmem:[%s796] ss:$9 sm:$0xff] %v764
    %s798 = scalar_lea.vmem [#allocation1], 4
    %799 = vst [vmem:[%s798] ss:$9 sm:$0xff] %v766
    %s800 = scalar_lea.vmem [#allocation1], 5
    %801 = vst [vmem:[%s800] ss:$9 sm:$0xff] %v768
    %s802 = scalar_lea.vmem [#allocation1], 6
    %803 = vst [vmem:[%s802] ss:$9 sm:$0xff] %v770
    %s804 = scalar_lea.vmem [#allocation1], 7
    %805 = vst [vmem:[%s804] ss:$9 sm:$0xff] %v772
    %v806 = vld [vmem:[#allocation1] sm:$0xff]
    %v807 = vld [vmem:[#allocation1 + $0x9] sm:$0xff]
    %808 = vst [vmem:[#allocation1] ss:$9 sm:$0xff] %v758
    %809 = vst [vmem:[%s792] ss:$9 sm:$0xff] %v760
    %810 = vst [vmem:[%s794] ss:$9 sm:$0xff] %v762
    %811 = vst [vmem:[%s796] ss:$9 sm:$0xff] %v764
    %812 = vst [vmem:[%s798] ss:$9 sm:$0xff] %v766
    %813 = vst [vmem:[%s800] ss:$9 sm:$0xff] %v768
    %814 = vst [vmem:[%s802] ss:$9 sm:$0xff] %v770
    %815 = vst [vmem:[%s804] ss:$9 sm:$0xff] %v772
    %v816 = vld [vmem:[#allocation1] sm:$0xff]
    %v817 = vld [vmem:[#allocation1 + $0x9] sm:$0xff]
    %v822 = vmul.f32 %v775, %v806
    %v823 = vmul.f32 %v776, %v807
    %v824 = vmul.f32 %v777, %v816
    %v825 = vmul.f32 %v778, %v817
    %v826 = vadd.f32 %v749, %v822
    %v827 = vadd.f32 %v750, %v823
    %v828 = vadd.f32 %v751, %v824
    %v829 = vadd.f32 %v752, %v825
    %s830 = scalar_lea.vmem [#allocation2], 18
    %v831 = vld [vmem:[%s830] ss:$8 sm:$0x3]
    %s832 = scalar_lea.vmem [#allocation2], 98
    %v833 = vld [vmem:[%s832] ss:$8 sm:$0x3]
    %s834 = scalar_lea.vmem [#allocation5], 18
    %v835 = vld [vmem:[%s834] ss:$8 sm:$0x3]
    %s836 = scalar_lea.vmem [#allocation5], 98
    %v837 = vld [vmem:[%s836] ss:$8 sm:$0x3]
    %s838 = scalar_lea.vmem [#allocation5], 178
    %v839 = vld [vmem:[%s838] ss:$8 sm:$0x3]
    %s840 = scalar_lea.vmem [#allocation5], 258
    %v841 = vld [vmem:[%s840] ss:$8 sm:$0x3]
    %s842 = scalar_lea.vmem [#allocation5], 338
    %v843 = vld [vmem:[%s842] ss:$8 sm:$0x3]
    %s844 = scalar_lea.vmem [#allocation5], 418
    %v845 = vld [vmem:[%s844] ss:$8 sm:$0x3]
    %s846 = scalar_lea.vmem [#allocation5], 498
    %v847 = vld [vmem:[%s846] ss:$8 sm:$0x3]
    %s848 = scalar_lea.vmem [#allocation5], 578
    %v849 = vld [vmem:[%s848] ss:$8 sm:$0x3]
    %v852 = vperm.slane %v831, 0
    %v853 = vperm.slane %v831, 1
    %v854 = vperm.slane %v833, 0
    %v855 = vperm.slane %v833, 1
    %868 = vst [vmem:[#allocation1] ss:$9 sm:$0xff] %v835
    %s869 = scalar_lea.vmem [#allocation1], 1
    %870 = vst [vmem:[%s869] ss:$9 sm:$0xff] %v837
    %s871 = scalar_lea.vmem [#allocation1], 2
    %872 = vst [vmem:[%s871] ss:$9 sm:$0xff] %v839
    %s873 = scalar_lea.vmem [#allocation1], 3
    %874 = vst [vmem:[%s873] ss:$9 sm:$0xff] %v841
    %s875 = scalar_lea.vmem [#allocation1], 4
    %876 = vst [vmem:[%s875] ss:$9 sm:$0xff] %v843
    %s877 = scalar_lea.vmem [#allocation1], 5
    %878 = vst [vmem:[%s877] ss:$9 sm:$0xff] %v845
    %s879 = scalar_lea.vmem [#allocation1], 6
    %880 = vst [vmem:[%s879] ss:$9 sm:$0xff] %v847
    %s881 = scalar_lea.vmem [#allocation1], 7
    %882 = vst [vmem:[%s881] ss:$9 sm:$0xff] %v849
    %v883 = vld [vmem:[#allocation1] sm:$0xff]
    %v884 = vld [vmem:[#allocation1 + $0x9] sm:$0xff]
    %885 = vst [vmem:[#allocation1] ss:$9 sm:$0xff] %v835
    %886 = vst [vmem:[%s869] ss:$9 sm:$0xff] %v837
    %887 = vst [vmem:[%s871] ss:$9 sm:$0xff] %v839
    %888 = vst [vmem:[%s873] ss:$9 sm:$0xff] %v841
    %889 = vst [vmem:[%s875] ss:$9 sm:$0xff] %v843
    %890 = vst [vmem:[%s877] ss:$9 sm:$0xff] %v845
    %891 = vst [vmem:[%s879] ss:$9 sm:$0xff] %v847
    %892 = vst [vmem:[%s881] ss:$9 sm:$0xff] %v849
    %v893 = vld [vmem:[#allocation1] sm:$0xff]
    %v894 = vld [vmem:[#allocation1 + $0x9] sm:$0xff]
    %v899 = vmul.f32 %v852, %v883
    %v900 = vmul.f32 %v853, %v884
    %v901 = vmul.f32 %v854, %v893
    %v902 = vmul.f32 %v855, %v894
    %v903 = vadd.f32 %v826, %v899
    %v904 = vadd.f32 %v827, %v900
    %v905 = vadd.f32 %v828, %v901
    %v906 = vadd.f32 %v829, %v902
    %s907 = scalar_lea.vmem [#allocation2], 19
    %v908 = vld [vmem:[%s907] ss:$8 sm:$0x3]
    %s909 = scalar_lea.vmem [#allocation2], 99
    %v910 = vld [vmem:[%s909] ss:$8 sm:$0x3]
    %s911 = scalar_lea.vmem [#allocation5], 19
    %v912 = vld [vmem:[%s911] ss:$8 sm:$0x3]
    %s913 = scalar_lea.vmem [#allocation5], 99
    %v914 = vld [vmem:[%s913] ss:$8 sm:$0x3]
    %s915 = scalar_lea.vmem [#allocation5], 179
    %v916 = vld [vmem:[%s915] ss:$8 sm:$0x3]
    %s917 = scalar_lea.vmem [#allocation5], 259
    %v918 = vld [vmem:[%s917] ss:$8 sm:$0x3]
    %s919 = scalar_lea.vmem [#allocation5], 339
    %v920 = vld [vmem:[%s919] ss:$8 sm:$0x3]
    %s921 = scalar_lea.vmem [#allocation5], 419
    %v922 = vld [vmem:[%s921] ss:$8 sm:$0x3]
    %s923 = scalar_lea.vmem [#allocation5], 499
    %v924 = vld [vmem:[%s923] ss:$8 sm:$0x3]
    %s925 = scalar_lea.vmem [#allocation5], 579
    %v926 = vld [vmem:[%s925] ss:$8 sm:$0x3]
    %v929 = vperm.slane %v908, 0
    %v930 = vperm.slane %v908, 1
    %v931 = vperm.slane %v910, 0
    %v932 = vperm.slane %v910, 1
    %945 = vst [vmem:[#allocation1] ss:$9 sm:$0xff] %v912
    %s946 = scalar_lea.vmem [#allocation1], 1
    %947 = vst [vmem:[%s946] ss:$9 sm:$0xff] %v914
    %s948 = scalar_lea.vmem [#allocation1], 2
    %949 = vst [vmem:[%s948] ss:$9 sm:$0xff] %v916
    %s950 = scalar_lea.vmem [#allocation1], 3
    %951 = vst [vmem:[%s950] ss:$9 sm:$0xff] %v918
    %s952 = scalar_lea.vmem [#allocation1], 4
    %953 = vst [vmem:[%s952] ss:$9 sm:$0xff] %v920
    %s954 = scalar_lea.vmem [#allocation1], 5
    %955 = vst [vmem:[%s954] ss:$9 sm:$0xff] %v922
    %s956 = scalar_lea.vmem [#allocation1], 6
    %957 = vst [vmem:[%s956] ss:$9 sm:$0xff] %v924
    %s958 = scalar_lea.vmem [#allocation1], 7
    %959 = vst [vmem:[%s958] ss:$9 sm:$0xff] %v926
    %v960 = vld [vmem:[#allocation1] sm:$0xff]
    %v961 = vld [vmem:[#allocation1 + $0x9] sm:$0xff]
    %962 = vst [vmem:[#allocation1] ss:$9 sm:$0xff] %v912
    %963 = vst [vmem:[%s946] ss:$9 sm:$0xff] %v914
    %964 = vst [vmem:[%s948] ss:$9 sm:$0xff] %v916
    %965 = vst [vmem:[%s950] ss:$9 sm:$0xff] %v918
    %966 = vst [vmem:[%s952] ss:$9 sm:$0xff] %v920
    %967 = vst [vmem:[%s954] ss:$9 sm:$0xff] %v922
    %968 = vst [vmem:[%s956] ss:$9 sm:$0xff] %v924
    %969 = vst [vmem:[%s958] ss:$9 sm:$0xff] %v926
    %v970 = vld [vmem:[#allocation1] sm:$0xff]
    %v971 = vld [vmem:[#allocation1 + $0x9] sm:$0xff]
    %v976 = vmul.f32 %v929, %v960
    %v977 = vmul.f32 %v930, %v961
    %v978 = vmul.f32 %v931, %v970
    %v979 = vmul.f32 %v932, %v971
    %v980 = vadd.f32 %v903, %v976
    %v981 = vadd.f32 %v904, %v977
    %v982 = vadd.f32 %v905, %v978
    %v983 = vadd.f32 %v906, %v979
    %s984 = scalar_lea.vmem [#allocation2], 20
    %v985 = vld [vmem:[%s984] ss:$8 sm:$0x3]
    %s986 = scalar_lea.vmem [#allocation2], 100
    %v987 = vld [vmem:[%s986] ss:$8 sm:$0x3]
    %s988 = scalar_lea.vmem [#allocation5], 20
    %v989 = vld [vmem:[%s988] ss:$8 sm:$0x3]
    %s990 = scalar_lea.vmem [#allocation5], 100
    %v991 = vld [vmem:[%s990] ss:$8 sm:$0x3]
    %s992 = scalar_lea.vmem [#allocation5], 180
    %v993 = vld [vmem:[%s992] ss:$8 sm:$0x3]
    %s994 = scalar_lea.vmem [#allocation5], 260
    %v995 = vld [vmem:[%s994] ss:$8 sm:$0x3]
    %s996 = scalar_lea.vmem [#allocation5], 340
    %v997 = vld [vmem:[%s996] ss:$8 sm:$0x3]
    %s998 = scalar_lea.vmem [#allocation5], 420
    %v999 = vld [vmem:[%s998] ss:$8 sm:$0x3]
    %s1000 = scalar_lea.vmem [#allocation5], 500
    %v1001 = vld [vmem:[%s1000] ss:$8 sm:$0x3]
    %s1002 = scalar_lea.vmem [#allocation5], 580
    %v1003 = vld [vmem:[%s1002] ss:$8 sm:$0x3]
    %v1006 = vperm.slane %v985, 0
    %v1007 = vperm.slane %v985, 1
    %v1008 = vperm.slane %v987, 0
    %v1009 = vperm.slane %v987, 1
    %1022 = vst [vmem:[#allocation1] ss:$9 sm:$0xff] %v989
    %s1023 = scalar_lea.vmem [#allocation1], 1
    %1024 = vst [vmem:[%s1023] ss:$9 sm:$0xff] %v991
    %s1025 = scalar_lea.vmem [#allocation1], 2
    %1026 = vst [vmem:[%s1025] ss:$9 sm:$0xff] %v993
    %s1027 = scalar_lea.vmem [#allocation1], 3
    %1028 = vst [vmem:[%s1027] ss:$9 sm:$0xff] %v995
    %s1029 = scalar_lea.vmem [#allocation1], 4
    %1030 = vst [vmem:[%s1029] ss:$9 sm:$0xff] %v997
    %s1031 = scalar_lea.vmem [#allocation1], 5
    %1032 = vst [vmem:[%s1031] ss:$9 sm:$0xff] %v999
    %s1033 = scalar_lea.vmem [#allocation1], 6
    %1034 = vst [vmem:[%s1033] ss:$9 sm:$0xff] %v1001
    %s1035 = scalar_lea.vmem [#allocation1], 7
    %1036 = vst [vmem:[%s1035] ss:$9 sm:$0xff] %v1003
    %v1037 = vld [vmem:[#allocation1] sm:$0xff]
    %v1038 = vld [vmem:[#allocation1 + $0x9] sm:$0xff]
    %1039 = vst [vmem:[#allocation1] ss:$9 sm:$0xff] %v989
    %1040 = vst [vmem:[%s1023] ss:$9 sm:$0xff] %v991
    %1041 = vst [vmem:[%s1025] ss:$9 sm:$0xff] %v993
    %1042 = vst [vmem:[%s1027] ss:$9 sm:$0xff] %v995
    %1043 = vst [vmem:[%s1029] ss:$9 sm:$0xff] %v997
    %1044 = vst [vmem:[%s1031] ss:$9 sm:$0xff] %v999
    %1045 = vst [vmem:[%s1033] ss:$9 sm:$0xff] %v1001
    %1046 = vst [vmem:[%s1035] ss:$9 sm:$0xff] %v1003
    %v1047 = vld [vmem:[#allocation1] sm:$0xff]
    %v1048 = vld [vmem:[#allocation1 + $0x9] sm:$0xff]
    %v1053 = vmul.f32 %v1006, %v1037
    %v1054 = vmul.f32 %v1007, %v1038
    %v1055 = vmul.f32 %v1008, %v1047
    %v1056 = vmul.f32 %v1009, %v1048
    %v1057 = vadd.f32 %v980, %v1053
    %v1058 = vadd.f32 %v981, %v1054
    %v1059 = vadd.f32 %v982, %v1055
    %v1060 = vadd.f32 %v983, %v1056
    %s1061 = scalar_lea.vmem [#allocation2], 21
    %v1062 = vld [vmem:[%s1061] ss:$8 sm:$0x3]
    %s1063 = scalar_lea.vmem [#allocation2], 101
    %v1064 = vld [vmem:[%s1063] ss:$8 sm:$0x3]
    %s1065 = scalar_lea.vmem [#allocation5], 21
    %v1066 = vld [vmem:[%s1065] ss:$8 sm:$0x3]
    %s1067 = scalar_lea.vmem [#allocation5], 101
    %v1068 = vld [vmem:[%s1067] ss:$8 sm:$0x3]
    %s1069 = scalar_lea.vmem [#allocation5], 181
    %v1070 = vld [vmem:[%s1069] ss:$8 sm:$0x3]
    %s1071 = scalar_lea.vmem [#allocation5], 261
    %v1072 = vld [vmem:[%s1071] ss:$8 sm:$0x3]
    %s1073 = scalar_lea.vmem [#allocation5], 341
    %v1074 = vld [vmem:[%s1073] ss:$8 sm:$0x3]
    %s1075 = scalar_lea.vmem [#allocation5], 421
    %v1076 = vld [vmem:[%s1075] ss:$8 sm:$0x3]
    %s1077 = scalar_lea.vmem [#allocation5], 501
    %v1078 = vld [vmem:[%s1077] ss:$8 sm:$0x3]
    %s1079 = scalar_lea.vmem [#allocation5], 581
    %v1080 = vld [vmem:[%s1079] ss:$8 sm:$0x3]
    %v1083 = vperm.slane %v1062, 0
    %v1084 = vperm.slane %v1062, 1
    %v1085 = vperm.slane %v1064, 0
    %v1086 = vperm.slane %v1064, 1
    %1099 = vst [vmem:[#allocation1] ss:$9 sm:$0xff] %v1066
    %s1100 = scalar_lea.vmem [#allocation1], 1
    %1101 = vst [vmem:[%s1100] ss:$9 sm:$0xff] %v1068
    %s1102 = scalar_lea.vmem [#allocation1], 2
    %1103 = vst [vmem:[%s1102] ss:$9 sm:$0xff] %v1070
    %s1104 = scalar_lea.vmem [#allocation1], 3
    %1105 = vst [vmem:[%s1104] ss:$9 sm:$0xff] %v1072
    %s1106 = scalar_lea.vmem [#allocation1], 4
    %1107 = vst [vmem:[%s1106] ss:$9 sm:$0xff] %v1074
    %s1108 = scalar_lea.vmem [#allocation1], 5
    %1109 = vst [vmem:[%s1108] ss:$9 sm:$0xff] %v1076
    %s1110 = scalar_lea.vmem [#allocation1], 6
    %1111 = vst [vmem:[%s1110] ss:$9 sm:$0xff] %v1078
    %s1112 = scalar_lea.vmem [#allocation1], 7
    %1113 = vst [vmem:[%s1112] ss:$9 sm:$0xff] %v1080
    %v1114 = vld [vmem:[#allocation1] sm:$0xff]
    %v1115 = vld [vmem:[#allocation1 + $0x9] sm:$0xff]
    %1116 = vst [vmem:[#allocation1] ss:$9 sm:$0xff] %v1066
    %1117 = vst [vmem:[%s1100] ss:$9 sm:$0xff] %v1068
    %1118 = vst [vmem:[%s1102] ss:$9 sm:$0xff] %v1070
    %1119 = vst [vmem:[%s1104] ss:$9 sm:$0xff] %v1072
    %1120 = vst [vmem:[%s1106] ss:$9 sm:$0xff] %v1074
    %1121 = vst [vmem:[%s1108] ss:$9 sm:$0xff] %v1076
    %1122 = vst [vmem:[%s1110] ss:$9 sm:$0xff] %v1078
    %1123 = vst [vmem:[%s1112] ss:$9 sm:$0xff] %v1080
    %v1124 = vld [vmem:[#allocation1] sm:$0xff]
    %v1125 = vld [vmem:[#allocation1 + $0x9] sm:$0xff]
    %v1130 = vmul.f32 %v1083, %v1114
    %v1131 = vmul.f32 %v1084, %v1115
    %v1132 = vmul.f32 %v1085, %v1124
    %v1133 = vmul.f32 %v1086, %v1125
    %v1134 = vadd.f32 %v1057, %v1130
    %v1135 = vadd.f32 %v1058, %v1131
    %v1136 = vadd.f32 %v1059, %v1132
    %v1137 = vadd.f32 %v1060, %v1133
    %s1138 = scalar_lea.vmem [#allocation2], 22
    %v1139 = vld [vmem:[%s1138] ss:$8 sm:$0x3]
    %s1140 = scalar_lea.vmem [#allocation2], 102
    %v1141 = vld [vmem:[%s1140] ss:$8 sm:$0x3]
    %s1142 = scalar_lea.vmem [#allocation5], 22
    %v1143 = vld [vmem:[%s1142] ss:$8 sm:$0x3]
    %s1144 = scalar_lea.vmem [#allocation5], 102
    %v1145 = vld [vmem:[%s1144] ss:$8 sm:$0x3]
    %s1146 = scalar_lea.vmem [#allocation5], 182
    %v1147 = vld [vmem:[%s1146] ss:$8 sm:$0x3]
    %s1148 = scalar_lea.vmem [#allocation5], 262
    %v1149 = vld [vmem:[%s1148] ss:$8 sm:$0x3]
    %s1150 = scalar_lea.vmem [#allocation5], 342
    %v1151 = vld [vmem:[%s1150] ss:$8 sm:$0x3]
    %s1152 = scalar_lea.vmem [#allocation5], 422
    %v1153 = vld [vmem:[%s1152] ss:$8 sm:$0x3]
    %s1154 = scalar_lea.vmem [#allocation5], 502
    %v1155 = vld [vmem:[%s1154] ss:$8 sm:$0x3]
    %s1156 = scalar_lea.vmem [#allocation5], 582
    %v1157 = vld [vmem:[%s1156] ss:$8 sm:$0x3]
    %v1160 = vperm.slane %v1139, 0
    %v1161 = vperm.slane %v1139, 1
    %v1162 = vperm.slane %v1141, 0
    %v1163 = vperm.slane %v1141, 1
    %1176 = vst [vmem:[#allocation1] ss:$9 sm:$0xff] %v1143
    %s1177 = scalar_lea.vmem [#allocation1], 1
    %1178 = vst [vmem:[%s1177] ss:$9 sm:$0xff] %v1145
    %s1179 = scalar_lea.vmem [#allocation1], 2
    %1180 = vst [vmem:[%s1179] ss:$9 sm:$0xff] %v1147
    %s1181 = scalar_lea.vmem [#allocation1], 3
    %1182 = vst [vmem:[%s1181] ss:$9 sm:$0xff] %v1149
    %s1183 = scalar_lea.vmem [#allocation1], 4
    %1184 = vst [vmem:[%s1183] ss:$9 sm:$0xff] %v1151
    %s1185 = scalar_lea.vmem [#allocation1], 5
    %1186 = vst [vmem:[%s1185] ss:$9 sm:$0xff] %v1153
    %s1187 = scalar_lea.vmem [#allocation1], 6
    %1188 = vst [vmem:[%s1187] ss:$9 sm:$0xff] %v1155
    %s1189 = scalar_lea.vmem [#allocation1], 7
    %1190 = vst [vmem:[%s1189] ss:$9 sm:$0xff] %v1157
    %v1191 = vld [vmem:[#allocation1] sm:$0xff]
    %v1192 = vld [vmem:[#allocation1 + $0x9] sm:$0xff]
    %1193 = vst [vmem:[#allocation1] ss:$9 sm:$0xff] %v1143
    %1194 = vst [vmem:[%s1177] ss:$9 sm:$0xff] %v1145
    %1195 = vst [vmem:[%s1179] ss:$9 sm:$0xff] %v1147
    %1196 = vst [vmem:[%s1181] ss:$9 sm:$0xff] %v1149
    %1197 = vst [vmem:[%s1183] ss:$9 sm:$0xff] %v1151
    %1198 = vst [vmem:[%s1185] ss:$9 sm:$0xff] %v1153
    %1199 = vst [vmem:[%s1187] ss:$9 sm:$0xff] %v1155
    %1200 = vst [vmem:[%s1189] ss:$9 sm:$0xff] %v1157
    %v1201 = vld [vmem:[#allocation1] sm:$0xff]
    %v1202 = vld [vmem:[#allocation1 + $0x9] sm:$0xff]
    %v1207 = vmul.f32 %v1160, %v1191
    %v1208 = vmul.f32 %v1161, %v1192
    %v1209 = vmul.f32 %v1162, %v1201
    %v1210 = vmul.f32 %v1163, %v1202
    %v1211 = vadd.f32 %v1134, %v1207
    %v1212 = vadd.f32 %v1135, %v1208
    %v1213 = vadd.f32 %v1136, %v1209
    %v1214 = vadd.f32 %v1137, %v1210
    %s1215 = scalar_lea.vmem [#allocation2], 23
    %v1216 = vld [vmem:[%s1215] ss:$8 sm:$0x3]
    %s1217 = scalar_lea.vmem [#allocation2], 103
    %v1218 = vld [vmem:[%s1217] ss:$8 sm:$0x3]
    %s1219 = scalar_lea.vmem [#allocation5], 23
    %v1220 = vld [vmem:[%s1219] ss:$8 sm:$0x3]
    %s1221 = scalar_lea.vmem [#allocation5], 103
    %v1222 = vld [vmem:[%s1221] ss:$8 sm:$0x3]
    %s1223 = scalar_lea.vmem [#allocation5], 183
    %v1224 = vld [vmem:[%s1223] ss:$8 sm:$0x3]
    %s1225 = scalar_lea.vmem [#allocation5], 263
    %v1226 = vld [vmem:[%s1225] ss:$8 sm:$0x3]
    %s1227 = scalar_lea.vmem [#allocation5], 343
    %v1228 = vld [vmem:[%s1227] ss:$8 sm:$0x3]
    %s1229 = scalar_lea.vmem [#allocation5], 423
    %v1230 = vld [vmem:[%s1229] ss:$8 sm:$0x3]
    %s1231 = scalar_lea.vmem [#allocation5], 503
    %v1232 = vld [vmem:[%s1231] ss:$8 sm:$0x3]
    %s1233 = scalar_lea.vmem [#allocation5], 583
    %v1234 = vld [vmem:[%s1233] ss:$8 sm:$0x3]
    %v1237 = vperm.slane %v1216, 0
    %v1238 = vperm.slane %v1216, 1
    %v1239 = vperm.slane %v1218, 0
    %v1240 = vperm.slane %v1218, 1
    %1253 = vst [vmem:[#allocation1] ss:$9 sm:$0xff] %v1220
    %s1254 = scalar_lea.vmem [#allocation1], 1
    %1255 = vst [vmem:[%s1254] ss:$9 sm:$0xff] %v1222
    %s1256 = scalar_lea.vmem [#allocation1], 2
    %1257 = vst [vmem:[%s1256] ss:$9 sm:$0xff] %v1224
    %s1258 = scalar_lea.vmem [#allocation1], 3
    %1259 = vst [vmem:[%s1258] ss:$9 sm:$0xff] %v1226
    %s1260 = scalar_lea.vmem [#allocation1], 4
    %1261 = vst [vmem:[%s1260] ss:$9 sm:$0xff] %v1228
    %s1262 = scalar_lea.vmem [#allocation1], 5
    %1263 = vst [vmem:[%s1262] ss:$9 sm:$0xff] %v1230
    %s1264 = scalar_lea.vmem [#allocation1], 6
    %1265 = vst [vmem:[%s1264] ss:$9 sm:$0xff] %v1232
    %s1266 = scalar_lea.vmem [#allocation1], 7
    %1267 = vst [vmem:[%s1266] ss:$9 sm:$0xff] %v1234
    %v1268 = vld [vmem:[#allocation1] sm:$0xff]
    %v1269 = vld [vmem:[#allocation1 + $0x9] sm:$0xff]
    %1270 = vst [vmem:[#allocation1] ss:$9 sm:$0xff] %v1220
    %1271 = vst [vmem:[%s1254] ss:$9 sm:$0xff] %v1222
    %1272 = vst [vmem:[%s1256] ss:$9 sm:$0xff] %v1224
    %1273 = vst [vmem:[%s1258] ss:$9 sm:$0xff] %v1226
    %1274 = vst [vmem:[%s1260] ss:$9 sm:$0xff] %v1228
    %1275 = vst [vmem:[%s1262] ss:$9 sm:$0xff] %v1230
    %1276 = vst [vmem:[%s1264] ss:$9 sm:$0xff] %v1232
    %1277 = vst [vmem:[%s1266] ss:$9 sm:$0xff] %v1234
    %v1278 = vld [vmem:[#allocation1] sm:$0xff]
    %v1279 = vld [vmem:[#allocation1 + $0x9] sm:$0xff]
    %v1284 = vmul.f32 %v1237, %v1268
    %v1285 = vmul.f32 %v1238, %v1269
    %v1286 = vmul.f32 %v1239, %v1278
    %v1287 = vmul.f32 %v1240, %v1279
    %v1288 = vadd.f32 %v1211, %v1284
    %v1289 = vadd.f32 %v1212, %v1285
    %v1290 = vadd.f32 %v1213, %v1286
    %v1291 = vadd.f32 %v1214, %v1287
    %s1292 = scalar_lea.vmem [#allocation2], 32
    %v1293 = vld [vmem:[%s1292] ss:$8 sm:$0x3]
    %s1294 = scalar_lea.vmem [#allocation2], 112
    %v1295 = vld [vmem:[%s1294] ss:$8 sm:$0x3]
    %s1296 = scalar_lea.vmem [#allocation5], 32
    %v1297 = vld [vmem:[%s1296] ss:$8 sm:$0x3]
    %s1298 = scalar_lea.vmem [#allocation5], 112
    %v1299 = vld [vmem:[%s1298] ss:$8 sm:$0x3]
    %s1300 = scalar_lea.vmem [#allocation5], 192
    %v1301 = vld [vmem:[%s1300] ss:$8 sm:$0x3]
    %s1302 = scalar_lea.vmem [#allocation5], 272
    %v1303 = vld [vmem:[%s1302] ss:$8 sm:$0x3]
    %s1304 = scalar_lea.vmem [#allocation5], 352
    %v1305 = vld [vmem:[%s1304] ss:$8 sm:$0x3]
    %s1306 = scalar_lea.vmem [#allocation5], 432
    %v1307 = vld [vmem:[%s1306] ss:$8 sm:$0x3]
    %s1308 = scalar_lea.vmem [#allocation5], 512
    %v1309 = vld [vmem:[%s1308] ss:$8 sm:$0x3]
    %s1310 = scalar_lea.vmem [#allocation5], 592
    %v1311 = vld [vmem:[%s1310] ss:$8 sm:$0x3]
    %v1314 = vperm.slane %v1293, 0
    %v1315 = vperm.slane %v1293, 1
    %v1316 = vperm.slane %v1295, 0
    %v1317 = vperm.slane %v1295, 1
    %1330 = vst [vmem:[#allocation1] ss:$9 sm:$0xff] %v1297
    %s1331 = scalar_lea.vmem [#allocation1], 1
    %1332 = vst [vmem:[%s1331] ss:$9 sm:$0xff] %v1299
    %s1333 = scalar_lea.vmem [#allocation1], 2
    %1334 = vst [vmem:[%s1333] ss:$9 sm:$0xff] %v1301
    %s1335 = scalar_lea.vmem [#allocation1], 3
    %1336 = vst [vmem:[%s1335] ss:$9 sm:$0xff] %v1303
    %s1337 = scalar_lea.vmem [#allocation1], 4
    %1338 = vst [vmem:[%s1337] ss:$9 sm:$0xff] %v1305
    %s1339 = scalar_lea.vmem [#allocation1], 5
    %1340 = vst [vmem:[%s1339] ss:$9 sm:$0xff] %v1307
    %s1341 = scalar_lea.vmem [#allocation1], 6
    %1342 = vst [vmem:[%s1341] ss:$9 sm:$0xff] %v1309
    %s1343 = scalar_lea.vmem [#allocation1], 7
    %1344 = vst [vmem:[%s1343] ss:$9 sm:$0xff] %v1311
    %v1345 = vld [vmem:[#allocation1] sm:$0xff]
    %v1346 = vld [vmem:[#allocation1 + $0x9] sm:$0xff]
    %1347 = vst [vmem:[#allocation1] ss:$9 sm:$0xff] %v1297
    %1348 = vst [vmem:[%s1331] ss:$9 sm:$0xff] %v1299
    %1349 = vst [vmem:[%s1333] ss:$9 sm:$0xff] %v1301
    %1350 = vst [vmem:[%s1335] ss:$9 sm:$0xff] %v1303
    %1351 = vst [vmem:[%s1337] ss:$9 sm:$0xff] %v1305
    %1352 = vst [vmem:[%s1339] ss:$9 sm:$0xff] %v1307
    %1353 = vst [vmem:[%s1341] ss:$9 sm:$0xff] %v1309
    %1354 = vst [vmem:[%s1343] ss:$9 sm:$0xff] %v1311
    %v1355 = vld [vmem:[#allocation1] sm:$0xff]
    %v1356 = vld [vmem:[#allocation1 + $0x9] sm:$0xff]
    %v1361 = vmul.f32 %v1314, %v1345
    %v1362 = vmul.f32 %v1315, %v1346
    %v1363 = vmul.f32 %v1316, %v1355
    %v1364 = vmul.f32 %v1317, %v1356
    %v1365 = vadd.f32 %v1288, %v1361
    %v1366 = vadd.f32 %v1289, %v1362
    %v1367 = vadd.f32 %v1290, %v1363
    %v1368 = vadd.f32 %v1291, %v1364
    %s1369 = scalar_lea.vmem [#allocation2], 33
    %v1370 = vld [vmem:[%s1369] ss:$8 sm:$0x3]
    %s1371 = scalar_lea.vmem [#allocation2], 113
    %v1372 = vld [vmem:[%s1371] ss:$8 sm:$0x3]
    %s1373 = scalar_lea.vmem [#allocation5], 33
    %v1374 = vld [vmem:[%s1373] ss:$8 sm:$0x3]
    %s1375 = scalar_lea.vmem [#allocation5], 113
    %v1376 = vld [vmem:[%s1375] ss:$8 sm:$0x3]
    %s1377 = scalar_lea.vmem [#allocation5], 193
    %v1378 = vld [vmem:[%s1377] ss:$8 sm:$0x3]
    %s1379 = scalar_lea.vmem [#allocation5], 273
    %v1380 = vld [vmem:[%s1379] ss:$8 sm:$0x3]
    %s1381 = scalar_lea.vmem [#allocation5], 353
    %v1382 = vld [vmem:[%s1381] ss:$8 sm:$0x3]
    %s1383 = scalar_lea.vmem [#allocation5], 433
    %v1384 = vld [vmem:[%s1383] ss:$8 sm:$0x3]
    %s1385 = scalar_lea.vmem [#allocation5], 513
    %v1386 = vld [vmem:[%s1385] ss:$8 sm:$0x3]
    %s1387 = scalar_lea.vmem [#allocation5], 593
    %v1388 = vld [vmem:[%s1387] ss:$8 sm:$0x3]
    %v1391 = vperm.slane %v1370, 0
    %v1392 = vperm.slane %v1370, 1
    %v1393 = vperm.slane %v1372, 0
    %v1394 = vperm.slane %v1372, 1
    %1407 = vst [vmem:[#allocation1] ss:$9 sm:$0xff] %v1374
    %s1408 = scalar_lea.vmem [#allocation1], 1
    %1409 = vst [vmem:[%s1408] ss:$9 sm:$0xff] %v1376
    %s1410 = scalar_lea.vmem [#allocation1], 2
    %1411 = vst [vmem:[%s1410] ss:$9 sm:$0xff] %v1378
    %s1412 = scalar_lea.vmem [#allocation1], 3
    %1413 = vst [vmem:[%s1412] ss:$9 sm:$0xff] %v1380
    %s1414 = scalar_lea.vmem [#allocation1], 4
    %1415 = vst [vmem:[%s1414] ss:$9 sm:$0xff] %v1382
    %s1416 = scalar_lea.vmem [#allocation1], 5
    %1417 = vst [vmem:[%s1416] ss:$9 sm:$0xff] %v1384
    %s1418 = scalar_lea.vmem [#allocation1], 6
    %1419 = vst [vmem:[%s1418] ss:$9 sm:$0xff] %v1386
    %s1420 = scalar_lea.vmem [#allocation1], 7
    %1421 = vst [vmem:[%s1420] ss:$9 sm:$0xff] %v1388
    %v1422 = vld [vmem:[#allocation1] sm:$0xff]
    %v1423 = vld [vmem:[#allocation1 + $0x9] sm:$0xff]
    %1424 = vst [vmem:[#allocation1] ss:$9 sm:$0xff] %v1374
    %1425 = vst [vmem:[%s1408] ss:$9 sm:$0xff] %v1376
    %1426 = vst [vmem:[%s1410] ss:$9 sm:$0xff] %v1378
    %1427 = vst [vmem:[%s1412] ss:$9 sm:$0xff] %v1380
    %1428 = vst [vmem:[%s1414] ss:$9 sm:$0xff] %v1382
    %1429 = vst [vmem:[%s1416] ss:$9 sm:$0xff] %v1384
    %1430 = vst [vmem:[%s1418] ss:$9 sm:$0xff] %v1386
    %1431 = vst [vmem:[%s1420] ss:$9 sm:$0xff] %v1388
    %v1432 = vld [vmem:[#allocation1] sm:$0xff]
    %v1433 = vld [vmem:[#allocation1 + $0x9] sm:$0xff]
    %v1438 = vmul.f32 %v1391, %v1422
    %v1439 = vmul.f32 %v1392, %v1423
    %v1440 = vmul.f32 %v1393, %v1432
    %v1441 = vmul.f32 %v1394, %v1433
    %v1442 = vadd.f32 %v1365, %v1438
    %v1443 = vadd.f32 %v1366, %v1439
    %v1444 = vadd.f32 %v1367, %v1440
    %v1445 = vadd.f32 %v1368, %v1441
    %s1446 = scalar_lea.vmem [#allocation2], 34
    %v1447 = vld [vmem:[%s1446] ss:$8 sm:$0x3]
    %s1448 = scalar_lea.vmem [#allocation2], 114
    %v1449 = vld [vmem:[%s1448] ss:$8 sm:$0x3]
    %s1450 = scalar_lea.vmem [#allocation5], 34
    %v1451 = vld [vmem:[%s1450] ss:$8 sm:$0x3]
    %s1452 = scalar_lea.vmem [#allocation5], 114
    %v1453 = vld [vmem:[%s1452] ss:$8 sm:$0x3]
    %s1454 = scalar_lea.vmem [#allocation5], 194
    %v1455 = vld [vmem:[%s1454] ss:$8 sm:$0x3]
    %s1456 = scalar_lea.vmem [#allocation5], 274
    %v1457 = vld [vmem:[%s1456] ss:$8 sm:$0x3]
    %s1458 = scalar_lea.vmem [#allocation5], 354
    %v1459 = vld [vmem:[%s1458] ss:$8 sm:$0x3]
    %s1460 = scalar_lea.vmem [#allocation5], 434
    %v1461 = vld [vmem:[%s1460] ss:$8 sm:$0x3]
    %s1462 = scalar_lea.vmem [#allocation5], 514
    %v1463 = vld [vmem:[%s1462] ss:$8 sm:$0x3]
    %s1464 = scalar_lea.vmem [#allocation5], 594
    %v1465 = vld [vmem:[%s1464] ss:$8 sm:$0x3]
    %v1468 = vperm.slane %v1447, 0
    %v1469 = vperm.slane %v1447, 1
    %v1470 = vperm.slane %v1449, 0
    %v1471 = vperm.slane %v1449, 1
    %1484 = vst [vmem:[#allocation1] ss:$9 sm:$0xff] %v1451
    %s1485 = scalar_lea.vmem [#allocation1], 1
    %1486 = vst [vmem:[%s1485] ss:$9 sm:$0xff] %v1453
    %s1487 = scalar_lea.vmem [#allocation1], 2
    %1488 = vst [vmem:[%s1487] ss:$9 sm:$0xff] %v1455
    %s1489 = scalar_lea.vmem [#allocation1], 3
    %1490 = vst [vmem:[%s1489] ss:$9 sm:$0xff] %v1457
    %s1491 = scalar_lea.vmem [#allocation1], 4
    %1492 = vst [vmem:[%s1491] ss:$9 sm:$0xff] %v1459
    %s1493 = scalar_lea.vmem [#allocation1], 5
    %1494 = vst [vmem:[%s1493] ss:$9 sm:$0xff] %v1461
    %s1495 = scalar_lea.vmem [#allocation1], 6
    %1496 = vst [vmem:[%s1495] ss:$9 sm:$0xff] %v1463
    %s1497 = scalar_lea.vmem [#allocation1], 7
    %1498 = vst [vmem:[%s1497] ss:$9 sm:$0xff] %v1465
    %v1499 = vld [vmem:[#allocation1] sm:$0xff]
    %v1500 = vld [vmem:[#allocation1 + $0x9] sm:$0xff]
    %1501 = vst [vmem:[#allocation1] ss:$9 sm:$0xff] %v1451
    %1502 = vst [vmem:[%s1485] ss:$9 sm:$0xff] %v1453
    %1503 = vst [vmem:[%s1487] ss:$9 sm:$0xff] %v1455
    %1504 = vst [vmem:[%s1489] ss:$9 sm:$0xff] %v1457
    %1505 = vst [vmem:[%s1491] ss:$9 sm:$0xff] %v1459
    %1506 = vst [vmem:[%s1493] ss:$9 sm:$0xff] %v1461
    %1507 = vst [vmem:[%s1495] ss:$9 sm:$0xff] %v1463
    %1508 = vst [vmem:[%s1497] ss:$9 sm:$0xff] %v1465
    %v1509 = vld [vmem:[#allocation1] sm:$0xff]
    %v1510 = vld [vmem:[#allocation1 + $0x9] sm:$0xff]
    %v1515 = vmul.f32 %v1468, %v1499
    %v1516 = vmul.f32 %v1469, %v1500
    %v1517 = vmul.f32 %v1470, %v1509
    %v1518 = vmul.f32 %v1471, %v1510
    %v1519 = vadd.f32 %v1442, %v1515
    %v1520 = vadd.f32 %v1443, %v1516
    %v1521 = vadd.f32 %v1444, %v1517
    %v1522 = vadd.f32 %v1445, %v1518
    %s1523 = scalar_lea.vmem [#allocation2], 35
    %v1524 = vld [vmem:[%s1523] ss:$8 sm:$0x3]
    %s1525 = scalar_lea.vmem [#allocation2], 115
    %v1526 = vld [vmem:[%s1525] ss:$8 sm:$0x3]
    %s1527 = scalar_lea.vmem [#allocation5], 35
    %v1528 = vld [vmem:[%s1527] ss:$8 sm:$0x3]
    %s1529 = scalar_lea.vmem [#allocation5], 115
    %v1530 = vld [vmem:[%s1529] ss:$8 sm:$0x3]
    %s1531 = scalar_lea.vmem [#allocation5], 195
    %v1532 = vld [vmem:[%s1531] ss:$8 sm:$0x3]
    %s1533 = scalar_lea.vmem [#allocation5], 275
    %v1534 = vld [vmem:[%s1533] ss:$8 sm:$0x3]
    %s1535 = scalar_lea.vmem [#allocation5], 355
    %v1536 = vld [vmem:[%s1535] ss:$8 sm:$0x3]
    %s1537 = scalar_lea.vmem [#allocation5], 435
    %v1538 = vld [vmem:[%s1537] ss:$8 sm:$0x3]
    %s1539 = scalar_lea.vmem [#allocation5], 515
    %v1540 = vld [vmem:[%s1539] ss:$8 sm:$0x3]
    %s1541 = scalar_lea.vmem [#allocation5], 595
    %v1542 = vld [vmem:[%s1541] ss:$8 sm:$0x3]
    %v1545 = vperm.slane %v1524, 0
    %v1546 = vperm.slane %v1524, 1
    %v1547 = vperm.slane %v1526, 0
    %v1548 = vperm.slane %v1526, 1
    %1561 = vst [vmem:[#allocation1] ss:$9 sm:$0xff] %v1528
    %s1562 = scalar_lea.vmem [#allocation1], 1
    %1563 = vst [vmem:[%s1562] ss:$9 sm:$0xff] %v1530
    %s1564 = scalar_lea.vmem [#allocation1], 2
    %1565 = vst [vmem:[%s1564] ss:$9 sm:$0xff] %v1532
    %s1566 = scalar_lea.vmem [#allocation1], 3
    %1567 = vst [vmem:[%s1566] ss:$9 sm:$0xff] %v1534
    %s1568 = scalar_lea.vmem [#allocation1], 4
    %1569 = vst [vmem:[%s1568] ss:$9 sm:$0xff] %v1536
    %s1570 = scalar_lea.vmem [#allocation1], 5
    %1571 = vst [vmem:[%s1570] ss:$9 sm:$0xff] %v1538
    %s1572 = scalar_lea.vmem [#allocation1], 6
    %1573 = vst [vmem:[%s1572] ss:$9 sm:$0xff] %v1540
    %s1574 = scalar_lea.vmem [#allocation1], 7
    %1575 = vst [vmem:[%s1574] ss:$9 sm:$0xff] %v1542
    %v1576 = vld [vmem:[#allocation1] sm:$0xff]
    %v1577 = vld [vmem:[#allocation1 + $0x9] sm:$0xff]
    %1578 = vst [vmem:[#allocation1] ss:$9 sm:$0xff] %v1528
    %1579 = vst [vmem:[%s1562] ss:$9 sm:$0xff] %v1530
    %1580 = vst [vmem:[%s1564] ss:$9 sm:$0xff] %v1532
    %1581 = vst [vmem:[%s1566] ss:$9 sm:$0xff] %v1534
    %1582 = vst [vmem:[%s1568] ss:$9 sm:$0xff] %v1536
    %1583 = vst [vmem:[%s1570] ss:$9 sm:$0xff] %v1538
    %1584 = vst [vmem:[%s1572] ss:$9 sm:$0xff] %v1540
    %1585 = vst [vmem:[%s1574] ss:$9 sm:$0xff] %v1542
    %v1586 = vld [vmem:[#allocation1] sm:$0xff]
    %v1587 = vld [vmem:[#allocation1 + $0x9] sm:$0xff]
    %v1592 = vmul.f32 %v1545, %v1576
    %v1593 = vmul.f32 %v1546, %v1577
    %v1594 = vmul.f32 %v1547, %v1586
    %v1595 = vmul.f32 %v1548, %v1587
    %v1596 = vadd.f32 %v1519, %v1592
    %v1597 = vadd.f32 %v1520, %v1593
    %v1598 = vadd.f32 %v1521, %v1594
    %v1599 = vadd.f32 %v1522, %v1595
    %s1600 = scalar_lea.vmem [#allocation2], 36
    %v1601 = vld [vmem:[%s1600] ss:$8 sm:$0x3]
    %s1602 = scalar_lea.vmem [#allocation2], 116
    %v1603 = vld [vmem:[%s1602] ss:$8 sm:$0x3]
    %s1604 = scalar_lea.vmem [#allocation5], 36
    %v1605 = vld [vmem:[%s1604] ss:$8 sm:$0x3]
    %s1606 = scalar_lea.vmem [#allocation5], 116
    %v1607 = vld [vmem:[%s1606] ss:$8 sm:$0x3]
    %s1608 = scalar_lea.vmem [#allocation5], 196
    %v1609 = vld [vmem:[%s1608] ss:$8 sm:$0x3]
    %s1610 = scalar_lea.vmem [#allocation5], 276
    %v1611 = vld [vmem:[%s1610] ss:$8 sm:$0x3]
    %s1612 = scalar_lea.vmem [#allocation5], 356
    %v1613 = vld [vmem:[%s1612] ss:$8 sm:$0x3]
    %s1614 = scalar_lea.vmem [#allocation5], 436
    %v1615 = vld [vmem:[%s1614] ss:$8 sm:$0x3]
    %s1616 = scalar_lea.vmem [#allocation5], 516
    %v1617 = vld [vmem:[%s1616] ss:$8 sm:$0x3]
    %s1618 = scalar_lea.vmem [#allocation5], 596
    %v1619 = vld [vmem:[%s1618] ss:$8 sm:$0x3]
    %v1622 = vperm.slane %v1601, 0
    %v1623 = vperm.slane %v1601, 1
    %v1624 = vperm.slane %v1603, 0
    %v1625 = vperm.slane %v1603, 1
    %1638 = vst [vmem:[#allocation1] ss:$9 sm:$0xff] %v1605
    %s1639 = scalar_lea.vmem [#allocation1], 1
    %1640 = vst [vmem:[%s1639] ss:$9 sm:$0xff] %v1607
    %s1641 = scalar_lea.vmem [#allocation1], 2
    %1642 = vst [vmem:[%s1641] ss:$9 sm:$0xff] %v1609
    %s1643 = scalar_lea.vmem [#allocation1], 3
    %1644 = vst [vmem:[%s1643] ss:$9 sm:$0xff] %v1611
    %s1645 = scalar_lea.vmem [#allocation1], 4
    %1646 = vst [vmem:[%s1645] ss:$9 sm:$0xff] %v1613
    %s1647 = scalar_lea.vmem [#allocation1], 5
    %1648 = vst [vmem:[%s1647] ss:$9 sm:$0xff] %v1615
    %s1649 = scalar_lea.vmem [#allocation1], 6
    %1650 = vst [vmem:[%s1649] ss:$9 sm:$0xff] %v1617
    %s1651 = scalar_lea.vmem [#allocation1], 7
    %1652 = vst [vmem:[%s1651] ss:$9 sm:$0xff] %v1619
    %v1653 = vld [vmem:[#allocation1] sm:$0xff]
    %v1654 = vld [vmem:[#allocation1 + $0x9] sm:$0xff]
    %1655 = vst [vmem:[#allocation1] ss:$9 sm:$0xff] %v1605
    %1656 = vst [vmem:[%s1639] ss:$9 sm:$0xff] %v1607
    %1657 = vst [vmem:[%s1641] ss:$9 sm:$0xff] %v1609
    %1658 = vst [vmem:[%s1643] ss:$9 sm:$0xff] %v1611
    %1659 = vst [vmem:[%s1645] ss:$9 sm:$0xff] %v1613
    %1660 = vst [vmem:[%s1647] ss:$9 sm:$0xff] %v1615
    %1661 = vst [vmem:[%s1649] ss:$9 sm:$0xff] %v1617
    %1662 = vst [vmem:[%s1651] ss:$9 sm:$0xff] %v1619
    %v1663 = vld [vmem:[#allocation1] sm:$0xff]
    %v1664 = vld [vmem:[#allocation1 + $0x9] sm:$0xff]
    %v1669 = vmul.f32 %v1622, %v1653
    %v1670 = vmul.f32 %v1623, %v1654
    %v1671 = vmul.f32 %v1624, %v1663
    %v1672 = vmul.f32 %v1625, %v1664
    %v1673 = vadd.f32 %v1596, %v1669
    %v1674 = vadd.f32 %v1597, %v1670
    %v1675 = vadd.f32 %v1598, %v1671
    %v1676 = vadd.f32 %v1599, %v1672
    %s1677 = scalar_lea.vmem [#allocation2], 37
    %v1678 = vld [vmem:[%s1677] ss:$8 sm:$0x3]
    %s1679 = scalar_lea.vmem [#allocation2], 117
    %v1680 = vld [vmem:[%s1679] ss:$8 sm:$0x3]
    %s1681 = scalar_lea.vmem [#allocation5], 37
    %v1682 = vld [vmem:[%s1681] ss:$8 sm:$0x3]
    %s1683 = scalar_lea.vmem [#allocation5], 117
    %v1684 = vld [vmem:[%s1683] ss:$8 sm:$0x3]
    %s1685 = scalar_lea.vmem [#allocation5], 197
    %v1686 = vld [vmem:[%s1685] ss:$8 sm:$0x3]
    %s1687 = scalar_lea.vmem [#allocation5], 277
    %v1688 = vld [vmem:[%s1687] ss:$8 sm:$0x3]
    %s1689 = scalar_lea.vmem [#allocation5], 357
    %v1690 = vld [vmem:[%s1689] ss:$8 sm:$0x3]
    %s1691 = scalar_lea.vmem [#allocation5], 437
    %v1692 = vld [vmem:[%s1691] ss:$8 sm:$0x3]
    %s1693 = scalar_lea.vmem [#allocation5], 517
    %v1694 = vld [vmem:[%s1693] ss:$8 sm:$0x3]
    %s1695 = scalar_lea.vmem [#allocation5], 597
    %v1696 = vld [vmem:[%s1695] ss:$8 sm:$0x3]
    %v1699 = vperm.slane %v1678, 0
    %v1700 = vperm.slane %v1678, 1
    %v1701 = vperm.slane %v1680, 0
    %v1702 = vperm.slane %v1680, 1
    %1715 = vst [vmem:[#allocation1] ss:$9 sm:$0xff] %v1682
    %s1716 = scalar_lea.vmem [#allocation1], 1
    %1717 = vst [vmem:[%s1716] ss:$9 sm:$0xff] %v1684
    %s1718 = scalar_lea.vmem [#allocation1], 2
    %1719 = vst [vmem:[%s1718] ss:$9 sm:$0xff] %v1686
    %s1720 = scalar_lea.vmem [#allocation1], 3
    %1721 = vst [vmem:[%s1720] ss:$9 sm:$0xff] %v1688
    %s1722 = scalar_lea.vmem [#allocation1], 4
    %1723 = vst [vmem:[%s1722] ss:$9 sm:$0xff] %v1690
    %s1724 = scalar_lea.vmem [#allocation1], 5
    %1725 = vst [vmem:[%s1724] ss:$9 sm:$0xff] %v1692
    %s1726 = scalar_lea.vmem [#allocation1], 6
    %1727 = vst [vmem:[%s1726] ss:$9 sm:$0xff] %v1694
    %s1728 = scalar_lea.vmem [#allocation1], 7
    %1729 = vst [vmem:[%s1728] ss:$9 sm:$0xff] %v1696
    %v1730 = vld [vmem:[#allocation1] sm:$0xff]
    %v1731 = vld [vmem:[#allocation1 + $0x9] sm:$0xff]
    %1732 = vst [vmem:[#allocation1] ss:$9 sm:$0xff] %v1682
    %1733 = vst [vmem:[%s1716] ss:$9 sm:$0xff] %v1684
    %1734 = vst [vmem:[%s1718] ss:$9 sm:$0xff] %v1686
    %1735 = vst [vmem:[%s1720] ss:$9 sm:$0xff] %v1688
    %1736 = vst [vmem:[%s1722] ss:$9 sm:$0xff] %v1690
    %1737 = vst [vmem:[%s1724] ss:$9 sm:$0xff] %v1692
    %1738 = vst [vmem:[%s1726] ss:$9 sm:$0xff] %v1694
    %1739 = vst [vmem:[%s1728] ss:$9 sm:$0xff] %v1696
    %v1740 = vld [vmem:[#allocation1] sm:$0xff]
    %v1741 = vld [vmem:[#allocation1 + $0x9] sm:$0xff]
    %v1746 = vmul.f32 %v1699, %v1730
    %v1747 = vmul.f32 %v1700, %v1731
    %v1748 = vmul.f32 %v1701, %v1740
    %v1749 = vmul.f32 %v1702, %v1741
    %v1750 = vadd.f32 %v1673, %v1746
    %v1751 = vadd.f32 %v1674, %v1747
    %v1752 = vadd.f32 %v1675, %v1748
    %v1753 = vadd.f32 %v1676, %v1749
    %s1754 = scalar_lea.vmem [#allocation2], 38
    %v1755 = vld [vmem:[%s1754] ss:$8 sm:$0x3]
    %s1756 = scalar_lea.vmem [#allocation2], 118
    %v1757 = vld [vmem:[%s1756] ss:$8 sm:$0x3]
    %s1758 = scalar_lea.vmem [#allocation5], 38
    %v1759 = vld [vmem:[%s1758] ss:$8 sm:$0x3]
    %s1760 = scalar_lea.vmem [#allocation5], 118
    %v1761 = vld [vmem:[%s1760] ss:$8 sm:$0x3]
    %s1762 = scalar_lea.vmem [#allocation5], 198
    %v1763 = vld [vmem:[%s1762] ss:$8 sm:$0x3]
    %s1764 = scalar_lea.vmem [#allocation5], 278
    %v1765 = vld [vmem:[%s1764] ss:$8 sm:$0x3]
    %s1766 = scalar_lea.vmem [#allocation5], 358
    %v1767 = vld [vmem:[%s1766] ss:$8 sm:$0x3]
    %s1768 = scalar_lea.vmem [#allocation5], 438
    %v1769 = vld [vmem:[%s1768] ss:$8 sm:$0x3]
    %s1770 = scalar_lea.vmem [#allocation5], 518
    %v1771 = vld [vmem:[%s1770] ss:$8 sm:$0x3]
    %s1772 = scalar_lea.vmem [#allocation5], 598
    %v1773 = vld [vmem:[%s1772] ss:$8 sm:$0x3]
    %v1776 = vperm.slane %v1755, 0
    %v1777 = vperm.slane %v1755, 1
    %v1778 = vperm.slane %v1757, 0
    %v1779 = vperm.slane %v1757, 1
    %1792 = vst [vmem:[#allocation1] ss:$9 sm:$0xff] %v1759
    %s1793 = scalar_lea.vmem [#allocation1], 1
    %1794 = vst [vmem:[%s1793] ss:$9 sm:$0xff] %v1761
    %s1795 = scalar_lea.vmem [#allocation1], 2
    %1796 = vst [vmem:[%s1795] ss:$9 sm:$0xff] %v1763
    %s1797 = scalar_lea.vmem [#allocation1], 3
    %1798 = vst [vmem:[%s1797] ss:$9 sm:$0xff] %v1765
    %s1799 = scalar_lea.vmem [#allocation1], 4
    %1800 = vst [vmem:[%s1799] ss:$9 sm:$0xff] %v1767
    %s1801 = scalar_lea.vmem [#allocation1], 5
    %1802 = vst [vmem:[%s1801] ss:$9 sm:$0xff] %v1769
    %s1803 = scalar_lea.vmem [#allocation1], 6
    %1804 = vst [vmem:[%s1803] ss:$9 sm:$0xff] %v1771
    %s1805 = scalar_lea.vmem [#allocation1], 7
    %1806 = vst [vmem:[%s1805] ss:$9 sm:$0xff] %v1773
    %v1807 = vld [vmem:[#allocation1] sm:$0xff]
    %v1808 = vld [vmem:[#allocation1 + $0x9] sm:$0xff]
    %1809 = vst [vmem:[#allocation1] ss:$9 sm:$0xff] %v1759
    %1810 = vst [vmem:[%s1793] ss:$9 sm:$0xff] %v1761
    %1811 = vst [vmem:[%s1795] ss:$9 sm:$0xff] %v1763
    %1812 = vst [vmem:[%s1797] ss:$9 sm:$0xff] %v1765
    %1813 = vst [vmem:[%s1799] ss:$9 sm:$0xff] %v1767
    %1814 = vst [vmem:[%s1801] ss:$9 sm:$0xff] %v1769
    %1815 = vst [vmem:[%s1803] ss:$9 sm:$0xff] %v1771
    %1816 = vst [vmem:[%s1805] ss:$9 sm:$0xff] %v1773
    %v1817 = vld [vmem:[#allocation1] sm:$0xff]
    %v1818 = vld [vmem:[#allocation1 + $0x9] sm:$0xff]
    %v1823 = vmul.f32 %v1776, %v1807
    %v1824 = vmul.f32 %v1777, %v1808
    %v1825 = vmul.f32 %v1778, %v1817
    %v1826 = vmul.f32 %v1779, %v1818
    %v1827 = vadd.f32 %v1750, %v1823
    %v1828 = vadd.f32 %v1751, %v1824
    %v1829 = vadd.f32 %v1752, %v1825
    %v1830 = vadd.f32 %v1753, %v1826
    %s1831 = scalar_lea.vmem [#allocation2], 39
    %v1832 = vld [vmem:[%s1831] ss:$8 sm:$0x3]
    %s1833 = scalar_lea.vmem [#allocation2], 119
    %v1834 = vld [vmem:[%s1833] ss:$8 sm:$0x3]
    %s1835 = scalar_lea.vmem [#allocation5], 39
    %v1836 = vld [vmem:[%s1835] ss:$8 sm:$0x3]
    %s1837 = scalar_lea.vmem [#allocation5], 119
    %v1838 = vld [vmem:[%s1837] ss:$8 sm:$0x3]
    %s1839 = scalar_lea.vmem [#allocation5], 199
    %v1840 = vld [vmem:[%s1839] ss:$8 sm:$0x3]
    %s1841 = scalar_lea.vmem [#allocation5], 279
    %v1842 = vld [vmem:[%s1841] ss:$8 sm:$0x3]
    %s1843 = scalar_lea.vmem [#allocation5], 359
    %v1844 = vld [vmem:[%s1843] ss:$8 sm:$0x3]
    %s1845 = scalar_lea.vmem [#allocation5], 439
    %v1846 = vld [vmem:[%s1845] ss:$8 sm:$0x3]
    %s1847 = scalar_lea.vmem [#allocation5], 519
    %v1848 = vld [vmem:[%s1847] ss:$8 sm:$0x3]
    %s1849 = scalar_lea.vmem [#allocation5], 599
    %v1850 = vld [vmem:[%s1849] ss:$8 sm:$0x3]
    %v1853 = vperm.slane %v1832, 0
    %v1854 = vperm.slane %v1832, 1
    %v1855 = vperm.slane %v1834, 0
    %v1856 = vperm.slane %v1834, 1
    %1869 = vst [vmem:[#allocation1] ss:$9 sm:$0xff] %v1836
    %s1870 = scalar_lea.vmem [#allocation1], 1
    %1871 = vst [vmem:[%s1870] ss:$9 sm:$0xff] %v1838
    %s1872 = scalar_lea.vmem [#allocation1], 2
    %1873 = vst [vmem:[%s1872] ss:$9 sm:$0xff] %v1840
    %s1874 = scalar_lea.vmem [#allocation1], 3
    %1875 = vst [vmem:[%s1874] ss:$9 sm:$0xff] %v1842
    %s1876 = scalar_lea.vmem [#allocation1], 4
    %1877 = vst [vmem:[%s1876] ss:$9 sm:$0xff] %v1844
    %s1878 = scalar_lea.vmem [#allocation1], 5
    %1879 = vst [vmem:[%s1878] ss:$9 sm:$0xff] %v1846
    %s1880 = scalar_lea.vmem [#allocation1], 6
    %1881 = vst [vmem:[%s1880] ss:$9 sm:$0xff] %v1848
    %s1882 = scalar_lea.vmem [#allocation1], 7
    %1883 = vst [vmem:[%s1882] ss:$9 sm:$0xff] %v1850
    %v1884 = vld [vmem:[#allocation1] sm:$0xff]
    %v1885 = vld [vmem:[#allocation1 + $0x9] sm:$0xff]
    %1886 = vst [vmem:[#allocation1] ss:$9 sm:$0xff] %v1836
    %1887 = vst [vmem:[%s1870] ss:$9 sm:$0xff] %v1838
    %1888 = vst [vmem:[%s1872] ss:$9 sm:$0xff] %v1840
    %1889 = vst [vmem:[%s1874] ss:$9 sm:$0xff] %v1842
    %1890 = vst [vmem:[%s1876] ss:$9 sm:$0xff] %v1844
    %1891 = vst [vmem:[%s1878] ss:$9 sm:$0xff] %v1846
    %1892 = vst [vmem:[%s1880] ss:$9 sm:$0xff] %v1848
    %1893 = vst [vmem:[%s1882] ss:$9 sm:$0xff] %v1850
    %v1894 = vld [vmem:[#allocation1] sm:$0xff]
    %v1895 = vld [vmem:[#allocation1 + $0x9] sm:$0xff]
    %v1900 = vmul.f32 %v1853, %v1884
    %v1901 = vmul.f32 %v1854, %v1885
    %v1902 = vmul.f32 %v1855, %v1894
    %v1903 = vmul.f32 %v1856, %v1895
    %v1904 = vadd.f32 %v1827, %v1900
    %v1905 = vadd.f32 %v1828, %v1901
    %v1906 = vadd.f32 %v1829, %v1902
    %v1907 = vadd.f32 %v1830, %v1903
    %s1908 = scalar_lea.vmem [#allocation2], 48
    %v1909 = vld [vmem:[%s1908] ss:$8 sm:$0x3]
    %s1910 = scalar_lea.vmem [#allocation2], 128
    %v1911 = vld [vmem:[%s1910] ss:$8 sm:$0x3]
    %s1912 = scalar_lea.vmem [#allocation5], 48
    %v1913 = vld [vmem:[%s1912] ss:$8 sm:$0x3]
    %s1914 = scalar_lea.vmem [#allocation5], 128
    %v1915 = vld [vmem:[%s1914] ss:$8 sm:$0x3]
    %s1916 = scalar_lea.vmem [#allocation5], 208
    %v1917 = vld [vmem:[%s1916] ss:$8 sm:$0x3]
    %s1918 = scalar_lea.vmem [#allocation5], 288
    %v1919 = vld [vmem:[%s1918] ss:$8 sm:$0x3]
    %s1920 = scalar_lea.vmem [#allocation5], 368
    %v1921 = vld [vmem:[%s1920] ss:$8 sm:$0x3]
    %s1922 = scalar_lea.vmem [#allocation5], 448
    %v1923 = vld [vmem:[%s1922] ss:$8 sm:$0x3]
    %s1924 = scalar_lea.vmem [#allocation5], 528
    %v1925 = vld [vmem:[%s1924] ss:$8 sm:$0x3]
    %s1926 = scalar_lea.vmem [#allocation5], 608
    %v1927 = vld [vmem:[%s1926] ss:$8 sm:$0x3]
    %v1930 = vperm.slane %v1909, 0
    %v1931 = vperm.slane %v1909, 1
    %v1932 = vperm.slane %v1911, 0
    %v1933 = vperm.slane %v1911, 1
    %1946 = vst [vmem:[#allocation1] ss:$9 sm:$0xff] %v1913
    %s1947 = scalar_lea.vmem [#allocation1], 1
    %1948 = vst [vmem:[%s1947] ss:$9 sm:$0xff] %v1915
    %s1949 = scalar_lea.vmem [#allocation1], 2
    %1950 = vst [vmem:[%s1949] ss:$9 sm:$0xff] %v1917
    %s1951 = scalar_lea.vmem [#allocation1], 3
    %1952 = vst [vmem:[%s1951] ss:$9 sm:$0xff] %v1919
    %s1953 = scalar_lea.vmem [#allocation1], 4
    %1954 = vst [vmem:[%s1953] ss:$9 sm:$0xff] %v1921
    %s1955 = scalar_lea.vmem [#allocation1], 5
    %1956 = vst [vmem:[%s1955] ss:$9 sm:$0xff] %v1923
    %s1957 = scalar_lea.vmem [#allocation1], 6
    %1958 = vst [vmem:[%s1957] ss:$9 sm:$0xff] %v1925
    %s1959 = scalar_lea.vmem [#allocation1], 7
    %1960 = vst [vmem:[%s1959] ss:$9 sm:$0xff] %v1927
    %v1961 = vld [vmem:[#allocation1] sm:$0xff]
    %v1962 = vld [vmem:[#allocation1 + $0x9] sm:$0xff]
    %1963 = vst [vmem:[#allocation1] ss:$9 sm:$0xff] %v1913
    %1964 = vst [vmem:[%s1947] ss:$9 sm:$0xff] %v1915
    %1965 = vst [vmem:[%s1949] ss:$9 sm:$0xff] %v1917
    %1966 = vst [vmem:[%s1951] ss:$9 sm:$0xff] %v1919
    %1967 = vst [vmem:[%s1953] ss:$9 sm:$0xff] %v1921
    %1968 = vst [vmem:[%s1955] ss:$9 sm:$0xff] %v1923
    %1969 = vst [vmem:[%s1957] ss:$9 sm:$0xff] %v1925
    %1970 = vst [vmem:[%s1959] ss:$9 sm:$0xff] %v1927
    %v1971 = vld [vmem:[#allocation1] sm:$0xff]
    %v1972 = vld [vmem:[#allocation1 + $0x9] sm:$0xff]
    %v1977 = vmul.f32 %v1930, %v1961
    %v1978 = vmul.f32 %v1931, %v1962
    %v1979 = vmul.f32 %v1932, %v1971
    %v1980 = vmul.f32 %v1933, %v1972
    %v1981 = vadd.f32 %v1904, %v1977
    %v1982 = vadd.f32 %v1905, %v1978
    %v1983 = vadd.f32 %v1906, %v1979
    %v1984 = vadd.f32 %v1907, %v1980
    %s1985 = scalar_lea.vmem [#allocation2], 49
    %v1986 = vld [vmem:[%s1985] ss:$8 sm:$0x3]
    %s1987 = scalar_lea.vmem [#allocation2], 129
    %v1988 = vld [vmem:[%s1987] ss:$8 sm:$0x3]
    %s1989 = scalar_lea.vmem [#allocation5], 49
    %v1990 = vld [vmem:[%s1989] ss:$8 sm:$0x3]
    %s1991 = scalar_lea.vmem [#allocation5], 129
    %v1992 = vld [vmem:[%s1991] ss:$8 sm:$0x3]
    %s1993 = scalar_lea.vmem [#allocation5], 209
    %v1994 = vld [vmem:[%s1993] ss:$8 sm:$0x3]
    %s1995 = scalar_lea.vmem [#allocation5], 289
    %v1996 = vld [vmem:[%s1995] ss:$8 sm:$0x3]
    %s1997 = scalar_lea.vmem [#allocation5], 369
    %v1998 = vld [vmem:[%s1997] ss:$8 sm:$0x3]
    %s1999 = scalar_lea.vmem [#allocation5], 449
    %v2000 = vld [vmem:[%s1999] ss:$8 sm:$0x3]
    %s2001 = scalar_lea.vmem [#allocation5], 529
    %v2002 = vld [vmem:[%s2001] ss:$8 sm:$0x3]
    %s2003 = scalar_lea.vmem [#allocation5], 609
    %v2004 = vld [vmem:[%s2003] ss:$8 sm:$0x3]
    %v2007 = vperm.slane %v1986, 0
    %v2008 = vperm.slane %v1986, 1
    %v2009 = vperm.slane %v1988, 0
    %v2010 = vperm.slane %v1988, 1
    %2023 = vst [vmem:[#allocation1] ss:$9 sm:$0xff] %v1990
    %s2024 = scalar_lea.vmem [#allocation1], 1
    %2025 = vst [vmem:[%s2024] ss:$9 sm:$0xff] %v1992
    %s2026 = scalar_lea.vmem [#allocation1], 2
    %2027 = vst [vmem:[%s2026] ss:$9 sm:$0xff] %v1994
    %s2028 = scalar_lea.vmem [#allocation1], 3
    %2029 = vst [vmem:[%s2028] ss:$9 sm:$0xff] %v1996
    %s2030 = scalar_lea.vmem [#allocation1], 4
    %2031 = vst [vmem:[%s2030] ss:$9 sm:$0xff] %v1998
    %s2032 = scalar_lea.vmem [#allocation1], 5
    %2033 = vst [vmem:[%s2032] ss:$9 sm:$0xff] %v2000
    %s2034 = scalar_lea.vmem [#allocation1], 6
    %2035 = vst [vmem:[%s2034] ss:$9 sm:$0xff] %v2002
    %s2036 = scalar_lea.vmem [#allocation1], 7
    %2037 = vst [vmem:[%s2036] ss:$9 sm:$0xff] %v2004
    %v2038 = vld [vmem:[#allocation1] sm:$0xff]
    %v2039 = vld [vmem:[#allocation1 + $0x9] sm:$0xff]
    %2040 = vst [vmem:[#allocation1] ss:$9 sm:$0xff] %v1990
    %2041 = vst [vmem:[%s2024] ss:$9 sm:$0xff] %v1992
    %2042 = vst [vmem:[%s2026] ss:$9 sm:$0xff] %v1994
    %2043 = vst [vmem:[%s2028] ss:$9 sm:$0xff] %v1996
    %2044 = vst [vmem:[%s2030] ss:$9 sm:$0xff] %v1998
    %2045 = vst [vmem:[%s2032] ss:$9 sm:$0xff] %v2000
    %2046 = vst [vmem:[%s2034] ss:$9 sm:$0xff] %v2002
    %2047 = vst [vmem:[%s2036] ss:$9 sm:$0xff] %v2004
    %v2048 = vld [vmem:[#allocation1] sm:$0xff]
    %v2049 = vld [vmem:[#allocation1 + $0x9] sm:$0xff]
    %v2054 = vmul.f32 %v2007, %v2038
    %v2055 = vmul.f32 %v2008, %v2039
    %v2056 = vmul.f32 %v2009, %v2048
    %v2057 = vmul.f32 %v2010, %v2049
    %v2058 = vadd.f32 %v1981, %v2054
    %v2059 = vadd.f32 %v1982, %v2055
    %v2060 = vadd.f32 %v1983, %v2056
    %v2061 = vadd.f32 %v1984, %v2057
    %s2062 = scalar_lea.vmem [#allocation2], 50
    %v2063 = vld [vmem:[%s2062] ss:$8 sm:$0x3]
    %s2064 = scalar_lea.vmem [#allocation2], 130
    %v2065 = vld [vmem:[%s2064] ss:$8 sm:$0x3]
    %s2066 = scalar_lea.vmem [#allocation5], 50
    %v2067 = vld [vmem:[%s2066] ss:$8 sm:$0x3]
    %s2068 = scalar_lea.vmem [#allocation5], 130
    %v2069 = vld [vmem:[%s2068] ss:$8 sm:$0x3]
    %s2070 = scalar_lea.vmem [#allocation5], 210
    %v2071 = vld [vmem:[%s2070] ss:$8 sm:$0x3]
    %s2072 = scalar_lea.vmem [#allocation5], 290
    %v2073 = vld [vmem:[%s2072] ss:$8 sm:$0x3]
    %s2074 = scalar_lea.vmem [#allocation5], 370
    %v2075 = vld [vmem:[%s2074] ss:$8 sm:$0x3]
    %s2076 = scalar_lea.vmem [#allocation5], 450
    %v2077 = vld [vmem:[%s2076] ss:$8 sm:$0x3]
    %s2078 = scalar_lea.vmem [#allocation5], 530
    %v2079 = vld [vmem:[%s2078] ss:$8 sm:$0x3]
    %s2080 = scalar_lea.vmem [#allocation5], 610
    %v2081 = vld [vmem:[%s2080] ss:$8 sm:$0x3]
    %v2084 = vperm.slane %v2063, 0
    %v2085 = vperm.slane %v2063, 1
    %v2086 = vperm.slane %v2065, 0
    %v2087 = vperm.slane %v2065, 1
    %2100 = vst [vmem:[#allocation1] ss:$9 sm:$0xff] %v2067
    %s2101 = scalar_lea.vmem [#allocation1], 1
    %2102 = vst [vmem:[%s2101] ss:$9 sm:$0xff] %v2069
    %s2103 = scalar_lea.vmem [#allocation1], 2
    %2104 = vst [vmem:[%s2103] ss:$9 sm:$0xff] %v2071
    %s2105 = scalar_lea.vmem [#allocation1], 3
    %2106 = vst [vmem:[%s2105] ss:$9 sm:$0xff] %v2073
    %s2107 = scalar_lea.vmem [#allocation1], 4
    %2108 = vst [vmem:[%s2107] ss:$9 sm:$0xff] %v2075
    %s2109 = scalar_lea.vmem [#allocation1], 5
    %2110 = vst [vmem:[%s2109] ss:$9 sm:$0xff] %v2077
    %s2111 = scalar_lea.vmem [#allocation1], 6
    %2112 = vst [vmem:[%s2111] ss:$9 sm:$0xff] %v2079
    %s2113 = scalar_lea.vmem [#allocation1], 7
    %2114 = vst [vmem:[%s2113] ss:$9 sm:$0xff] %v2081
    %v2115 = vld [vmem:[#allocation1] sm:$0xff]
    %v2116 = vld [vmem:[#allocation1 + $0x9] sm:$0xff]
    %2117 = vst [vmem:[#allocation1] ss:$9 sm:$0xff] %v2067
    %2118 = vst [vmem:[%s2101] ss:$9 sm:$0xff] %v2069
    %2119 = vst [vmem:[%s2103] ss:$9 sm:$0xff] %v2071
    %2120 = vst [vmem:[%s2105] ss:$9 sm:$0xff] %v2073
    %2121 = vst [vmem:[%s2107] ss:$9 sm:$0xff] %v2075
    %2122 = vst [vmem:[%s2109] ss:$9 sm:$0xff] %v2077
    %2123 = vst [vmem:[%s2111] ss:$9 sm:$0xff] %v2079
    %2124 = vst [vmem:[%s2113] ss:$9 sm:$0xff] %v2081
    %v2125 = vld [vmem:[#allocation1] sm:$0xff]
    %v2126 = vld [vmem:[#allocation1 + $0x9] sm:$0xff]
    %v2131 = vmul.f32 %v2084, %v2115
    %v2132 = vmul.f32 %v2085, %v2116
    %v2133 = vmul.f32 %v2086, %v2125
    %v2134 = vmul.f32 %v2087, %v2126
    %v2135 = vadd.f32 %v2058, %v2131
    %v2136 = vadd.f32 %v2059, %v2132
    %v2137 = vadd.f32 %v2060, %v2133
    %v2138 = vadd.f32 %v2061, %v2134
    %s2139 = scalar_lea.vmem [#allocation2], 51
    %v2140 = vld [vmem:[%s2139] ss:$8 sm:$0x3]
    %s2141 = scalar_lea.vmem [#allocation2], 131
    %v2142 = vld [vmem:[%s2141] ss:$8 sm:$0x3]
    %s2143 = scalar_lea.vmem [#allocation5], 51
    %v2144 = vld [vmem:[%s2143] ss:$8 sm:$0x3]
    %s2145 = scalar_lea.vmem [#allocation5], 131
    %v2146 = vld [vmem:[%s2145] ss:$8 sm:$0x3]
    %s2147 = scalar_lea.vmem [#allocation5], 211
    %v2148 = vld [vmem:[%s2147] ss:$8 sm:$0x3]
    %s2149 = scalar_lea.vmem [#allocation5], 291
    %v2150 = vld [vmem:[%s2149] ss:$8 sm:$0x3]
    %s2151 = scalar_lea.vmem [#allocation5], 371
    %v2152 = vld [vmem:[%s2151] ss:$8 sm:$0x3]
    %s2153 = scalar_lea.vmem [#allocation5], 451
    %v2154 = vld [vmem:[%s2153] ss:$8 sm:$0x3]
    %s2155 = scalar_lea.vmem [#allocation5], 531
    %v2156 = vld [vmem:[%s2155] ss:$8 sm:$0x3]
    %s2157 = scalar_lea.vmem [#allocation5], 611
    %v2158 = vld [vmem:[%s2157] ss:$8 sm:$0x3]
    %v2161 = vperm.slane %v2140, 0
    %v2162 = vperm.slane %v2140, 1
    %v2163 = vperm.slane %v2142, 0
    %v2164 = vperm.slane %v2142, 1
    %2177 = vst [vmem:[#allocation1] ss:$9 sm:$0xff] %v2144
    %s2178 = scalar_lea.vmem [#allocation1], 1
    %2179 = vst [vmem:[%s2178] ss:$9 sm:$0xff] %v2146
    %s2180 = scalar_lea.vmem [#allocation1], 2
    %2181 = vst [vmem:[%s2180] ss:$9 sm:$0xff] %v2148
    %s2182 = scalar_lea.vmem [#allocation1], 3
    %2183 = vst [vmem:[%s2182] ss:$9 sm:$0xff] %v2150
    %s2184 = scalar_lea.vmem [#allocation1], 4
    %2185 = vst [vmem:[%s2184] ss:$9 sm:$0xff] %v2152
    %s2186 = scalar_lea.vmem [#allocation1], 5
    %2187 = vst [vmem:[%s2186] ss:$9 sm:$0xff] %v2154
    %s2188 = scalar_lea.vmem [#allocation1], 6
    %2189 = vst [vmem:[%s2188] ss:$9 sm:$0xff] %v2156
    %s2190 = scalar_lea.vmem [#allocation1], 7
    %2191 = vst [vmem:[%s2190] ss:$9 sm:$0xff] %v2158
    %v2192 = vld [vmem:[#allocation1] sm:$0xff]
    %v2193 = vld [vmem:[#allocation1 + $0x9] sm:$0xff]
    %2194 = vst [vmem:[#allocation1] ss:$9 sm:$0xff] %v2144
    %2195 = vst [vmem:[%s2178] ss:$9 sm:$0xff] %v2146
    %2196 = vst [vmem:[%s2180] ss:$9 sm:$0xff] %v2148
    %2197 = vst [vmem:[%s2182] ss:$9 sm:$0xff] %v2150
    %2198 = vst [vmem:[%s2184] ss:$9 sm:$0xff] %v2152
    %2199 = vst [vmem:[%s2186] ss:$9 sm:$0xff] %v2154
    %2200 = vst [vmem:[%s2188] ss:$9 sm:$0xff] %v2156
    %2201 = vst [vmem:[%s2190] ss:$9 sm:$0xff] %v2158
    %v2202 = vld [vmem:[#allocation1] sm:$0xff]
    %v2203 = vld [vmem:[#allocation1 + $0x9] sm:$0xff]
    %v2208 = vmul.f32 %v2161, %v2192
    %v2209 = vmul.f32 %v2162, %v2193
    %v2210 = vmul.f32 %v2163, %v2202
    %v2211 = vmul.f32 %v2164, %v2203
    %v2212 = vadd.f32 %v2135, %v2208
    %v2213 = vadd.f32 %v2136, %v2209
    %v2214 = vadd.f32 %v2137, %v2210
    %v2215 = vadd.f32 %v2138, %v2211
    %s2216 = scalar_lea.vmem [#allocation2], 52
    %v2217 = vld [vmem:[%s2216] ss:$8 sm:$0x3]
    %s2218 = scalar_lea.vmem [#allocation2], 132
    %v2219 = vld [vmem:[%s2218] ss:$8 sm:$0x3]
    %s2220 = scalar_lea.vmem [#allocation5], 52
    %v2221 = vld [vmem:[%s2220] ss:$8 sm:$0x3]
    %s2222 = scalar_lea.vmem [#allocation5], 132
    %v2223 = vld [vmem:[%s2222] ss:$8 sm:$0x3]
    %s2224 = scalar_lea.vmem [#allocation5], 212
    %v2225 = vld [vmem:[%s2224] ss:$8 sm:$0x3]
    %s2226 = scalar_lea.vmem [#allocation5], 292
    %v2227 = vld [vmem:[%s2226] ss:$8 sm:$0x3]
    %s2228 = scalar_lea.vmem [#allocation5], 372
    %v2229 = vld [vmem:[%s2228] ss:$8 sm:$0x3]
    %s2230 = scalar_lea.vmem [#allocation5], 452
    %v2231 = vld [vmem:[%s2230] ss:$8 sm:$0x3]
    %s2232 = scalar_lea.vmem [#allocation5], 532
    %v2233 = vld [vmem:[%s2232] ss:$8 sm:$0x3]
    %s2234 = scalar_lea.vmem [#allocation5], 612
    %v2235 = vld [vmem:[%s2234] ss:$8 sm:$0x3]
    %v2238 = vperm.slane %v2217, 0
    %v2239 = vperm.slane %v2217, 1
    %v2240 = vperm.slane %v2219, 0
    %v2241 = vperm.slane %v2219, 1
    %2254 = vst [vmem:[#allocation1] ss:$9 sm:$0xff] %v2221
    %s2255 = scalar_lea.vmem [#allocation1], 1
    %2256 = vst [vmem:[%s2255] ss:$9 sm:$0xff] %v2223
    %s2257 = scalar_lea.vmem [#allocation1], 2
    %2258 = vst [vmem:[%s2257] ss:$9 sm:$0xff] %v2225
    %s2259 = scalar_lea.vmem [#allocation1], 3
    %2260 = vst [vmem:[%s2259] ss:$9 sm:$0xff] %v2227
    %s2261 = scalar_lea.vmem [#allocation1], 4
    %2262 = vst [vmem:[%s2261] ss:$9 sm:$0xff] %v2229
    %s2263 = scalar_lea.vmem [#allocation1], 5
    %2264 = vst [vmem:[%s2263] ss:$9 sm:$0xff] %v2231
    %s2265 = scalar_lea.vmem [#allocation1], 6
    %2266 = vst [vmem:[%s2265] ss:$9 sm:$0xff] %v2233
    %s2267 = scalar_lea.vmem [#allocation1], 7
    %2268 = vst [vmem:[%s2267] ss:$9 sm:$0xff] %v2235
    %v2269 = vld [vmem:[#allocation1] sm:$0xff]
    %v2270 = vld [vmem:[#allocation1 + $0x9] sm:$0xff]
    %2271 = vst [vmem:[#allocation1] ss:$9 sm:$0xff] %v2221
    %2272 = vst [vmem:[%s2255] ss:$9 sm:$0xff] %v2223
    %2273 = vst [vmem:[%s2257] ss:$9 sm:$0xff] %v2225
    %2274 = vst [vmem:[%s2259] ss:$9 sm:$0xff] %v2227
    %2275 = vst [vmem:[%s2261] ss:$9 sm:$0xff] %v2229
    %2276 = vst [vmem:[%s2263] ss:$9 sm:$0xff] %v2231
    %2277 = vst [vmem:[%s2265] ss:$9 sm:$0xff] %v2233
    %2278 = vst [vmem:[%s2267] ss:$9 sm:$0xff] %v2235
    %v2279 = vld [vmem:[#allocation1] sm:$0xff]
    %v2280 = vld [vmem:[#allocation1 + $0x9] sm:$0xff]
    %v2285 = vmul.f32 %v2238, %v2269
    %v2286 = vmul.f32 %v2239, %v2270
    %v2287 = vmul.f32 %v2240, %v2279
    %v2288 = vmul.f32 %v2241, %v2280
    %v2289 = vadd.f32 %v2212, %v2285
    %v2290 = vadd.f32 %v2213, %v2286
    %v2291 = vadd.f32 %v2214, %v2287
    %v2292 = vadd.f32 %v2215, %v2288
    %s2293 = scalar_lea.vmem [#allocation2], 53
    %v2294 = vld [vmem:[%s2293] ss:$8 sm:$0x3]
    %s2295 = scalar_lea.vmem [#allocation2], 133
    %v2296 = vld [vmem:[%s2295] ss:$8 sm:$0x3]
    %s2297 = scalar_lea.vmem [#allocation5], 53
    %v2298 = vld [vmem:[%s2297] ss:$8 sm:$0x3]
    %s2299 = scalar_lea.vmem [#allocation5], 133
    %v2300 = vld [vmem:[%s2299] ss:$8 sm:$0x3]
    %s2301 = scalar_lea.vmem [#allocation5], 213
    %v2302 = vld [vmem:[%s2301] ss:$8 sm:$0x3]
    %s2303 = scalar_lea.vmem [#allocation5], 293
    %v2304 = vld [vmem:[%s2303] ss:$8 sm:$0x3]
    %s2305 = scalar_lea.vmem [#allocation5], 373
    %v2306 = vld [vmem:[%s2305] ss:$8 sm:$0x3]
    %s2307 = scalar_lea.vmem [#allocation5], 453
    %v2308 = vld [vmem:[%s2307] ss:$8 sm:$0x3]
    %s2309 = scalar_lea.vmem [#allocation5], 533
    %v2310 = vld [vmem:[%s2309] ss:$8 sm:$0x3]
    %s2311 = scalar_lea.vmem [#allocation5], 613
    %v2312 = vld [vmem:[%s2311] ss:$8 sm:$0x3]
    %v2315 = vperm.slane %v2294, 0
    %v2316 = vperm.slane %v2294, 1
    %v2317 = vperm.slane %v2296, 0
    %v2318 = vperm.slane %v2296, 1
    %2331 = vst [vmem:[#allocation1] ss:$9 sm:$0xff] %v2298
    %s2332 = scalar_lea.vmem [#allocation1], 1
    %2333 = vst [vmem:[%s2332] ss:$9 sm:$0xff] %v2300
    %s2334 = scalar_lea.vmem [#allocation1], 2
    %2335 = vst [vmem:[%s2334] ss:$9 sm:$0xff] %v2302
    %s2336 = scalar_lea.vmem [#allocation1], 3
    %2337 = vst [vmem:[%s2336] ss:$9 sm:$0xff] %v2304
    %s2338 = scalar_lea.vmem [#allocation1], 4
    %2339 = vst [vmem:[%s2338] ss:$9 sm:$0xff] %v2306
    %s2340 = scalar_lea.vmem [#allocation1], 5
    %2341 = vst [vmem:[%s2340] ss:$9 sm:$0xff] %v2308
    %s2342 = scalar_lea.vmem [#allocation1], 6
    %2343 = vst [vmem:[%s2342] ss:$9 sm:$0xff] %v2310
    %s2344 = scalar_lea.vmem [#allocation1], 7
    %2345 = vst [vmem:[%s2344] ss:$9 sm:$0xff] %v2312
    %v2346 = vld [vmem:[#allocation1] sm:$0xff]
    %v2347 = vld [vmem:[#allocation1 + $0x9] sm:$0xff]
    %2348 = vst [vmem:[#allocation1] ss:$9 sm:$0xff] %v2298
    %2349 = vst [vmem:[%s2332] ss:$9 sm:$0xff] %v2300
    %2350 = vst [vmem:[%s2334] ss:$9 sm:$0xff] %v2302
    %2351 = vst [vmem:[%s2336] ss:$9 sm:$0xff] %v2304
    %2352 = vst [vmem:[%s2338] ss:$9 sm:$0xff] %v2306
    %2353 = vst [vmem:[%s2340] ss:$9 sm:$0xff] %v2308
    %2354 = vst [vmem:[%s2342] ss:$9 sm:$0xff] %v2310
    %2355 = vst [vmem:[%s2344] ss:$9 sm:$0xff] %v2312
    %v2356 = vld [vmem:[#allocation1] sm:$0xff]
    %v2357 = vld [vmem:[#allocation1 + $0x9] sm:$0xff]
    %v2362 = vmul.f32 %v2315, %v2346
    %v2363 = vmul.f32 %v2316, %v2347
    %v2364 = vmul.f32 %v2317, %v2356
    %v2365 = vmul.f32 %v2318, %v2357
    %v2366 = vadd.f32 %v2289, %v2362
    %v2367 = vadd.f32 %v2290, %v2363
    %v2368 = vadd.f32 %v2291, %v2364
    %v2369 = vadd.f32 %v2292, %v2365
    %s2370 = scalar_lea.vmem [#allocation2], 54
    %v2371 = vld [vmem:[%s2370] ss:$8 sm:$0x3]
    %s2372 = scalar_lea.vmem [#allocation2], 134
    %v2373 = vld [vmem:[%s2372] ss:$8 sm:$0x3]
    %s2374 = scalar_lea.vmem [#allocation5], 54
    %v2375 = vld [vmem:[%s2374] ss:$8 sm:$0x3]
    %s2376 = scalar_lea.vmem [#allocation5], 134
    %v2377 = vld [vmem:[%s2376] ss:$8 sm:$0x3]
    %s2378 = scalar_lea.vmem [#allocation5], 214
    %v2379 = vld [vmem:[%s2378] ss:$8 sm:$0x3]
    %s2380 = scalar_lea.vmem [#allocation5], 294
    %v2381 = vld [vmem:[%s2380] ss:$8 sm:$0x3]
    %s2382 = scalar_lea.vmem [#allocation5], 374
    %v2383 = vld [vmem:[%s2382] ss:$8 sm:$0x3]
    %s2384 = scalar_lea.vmem [#allocation5], 454
    %v2385 = vld [vmem:[%s2384] ss:$8 sm:$0x3]
    %s2386 = scalar_lea.vmem [#allocation5], 534
    %v2387 = vld [vmem:[%s2386] ss:$8 sm:$0x3]
    %s2388 = scalar_lea.vmem [#allocation5], 614
    %v2389 = vld [vmem:[%s2388] ss:$8 sm:$0x3]
    %v2392 = vperm.slane %v2371, 0
    %v2393 = vperm.slane %v2371, 1
    %v2394 = vperm.slane %v2373, 0
    %v2395 = vperm.slane %v2373, 1
    %2408 = vst [vmem:[#allocation1] ss:$9 sm:$0xff] %v2375
    %s2409 = scalar_lea.vmem [#allocation1], 1
    %2410 = vst [vmem:[%s2409] ss:$9 sm:$0xff] %v2377
    %s2411 = scalar_lea.vmem [#allocation1], 2
    %2412 = vst [vmem:[%s2411] ss:$9 sm:$0xff] %v2379
    %s2413 = scalar_lea.vmem [#allocation1], 3
    %2414 = vst [vmem:[%s2413] ss:$9 sm:$0xff] %v2381
    %s2415 = scalar_lea.vmem [#allocation1], 4
    %2416 = vst [vmem:[%s2415] ss:$9 sm:$0xff] %v2383
    %s2417 = scalar_lea.vmem [#allocation1], 5
    %2418 = vst [vmem:[%s2417] ss:$9 sm:$0xff] %v2385
    %s2419 = scalar_lea.vmem [#allocation1], 6
    %2420 = vst [vmem:[%s2419] ss:$9 sm:$0xff] %v2387
    %s2421 = scalar_lea.vmem [#allocation1], 7
    %2422 = vst [vmem:[%s2421] ss:$9 sm:$0xff] %v2389
    %v2423 = vld [vmem:[#allocation1] sm:$0xff]
    %v2424 = vld [vmem:[#allocation1 + $0x9] sm:$0xff]
    %2425 = vst [vmem:[#allocation1] ss:$9 sm:$0xff] %v2375
    %2426 = vst [vmem:[%s2409] ss:$9 sm:$0xff] %v2377
    %2427 = vst [vmem:[%s2411] ss:$9 sm:$0xff] %v2379
    %2428 = vst [vmem:[%s2413] ss:$9 sm:$0xff] %v2381
    %2429 = vst [vmem:[%s2415] ss:$9 sm:$0xff] %v2383
    %2430 = vst [vmem:[%s2417] ss:$9 sm:$0xff] %v2385
    %2431 = vst [vmem:[%s2419] ss:$9 sm:$0xff] %v2387
    %2432 = vst [vmem:[%s2421] ss:$9 sm:$0xff] %v2389
    %v2433 = vld [vmem:[#allocation1] sm:$0xff]
    %v2434 = vld [vmem:[#allocation1 + $0x9] sm:$0xff]
    %v2439 = vmul.f32 %v2392, %v2423
    %v2440 = vmul.f32 %v2393, %v2424
    %v2441 = vmul.f32 %v2394, %v2433
    %v2442 = vmul.f32 %v2395, %v2434
    %v2443 = vadd.f32 %v2366, %v2439
    %v2444 = vadd.f32 %v2367, %v2440
    %v2445 = vadd.f32 %v2368, %v2441
    %v2446 = vadd.f32 %v2369, %v2442
    %s2447 = scalar_lea.vmem [#allocation2], 55
    %v2448 = vld [vmem:[%s2447] ss:$8 sm:$0x3]
    %s2449 = scalar_lea.vmem [#allocation2], 135
    %v2450 = vld [vmem:[%s2449] ss:$8 sm:$0x3]
    %s2451 = scalar_lea.vmem [#allocation5], 55
    %v2452 = vld [vmem:[%s2451] ss:$8 sm:$0x3]
    %s2453 = scalar_lea.vmem [#allocation5], 135
    %v2454 = vld [vmem:[%s2453] ss:$8 sm:$0x3]
    %s2455 = scalar_lea.vmem [#allocation5], 215
    %v2456 = vld [vmem:[%s2455] ss:$8 sm:$0x3]
    %s2457 = scalar_lea.vmem [#allocation5], 295
    %v2458 = vld [vmem:[%s2457] ss:$8 sm:$0x3]
    %s2459 = scalar_lea.vmem [#allocation5], 375
    %v2460 = vld [vmem:[%s2459] ss:$8 sm:$0x3]
    %s2461 = scalar_lea.vmem [#allocation5], 455
    %v2462 = vld [vmem:[%s2461] ss:$8 sm:$0x3]
    %s2463 = scalar_lea.vmem [#allocation5], 535
    %v2464 = vld [vmem:[%s2463] ss:$8 sm:$0x3]
    %s2465 = scalar_lea.vmem [#allocation5], 615
    %v2466 = vld [vmem:[%s2465] ss:$8 sm:$0x3]
    %v2469 = vperm.slane %v2448, 0
    %v2470 = vperm.slane %v2448, 1
    %v2471 = vperm.slane %v2450, 0
    %v2472 = vperm.slane %v2450, 1
    %2485 = vst [vmem:[#allocation1] ss:$9 sm:$0xff] %v2452
    %s2486 = scalar_lea.vmem [#allocation1], 1
    %2487 = vst [vmem:[%s2486] ss:$9 sm:$0xff] %v2454
    %s2488 = scalar_lea.vmem [#allocation1], 2
    %2489 = vst [vmem:[%s2488] ss:$9 sm:$0xff] %v2456
    %s2490 = scalar_lea.vmem [#allocation1], 3
    %2491 = vst [vmem:[%s2490] ss:$9 sm:$0xff] %v2458
    %s2492 = scalar_lea.vmem [#allocation1], 4
    %2493 = vst [vmem:[%s2492] ss:$9 sm:$0xff] %v2460
    %s2494 = scalar_lea.vmem [#allocation1], 5
    %2495 = vst [vmem:[%s2494] ss:$9 sm:$0xff] %v2462
    %s2496 = scalar_lea.vmem [#allocation1], 6
    %2497 = vst [vmem:[%s2496] ss:$9 sm:$0xff] %v2464
    %s2498 = scalar_lea.vmem [#allocation1], 7
    %2499 = vst [vmem:[%s2498] ss:$9 sm:$0xff] %v2466
    %v2500 = vld [vmem:[#allocation1] sm:$0xff]
    %v2501 = vld [vmem:[#allocation1 + $0x9] sm:$0xff]
    %2502 = vst [vmem:[#allocation1] ss:$9 sm:$0xff] %v2452
    %2503 = vst [vmem:[%s2486] ss:$9 sm:$0xff] %v2454
    %2504 = vst [vmem:[%s2488] ss:$9 sm:$0xff] %v2456
    %2505 = vst [vmem:[%s2490] ss:$9 sm:$0xff] %v2458
    %2506 = vst [vmem:[%s2492] ss:$9 sm:$0xff] %v2460
    %2507 = vst [vmem:[%s2494] ss:$9 sm:$0xff] %v2462
    %2508 = vst [vmem:[%s2496] ss:$9 sm:$0xff] %v2464
    %2509 = vst [vmem:[%s2498] ss:$9 sm:$0xff] %v2466
    %v2510 = vld [vmem:[#allocation1] sm:$0xff]
    %v2511 = vld [vmem:[#allocation1 + $0x9] sm:$0xff]
    %v2516 = vmul.f32 %v2469, %v2500
    %v2517 = vmul.f32 %v2470, %v2501
    %v2518 = vmul.f32 %v2471, %v2510
    %v2519 = vmul.f32 %v2472, %v2511
    %v2520 = vadd.f32 %v2443, %v2516
    %v2521 = vadd.f32 %v2444, %v2517
    %v2522 = vadd.f32 %v2445, %v2518
    %v2523 = vadd.f32 %v2446, %v2519
    %s2524 = scalar_lea.vmem [#allocation2], 64
    %v2525 = vld [vmem:[%s2524] ss:$8 sm:$0x3]
    %s2526 = scalar_lea.vmem [#allocation2], 144
    %v2527 = vld [vmem:[%s2526] ss:$8 sm:$0x3]
    %s2528 = scalar_lea.vmem [#allocation5], 64
    %v2529 = vld [vmem:[%s2528] ss:$8 sm:$0x3]
    %s2530 = scalar_lea.vmem [#allocation5], 144
    %v2531 = vld [vmem:[%s2530] ss:$8 sm:$0x3]
    %s2532 = scalar_lea.vmem [#allocation5], 224
    %v2533 = vld [vmem:[%s2532] ss:$8 sm:$0x3]
    %s2534 = scalar_lea.vmem [#allocation5], 304
    %v2535 = vld [vmem:[%s2534] ss:$8 sm:$0x3]
    %s2536 = scalar_lea.vmem [#allocation5], 384
    %v2537 = vld [vmem:[%s2536] ss:$8 sm:$0x3]
    %s2538 = scalar_lea.vmem [#allocation5], 464
    %v2539 = vld [vmem:[%s2538] ss:$8 sm:$0x3]
    %s2540 = scalar_lea.vmem [#allocation5], 544
    %v2541 = vld [vmem:[%s2540] ss:$8 sm:$0x3]
    %s2542 = scalar_lea.vmem [#allocation5], 624
    %v2543 = vld [vmem:[%s2542] ss:$8 sm:$0x3]
    %v2546 = vperm.slane %v2525, 0
    %v2547 = vperm.slane %v2525, 1
    %v2548 = vperm.slane %v2527, 0
    %v2549 = vperm.slane %v2527, 1
    %2562 = vst [vmem:[#allocation1] ss:$9 sm:$0xff] %v2529
    %s2563 = scalar_lea.vmem [#allocation1], 1
    %2564 = vst [vmem:[%s2563] ss:$9 sm:$0xff] %v2531
    %s2565 = scalar_lea.vmem [#allocation1], 2
    %2566 = vst [vmem:[%s2565] ss:$9 sm:$0xff] %v2533
    %s2567 = scalar_lea.vmem [#allocation1], 3
    %2568 = vst [vmem:[%s2567] ss:$9 sm:$0xff] %v2535
    %s2569 = scalar_lea.vmem [#allocation1], 4
    %2570 = vst [vmem:[%s2569] ss:$9 sm:$0xff] %v2537
    %s2571 = scalar_lea.vmem [#allocation1], 5
    %2572 = vst [vmem:[%s2571] ss:$9 sm:$0xff] %v2539
    %s2573 = scalar_lea.vmem [#allocation1], 6
    %2574 = vst [vmem:[%s2573] ss:$9 sm:$0xff] %v2541
    %s2575 = scalar_lea.vmem [#allocation1], 7
    %2576 = vst [vmem:[%s2575] ss:$9 sm:$0xff] %v2543
    %v2577 = vld [vmem:[#allocation1] sm:$0xff]
    %v2578 = vld [vmem:[#allocation1 + $0x9] sm:$0xff]
    %2579 = vst [vmem:[#allocation1] ss:$9 sm:$0xff] %v2529
    %2580 = vst [vmem:[%s2563] ss:$9 sm:$0xff] %v2531
    %2581 = vst [vmem:[%s2565] ss:$9 sm:$0xff] %v2533
    %2582 = vst [vmem:[%s2567] ss:$9 sm:$0xff] %v2535
    %2583 = vst [vmem:[%s2569] ss:$9 sm:$0xff] %v2537
    %2584 = vst [vmem:[%s2571] ss:$9 sm:$0xff] %v2539
    %2585 = vst [vmem:[%s2573] ss:$9 sm:$0xff] %v2541
    %2586 = vst [vmem:[%s2575] ss:$9 sm:$0xff] %v2543
    %v2587 = vld [vmem:[#allocation1] sm:$0xff]
    %v2588 = vld [vmem:[#allocation1 + $0x9] sm:$0xff]
    %v2593 = vmul.f32 %v2546, %v2577
    %v2594 = vmul.f32 %v2547, %v2578
    %v2595 = vmul.f32 %v2548, %v2587
    %v2596 = vmul.f32 %v2549, %v2588
    %v2597 = vadd.f32 %v2520, %v2593
    %v2598 = vadd.f32 %v2521, %v2594
    %v2599 = vadd.f32 %v2522, %v2595
    %v2600 = vadd.f32 %v2523, %v2596
    %s2601 = scalar_lea.vmem [#allocation2], 65
    %v2602 = vld [vmem:[%s2601] ss:$8 sm:$0x3]
    %s2603 = scalar_lea.vmem [#allocation2], 145
    %v2604 = vld [vmem:[%s2603] ss:$8 sm:$0x3]
    %s2605 = scalar_lea.vmem [#allocation5], 65
    %v2606 = vld [vmem:[%s2605] ss:$8 sm:$0x3]
    %s2607 = scalar_lea.vmem [#allocation5], 145
    %v2608 = vld [vmem:[%s2607] ss:$8 sm:$0x3]
    %s2609 = scalar_lea.vmem [#allocation5], 225
    %v2610 = vld [vmem:[%s2609] ss:$8 sm:$0x3]
    %s2611 = scalar_lea.vmem [#allocation5], 305
    %v2612 = vld [vmem:[%s2611] ss:$8 sm:$0x3]
    %s2613 = scalar_lea.vmem [#allocation5], 385
    %v2614 = vld [vmem:[%s2613] ss:$8 sm:$0x3]
    %s2615 = scalar_lea.vmem [#allocation5], 465
    %v2616 = vld [vmem:[%s2615] ss:$8 sm:$0x3]
    %s2617 = scalar_lea.vmem [#allocation5], 545
    %v2618 = vld [vmem:[%s2617] ss:$8 sm:$0x3]
    %s2619 = scalar_lea.vmem [#allocation5], 625
    %v2620 = vld [vmem:[%s2619] ss:$8 sm:$0x3]
    %v2623 = vperm.slane %v2602, 0
    %v2624 = vperm.slane %v2602, 1
    %v2625 = vperm.slane %v2604, 0
    %v2626 = vperm.slane %v2604, 1
    %2639 = vst [vmem:[#allocation1] ss:$9 sm:$0xff] %v2606
    %s2640 = scalar_lea.vmem [#allocation1], 1
    %2641 = vst [vmem:[%s2640] ss:$9 sm:$0xff] %v2608
    %s2642 = scalar_lea.vmem [#allocation1], 2
    %2643 = vst [vmem:[%s2642] ss:$9 sm:$0xff] %v2610
    %s2644 = scalar_lea.vmem [#allocation1], 3
    %2645 = vst [vmem:[%s2644] ss:$9 sm:$0xff] %v2612
    %s2646 = scalar_lea.vmem [#allocation1], 4
    %2647 = vst [vmem:[%s2646] ss:$9 sm:$0xff] %v2614
    %s2648 = scalar_lea.vmem [#allocation1], 5
    %2649 = vst [vmem:[%s2648] ss:$9 sm:$0xff] %v2616
    %s2650 = scalar_lea.vmem [#allocation1], 6
    %2651 = vst [vmem:[%s2650] ss:$9 sm:$0xff] %v2618
    %s2652 = scalar_lea.vmem [#allocation1], 7
    %2653 = vst [vmem:[%s2652] ss:$9 sm:$0xff] %v2620
    %v2654 = vld [vmem:[#allocation1] sm:$0xff]
    %v2655 = vld [vmem:[#allocation1 + $0x9] sm:$0xff]
    %2656 = vst [vmem:[#allocation1] ss:$9 sm:$0xff] %v2606
    %2657 = vst [vmem:[%s2640] ss:$9 sm:$0xff] %v2608
    %2658 = vst [vmem:[%s2642] ss:$9 sm:$0xff] %v2610
    %2659 = vst [vmem:[%s2644] ss:$9 sm:$0xff] %v2612
    %2660 = vst [vmem:[%s2646] ss:$9 sm:$0xff] %v2614
    %2661 = vst [vmem:[%s2648] ss:$9 sm:$0xff] %v2616
    %2662 = vst [vmem:[%s2650] ss:$9 sm:$0xff] %v2618
    %2663 = vst [vmem:[%s2652] ss:$9 sm:$0xff] %v2620
    %v2664 = vld [vmem:[#allocation1] sm:$0xff]
    %v2665 = vld [vmem:[#allocation1 + $0x9] sm:$0xff]
    %v2670 = vmul.f32 %v2623, %v2654
    %v2671 = vmul.f32 %v2624, %v2655
    %v2672 = vmul.f32 %v2625, %v2664
    %v2673 = vmul.f32 %v2626, %v2665
    %v2674 = vadd.f32 %v2597, %v2670
    %v2675 = vadd.f32 %v2598, %v2671
    %v2676 = vadd.f32 %v2599, %v2672
    %v2677 = vadd.f32 %v2600, %v2673
    %s2678 = scalar_lea.vmem [#allocation2], 66
    %v2679 = vld [vmem:[%s2678] ss:$8 sm:$0x3]
    %s2680 = scalar_lea.vmem [#allocation2], 146
    %v2681 = vld [vmem:[%s2680] ss:$8 sm:$0x3]
    %s2682 = scalar_lea.vmem [#allocation5], 66
    %v2683 = vld [vmem:[%s2682] ss:$8 sm:$0x3]
    %s2684 = scalar_lea.vmem [#allocation5], 146
    %v2685 = vld [vmem:[%s2684] ss:$8 sm:$0x3]
    %s2686 = scalar_lea.vmem [#allocation5], 226
    %v2687 = vld [vmem:[%s2686] ss:$8 sm:$0x3]
    %s2688 = scalar_lea.vmem [#allocation5], 306
    %v2689 = vld [vmem:[%s2688] ss:$8 sm:$0x3]
    %s2690 = scalar_lea.vmem [#allocation5], 386
    %v2691 = vld [vmem:[%s2690] ss:$8 sm:$0x3]
    %s2692 = scalar_lea.vmem [#allocation5], 466
    %v2693 = vld [vmem:[%s2692] ss:$8 sm:$0x3]
    %s2694 = scalar_lea.vmem [#allocation5], 546
    %v2695 = vld [vmem:[%s2694] ss:$8 sm:$0x3]
    %s2696 = scalar_lea.vmem [#allocation5], 626
    %v2697 = vld [vmem:[%s2696] ss:$8 sm:$0x3]
    %v2700 = vperm.slane %v2679, 0
    %v2701 = vperm.slane %v2679, 1
    %v2702 = vperm.slane %v2681, 0
    %v2703 = vperm.slane %v2681, 1
    %2716 = vst [vmem:[#allocation1] ss:$9 sm:$0xff] %v2683
    %s2717 = scalar_lea.vmem [#allocation1], 1
    %2718 = vst [vmem:[%s2717] ss:$9 sm:$0xff] %v2685
    %s2719 = scalar_lea.vmem [#allocation1], 2
    %2720 = vst [vmem:[%s2719] ss:$9 sm:$0xff] %v2687
    %s2721 = scalar_lea.vmem [#allocation1], 3
    %2722 = vst [vmem:[%s2721] ss:$9 sm:$0xff] %v2689
    %s2723 = scalar_lea.vmem [#allocation1], 4
    %2724 = vst [vmem:[%s2723] ss:$9 sm:$0xff] %v2691
    %s2725 = scalar_lea.vmem [#allocation1], 5
    %2726 = vst [vmem:[%s2725] ss:$9 sm:$0xff] %v2693
    %s2727 = scalar_lea.vmem [#allocation1], 6
    %2728 = vst [vmem:[%s2727] ss:$9 sm:$0xff] %v2695
    %s2729 = scalar_lea.vmem [#allocation1], 7
    %2730 = vst [vmem:[%s2729] ss:$9 sm:$0xff] %v2697
    %v2731 = vld [vmem:[#allocation1] sm:$0xff]
    %v2732 = vld [vmem:[#allocation1 + $0x9] sm:$0xff]
    %2733 = vst [vmem:[#allocation1] ss:$9 sm:$0xff] %v2683
    %2734 = vst [vmem:[%s2717] ss:$9 sm:$0xff] %v2685
    %2735 = vst [vmem:[%s2719] ss:$9 sm:$0xff] %v2687
    %2736 = vst [vmem:[%s2721] ss:$9 sm:$0xff] %v2689
    %2737 = vst [vmem:[%s2723] ss:$9 sm:$0xff] %v2691
    %2738 = vst [vmem:[%s2725] ss:$9 sm:$0xff] %v2693
    %2739 = vst [vmem:[%s2727] ss:$9 sm:$0xff] %v2695
    %2740 = vst [vmem:[%s2729] ss:$9 sm:$0xff] %v2697
    %v2741 = vld [vmem:[#allocation1] sm:$0xff]
    %v2742 = vld [vmem:[#allocation1 + $0x9] sm:$0xff]
    %v2747 = vmul.f32 %v2700, %v2731
    %v2748 = vmul.f32 %v2701, %v2732
    %v2749 = vmul.f32 %v2702, %v2741
    %v2750 = vmul.f32 %v2703, %v2742
    %v2751 = vadd.f32 %v2674, %v2747
    %v2752 = vadd.f32 %v2675, %v2748
    %v2753 = vadd.f32 %v2676, %v2749
    %v2754 = vadd.f32 %v2677, %v2750
    %s2755 = scalar_lea.vmem [#allocation2], 67
    %v2756 = vld [vmem:[%s2755] ss:$8 sm:$0x3]
    %s2757 = scalar_lea.vmem [#allocation2], 147
    %v2758 = vld [vmem:[%s2757] ss:$8 sm:$0x3]
    %s2759 = scalar_lea.vmem [#allocation5], 67
    %v2760 = vld [vmem:[%s2759] ss:$8 sm:$0x3]
    %s2761 = scalar_lea.vmem [#allocation5], 147
    %v2762 = vld [vmem:[%s2761] ss:$8 sm:$0x3]
    %s2763 = scalar_lea.vmem [#allocation5], 227
    %v2764 = vld [vmem:[%s2763] ss:$8 sm:$0x3]
    %s2765 = scalar_lea.vmem [#allocation5], 307
    %v2766 = vld [vmem:[%s2765] ss:$8 sm:$0x3]
    %s2767 = scalar_lea.vmem [#allocation5], 387
    %v2768 = vld [vmem:[%s2767] ss:$8 sm:$0x3]
    %s2769 = scalar_lea.vmem [#allocation5], 467
    %v2770 = vld [vmem:[%s2769] ss:$8 sm:$0x3]
    %s2771 = scalar_lea.vmem [#allocation5], 547
    %v2772 = vld [vmem:[%s2771] ss:$8 sm:$0x3]
    %s2773 = scalar_lea.vmem [#allocation5], 627
    %v2774 = vld [vmem:[%s2773] ss:$8 sm:$0x3]
    %v2777 = vperm.slane %v2756, 0
    %v2778 = vperm.slane %v2756, 1
    %v2779 = vperm.slane %v2758, 0
    %v2780 = vperm.slane %v2758, 1
    %2793 = vst [vmem:[#allocation1] ss:$9 sm:$0xff] %v2760
    %s2794 = scalar_lea.vmem [#allocation1], 1
    %2795 = vst [vmem:[%s2794] ss:$9 sm:$0xff] %v2762
    %s2796 = scalar_lea.vmem [#allocation1], 2
    %2797 = vst [vmem:[%s2796] ss:$9 sm:$0xff] %v2764
    %s2798 = scalar_lea.vmem [#allocation1], 3
    %2799 = vst [vmem:[%s2798] ss:$9 sm:$0xff] %v2766
    %s2800 = scalar_lea.vmem [#allocation1], 4
    %2801 = vst [vmem:[%s2800] ss:$9 sm:$0xff] %v2768
    %s2802 = scalar_lea.vmem [#allocation1], 5
    %2803 = vst [vmem:[%s2802] ss:$9 sm:$0xff] %v2770
    %s2804 = scalar_lea.vmem [#allocation1], 6
    %2805 = vst [vmem:[%s2804] ss:$9 sm:$0xff] %v2772
    %s2806 = scalar_lea.vmem [#allocation1], 7
    %2807 = vst [vmem:[%s2806] ss:$9 sm:$0xff] %v2774
    %v2808 = vld [vmem:[#allocation1] sm:$0xff]
    %v2809 = vld [vmem:[#allocation1 + $0x9] sm:$0xff]
    %2810 = vst [vmem:[#allocation1] ss:$9 sm:$0xff] %v2760
    %2811 = vst [vmem:[%s2794] ss:$9 sm:$0xff] %v2762
    %2812 = vst [vmem:[%s2796] ss:$9 sm:$0xff] %v2764
    %2813 = vst [vmem:[%s2798] ss:$9 sm:$0xff] %v2766
    %2814 = vst [vmem:[%s2800] ss:$9 sm:$0xff] %v2768
    %2815 = vst [vmem:[%s2802] ss:$9 sm:$0xff] %v2770
    %2816 = vst [vmem:[%s2804] ss:$9 sm:$0xff] %v2772
    %2817 = vst [vmem:[%s2806] ss:$9 sm:$0xff] %v2774
    %v2818 = vld [vmem:[#allocation1] sm:$0xff]
    %v2819 = vld [vmem:[#allocation1 + $0x9] sm:$0xff]
    %v2824 = vmul.f32 %v2777, %v2808
    %v2825 = vmul.f32 %v2778, %v2809
    %v2826 = vmul.f32 %v2779, %v2818
    %v2827 = vmul.f32 %v2780, %v2819
    %v2828 = vadd.f32 %v2751, %v2824
    %v2829 = vadd.f32 %v2752, %v2825
    %v2830 = vadd.f32 %v2753, %v2826
    %v2831 = vadd.f32 %v2754, %v2827
    %2832 = vst [vmem:[#allocation8] sm:$0xff] %v2828
    %2833 = vst [vmem:[#allocation8 + $0x8] sm:$0xff] %v2829
    %2834 = vst [vmem:[#allocation8 + $0x10] sm:$0xff] %v2830
    %2835 = vst [vmem:[#allocation8 + $0x18] sm:$0xff] %v2831
    // Predicated region
    $region26: #{tpu_custom_call.1} parent=1 // pred_check
      _
    $region27: #{tpu_custom_call.1} parent=1 // pred_check_branch
      %2837 = sbr.rel (0) target = $region29
    $region28: #{tpu_custom_call.1} parent=1 // pred_region
      %2839 = vsyncadd [#allocation4], 0
      %s2840 = sshll.u32 [#allocation8], 4
      %s2841 = int_to_ptr.vmem [resolvable:$true] %s2840
      %s2842 = sshll.u32 %s3, 4
      %s2843 = int_to_ptr.hbm [resolvable:$true] %s2842
      %2848 = dma.vmem_to_hbm [thread:$0]  %s2841, 512, %s2843, [#allocation4], 256, 256, 16
    $region29: #{tpu_custom_call.1} parent=1 // pred_fallthru
      _
    // Predicated region
    $region30: #{tpu_custom_call.1} parent=1 // pred_check
      _
    $region31: #{tpu_custom_call.1} parent=1 // pred_check_branch
      %2850 = sbr.rel (0) target = $region33
    $region32: #{tpu_custom_call.1} parent=1 // pred_region
      %2852 = dma.done [#allocation4], 512
    $region33: #{tpu_custom_call.1} parent=1 // pred_fallthru
      _
    %2853 = vsyncpa [#allocation3], 1
    %2854 = vsyncpa [#allocation6], 1
    %2855 = vsyncpa [#allocation4], 1

</llo_original>
